<compile_context>
chip_gen: v7x
topology: tpu7x:2x2x1
jax: 0.10.0
libtpu: 0.0.40
codegen_flags: <defaults>
</compile_context>

<pallas_src>
import math

import jax
import jax.numpy as jnp
from jax import lax
from jax.experimental import pallas as pl
from jax.experimental.pallas import tpu as pltpu


def _silu(v):
    return v * jax.nn.sigmoid(v)


def _pick_tile_rows(H, W, max_rows):
    """Largest divisor of H whose row tile (th*W tokens) fits `max_rows`,
    preferring sublane-aligned (multiple-of-8) tiles."""
    cands = [th for th in range(1, H + 1) if H % th == 0 and th * W <= max_rows]
    if not cands:
        return 1
    aligned = [th for th in cands if (th * W) % 8 == 0]
    return max(aligned) if aligned else max(cands)


def _make_kernel(H, W, tile_rows, Cin, Chid, Cpad, mxu_dtype):
    tile_hw = tile_rows * W                  # output tokens per grid step
    Lext = tile_hw + 2 * W + 2               # tile + 1 halo row above/below + 1 elem each end

    def kernel(x_ref, wia_ref, wib_ref, bia_ref, bib_ref,
               wda_ref, wdb_ref, bda_ref, bdb_ref, wpt_ref, o_ref):
        t = pl.program_id(1)
        base = t * tile_hw
        if tile_hw % 8 == 0:
            base = pl.multiple_of(base, 8)

        # ---- extended (halo-included) input window, flat (Lext, Cin) ---------
        xe = x_ref[0, pl.ds(base, Lext), :].astype(jnp.float32)

        # ---- inverted 1x1 conv + bias + SiLU, one tensor per GLU half --------
        wia = wia_ref[...]
        wib = wib_ref[...]
        if Cin <= 8:
            # tiny contraction dim: broadcast-FMA on the VPU, keep MXU free.
            cols = [xe[:, c:c + 1] for c in range(Cin)]
            ya = cols[0] * wia[0:1, :] + bia_ref[...]
            yb = cols[0] * wib[0:1, :] + bib_ref[...]
            for c in range(1, Cin):
                ya = ya + cols[c] * wia[c:c + 1, :]
                yb = yb + cols[c] * wib[c:c + 1, :]
        else:
            ya = jnp.dot(xe, wia, preferred_element_type=jnp.float32) + bia_ref[...]
            yb = jnp.dot(xe, wib, preferred_element_type=jnp.float32) + bib_ref[...]
        ya = _silu(ya)
        yb = _silu(yb)

        # Zero the window rows that lie outside the image; together with the
        # per-tap column masks below this reproduces the conv's zero padding.
        jext = lax.broadcasted_iota(jnp.int32, (Lext, 1), 0)
        g = jext + (base - (W + 1))          # global flattened token index
        row_ok = jnp.logical_and(g >= 0, g < H * W)
        ya = jnp.where(row_ok, ya, 0.0)
        yb = jnp.where(row_ok, yb, 0.0)

        # ---- depthwise 3x3 (stride 1, pad 1), register-resident --------------
        wi = lax.broadcasted_iota(jnp.int32, (tile_hw, 1), 0) % W
        m_left = wi > 0                      # left neighbour exists  (dx = -1)
        m_right = wi < (W - 1)               # right neighbour exists (dx = +1)

        wda = wda_ref[...]                   # (9, Chid)
        wdb = wdb_ref[...]
        wrows_a = [wda[k:k + 1, :] for k in range(9)]   # hoisted once
        wrows_b = [wdb[k:k + 1, :] for k in range(9)]

        acc_a = jnp.broadcast_to(bda_ref[...], (tile_hw, Chid))
        acc_b = jnp.broadcast_to(bdb_ref[...], (tile_hw, Chid))
        for dy in (-1, 0, 1):
            for dx in (-1, 0, 1):
                off = (dy + 1) * W + dx + 1              # static slice offset
                k = (dy + 1) * 3 + (dx + 1)
                ta = ya[off:off + tile_hw, :]
                tb = yb[off:off + tile_hw, :]
                if dx == -1:
                    ta = jnp.where(m_left, ta, 0.0)
                    tb = jnp.where(m_left, tb, 0.0)
                elif dx == 1:
                    ta = jnp.where(m_right, ta, 0.0)
                    tb = jnp.where(m_right, tb, 0.0)
                acc_a = acc_a + ta * wrows_a[k]
                acc_b = acc_b + tb * wrows_b[k]

        # ---- GLU gate, then pointwise 1x1 conv into a lane-dense block -------
        h = acc_a * _silu(acc_b)
        wpt = wpt_ref[...]
        if mxu_dtype is not None:            # e.g. jnp.bfloat16 on v6e/v7x
            h = h.astype(mxu_dtype)
            wpt = wpt.astype(mxu_dtype)
        out = jnp.dot(h, wpt, preferred_element_type=jnp.float32)
        o_ref[0] = out.astype(o_ref.dtype)

    return kernel


def glumbconv_pallas(x_tokens, w_inv, b_inv, w_dw, b_dw, w_pt, H, W,
                     *, max_tile_rows=1024, mxu_dtype=None):
    """x_tokens: (B, N=H*W, Cin).  Returns (B, N, Cout).

    Parameter layouts (converted from the PyTorch module):
      inverted_conv.conv.weight (2h, Cin, 1, 1) -> w_inv (Cin, 2h), b_inv (1, 2h)
      depth_conv.conv.weight    (2h, 1, 3, 3)   -> w_dw  (9, 2h),   b_dw  (1, 2h)
      point_conv.conv.weight    (Cout, h, 1, 1) -> w_pt  (h, Cout)
    """
    B, N, Cin = x_tokens.shape
    assert N == H * W, (N, H, W)
    C2 = w_inv.shape[1]
    Chid = C2 // 2
    Cout = w_pt.shape[1]
    Cpad = ((Cout + 127) // 128) * 128       # lane-dense output block
    tile_rows = _pick_tile_rows(H, W, max_tile_rows)
    nt = H // tile_rows
    tile_hw = tile_rows * W
    Npad = N + 2 * W + 2

    # Split parameters into GLU halves (same order as torch.chunk(x, 2, dim=1)).
    wia, wib = w_inv[:, :Chid], w_inv[:, Chid:]
    bia, bib = b_inv[:, :Chid], b_inv[:, Chid:]
    wda, wdb = w_dw[:, :Chid], w_dw[:, Chid:]
    bda, bdb = b_dw[:, :Chid], b_dw[:, Chid:]
    wpt = jnp.pad(w_pt, ((0, 0), (0, Cpad - Cout)))

    # Zero-pad the token axis by (W+1) on each side: provides the 1-row halo
    # for the depthwise conv plus one element so every tap slice is in bounds.
    x_pad = jnp.pad(x_tokens, ((0, 0), (W + 1, W + 1), (0, 0)))

    kernel = _make_kernel(H, W, tile_rows, Cin, Chid, Cpad, mxu_dtype)

    def _wspec(shape):
        return pl.BlockSpec(shape, lambda b, t: (0, 0))

    out_pad = pl.pallas_call(
        kernel,
        out_shape=jax.ShapeDtypeStruct((B, N, Cpad), x_tokens.dtype),
        grid_spec=pltpu.PrefetchScalarGridSpec(
            num_scalar_prefetch=0,
            grid=(B, nt),
            in_specs=[
                # Full (padded) image stays resident across the row-tile axis;
                # the kernel slices its halo window with pl.ds.
                pl.BlockSpec((1, Npad, Cin), lambda b, t: (b, 0, 0)),
                _wspec(wia.shape), _wspec(wib.shape),
                _wspec(bia.shape), _wspec(bib.shape),
                _wspec(wda.shape), _wspec(wdb.shape),
                _wspec(bda.shape), _wspec(bdb.shape),
                _wspec(wpt.shape),
            ],
            out_specs=pl.BlockSpec((1, tile_hw, Cpad), lambda b, t: (b, t, 0)),
        ),
        compiler_params=pltpu.CompilerParams(
            dimension_semantics=("parallel", "parallel")),
    )(x_pad, wia, wib, bia, bib, wda, wdb, bda, bdb, wpt)

    return out_pad[:, :, :Cout]


def glumbconv_forward(x, params, HW=None, **kw):
    """x: (B, N, C) tokens — matches GLUMBConv.forward."""
    B, N, C = x.shape
    if HW is None:
        H = W = int(round(math.sqrt(N)))
        if H * W != N:
            raise ValueError("non-square token grid: pass HW=(H, W) explicitly")
    else:
        H, W = HW
        if H * W != N:
            raise ValueError("HW does not match sequence length N")
    return glumbconv_pallas(x, *params, H, W, **kw)


# ------------------- pure-JAX reference (for validation) -------------------
def reference_forward(x, w_inv, b_inv, w_dw, b_dw, w_pt, H, W):
    B, N, C = x.shape
    xi = x.reshape(B, H, W, C)
    y = jnp.einsum('bhwc,cd->bhwd', xi, w_inv) + b_inv[0]
    y = y * jax.nn.sigmoid(y)
    C2 = y.shape[-1]
    ker = w_dw.reshape(3, 3, C2)[:, :, None, :]    # HWIO, depthwise
    y = jax.lax.conv_general_dilated(
        y, ker, window_strides=(1, 1), padding='SAME',
        dimension_numbers=('NHWC', 'HWIO', 'NHWC'),
        feature_group_count=C2) + b_dw[0]
    xh, gate = jnp.split(y, 2, axis=-1)
    h = xh * (gate * jax.nn.sigmoid(gate))
    out = jnp.einsum('bhwc,cd->bhwd', h, w_pt)
    return out.reshape(B, H * W, out.shape[-1])


if __name__ == "__main__":
    key = jax.random.PRNGKey(0)
    B, H, W = 2, 16, 16
    in_features = 4                 # C
    hidden = 32                     # hidden_features
    Cout = in_features              # out_feature defaults to in_features
    N = H * W
    C2 = 2 * hidden

    ks = jax.random.split(key, 6)
    x = jax.random.normal(ks[0], (B, N, in_features), jnp.float32)
    w_inv = jax.random.normal(ks[1], (in_features, C2), jnp.float32) * 0.2
    b_inv = jax.random.normal(ks[2], (1, C2), jnp.float32) * 0.1
    w_dw = jax.random.normal(ks[3], (9, C2), jnp.float32) * 0.2
    b_dw = jax.random.normal(ks[4], (1, C2), jnp.float32) * 0.1
    w_pt = jax.random.normal(ks[5], (hidden, Cout), jnp.float32) * 0.2
    params = (w_inv, b_inv, w_dw, b_dw, w_pt)

    # max_tile_rows=128 forces 2 spatial tiles so the halo path is exercised.
    out = glumbconv_forward(x, params, HW=(H, W), max_tile_rows=128)
    out = jax.block_until_ready(out)

    ref = reference_forward(x, w_inv, b_inv, w_dw, b_dw, w_pt, H, W)
    assert out.shape == (B, N, Cout), out.shape
    max_err = float(jnp.max(jnp.abs(out - ref)))
    assert jnp.allclose(out, ref, atol=1e-4, rtol=1e-4), max_err
    print("KERNEL_OK")
</pallas_src>

<mosaic_0001>
module attributes {stable_mosaic.version = 11 : i64} {
  func.func @kernel(%arg0: i32, %arg1: i32, %arg2: memref<1x290x4xf32, #tpu.memory_space<vmem>>, %arg3: memref<4x32xf32, #tpu.memory_space<vmem>>, %arg4: memref<4x32xf32, #tpu.memory_space<vmem>>, %arg5: memref<1x32xf32, #tpu.memory_space<vmem>>, %arg6: memref<1x32xf32, #tpu.memory_space<vmem>>, %arg7: memref<9x32xf32, #tpu.memory_space<vmem>>, %arg8: memref<9x32xf32, #tpu.memory_space<vmem>>, %arg9: memref<1x32xf32, #tpu.memory_space<vmem>>, %arg10: memref<1x32xf32, #tpu.memory_space<vmem>>, %arg11: memref<32x128xf32, #tpu.memory_space<vmem>>, %arg12: memref<1x128x128xf32, #tpu.memory_space<vmem>>) attributes {dimension_semantics = [#tpu.dimension_semantics<parallel>, #tpu.dimension_semantics<parallel>], iteration_bounds = array<i64: 2, 2>, scalar_prefetch = 0 : i64, scratch_operands = 0 : i64, tpu.core_type = #tpu.core_type<tc>, window_params = [{transform_indices = @transform_0, window_bounds = array<i64: 1, 290, 4>}, {pipeline_mode = #tpu.pipeline_mode<synchronous>, transform_indices = @transform_1, window_bounds = array<i64: 4, 32>}, {pipeline_mode = #tpu.pipeline_mode<synchronous>, transform_indices = @transform_2, window_bounds = array<i64: 4, 32>}, {pipeline_mode = #tpu.pipeline_mode<synchronous>, transform_indices = @transform_3, window_bounds = array<i64: 1, 32>}, {pipeline_mode = #tpu.pipeline_mode<synchronous>, transform_indices = @transform_4, window_bounds = array<i64: 1, 32>}, {pipeline_mode = #tpu.pipeline_mode<synchronous>, transform_indices = @transform_5, window_bounds = array<i64: 9, 32>}, {pipeline_mode = #tpu.pipeline_mode<synchronous>, transform_indices = @transform_6, window_bounds = array<i64: 9, 32>}, {pipeline_mode = #tpu.pipeline_mode<synchronous>, transform_indices = @transform_7, window_bounds = array<i64: 1, 32>}, {pipeline_mode = #tpu.pipeline_mode<synchronous>, transform_indices = @transform_8, window_bounds = array<i64: 1, 32>}, {pipeline_mode = #tpu.pipeline_mode<synchronous>, transform_indices = @transform_9, window_bounds = array<i64: 32, 128>}, {transform_indices = @transform_10, window_bounds = array<i64: 1, 128, 128>}]} {
    %c128_i32 = arith.constant 128 : i32
    %0 = arith.muli %arg1, %c128_i32 : i32
    %1 = tpu.assume_multiple %0, 8 : i32
    %c0 = arith.constant 0 : index
    %2 = arith.index_cast %1 : i32 to index
    %c0_0 = arith.constant 0 : index
    %3 = vector.load %arg2[%c0, %2, %c0_0] : memref<1x290x4xf32, #tpu.memory_space<vmem>>, vector<1x162x4xf32>
    %4 = vector.shape_cast %3 : vector<1x162x4xf32> to vector<162x4xf32>
    %c0_1 = arith.constant 0 : index
    %c0_2 = arith.constant 0 : index
    %5 = vector.load %arg3[%c0_1, %c0_2] : memref<4x32xf32, #tpu.memory_space<vmem>>, vector<4x32xf32>
    %c0_3 = arith.constant 0 : index
    %c0_4 = arith.constant 0 : index
    %6 = vector.load %arg4[%c0_3, %c0_4] : memref<4x32xf32, #tpu.memory_space<vmem>>, vector<4x32xf32>
    %7 = vector.extract_strided_slice %4 {offsets = [0, 0], sizes = [162, 1], strides = [1, 1]} : vector<162x4xf32> to vector<162x1xf32>
    %8 = vector.extract_strided_slice %4 {offsets = [0, 1], sizes = [162, 1], strides = [1, 1]} : vector<162x4xf32> to vector<162x1xf32>
    %9 = vector.extract_strided_slice %4 {offsets = [0, 2], sizes = [162, 1], strides = [1, 1]} : vector<162x4xf32> to vector<162x1xf32>
    %10 = vector.extract_strided_slice %4 {offsets = [0, 3], sizes = [162, 1], strides = [1, 1]} : vector<162x4xf32> to vector<162x1xf32>
    %11 = vector.extract_strided_slice %5 {offsets = [0, 0], sizes = [1, 32], strides = [1, 1]} : vector<4x32xf32> to vector<1x32xf32>
    %12 = vector.broadcast %7 : vector<162x1xf32> to vector<162x32xf32>
    %13 = vector.broadcast %11 : vector<1x32xf32> to vector<162x32xf32>
    %14 = arith.mulf %12, %13 : vector<162x32xf32>
    %c0_5 = arith.constant 0 : index
    %c0_6 = arith.constant 0 : index
    %15 = vector.load %arg5[%c0_5, %c0_6] : memref<1x32xf32, #tpu.memory_space<vmem>>, vector<1x32xf32>
    %16 = vector.broadcast %15 : vector<1x32xf32> to vector<162x32xf32>
    %17 = arith.addf %14, %16 : vector<162x32xf32>
    %18 = vector.extract_strided_slice %6 {offsets = [0, 0], sizes = [1, 32], strides = [1, 1]} : vector<4x32xf32> to vector<1x32xf32>
    %19 = vector.broadcast %7 : vector<162x1xf32> to vector<162x32xf32>
    %20 = vector.broadcast %18 : vector<1x32xf32> to vector<162x32xf32>
    %21 = arith.mulf %19, %20 : vector<162x32xf32>
    %c0_7 = arith.constant 0 : index
    %c0_8 = arith.constant 0 : index
    %22 = vector.load %arg6[%c0_7, %c0_8] : memref<1x32xf32, #tpu.memory_space<vmem>>, vector<1x32xf32>
    %23 = vector.broadcast %22 : vector<1x32xf32> to vector<162x32xf32>
    %24 = arith.addf %21, %23 : vector<162x32xf32>
    %25 = vector.extract_strided_slice %5 {offsets = [1, 0], sizes = [1, 32], strides = [1, 1]} : vector<4x32xf32> to vector<1x32xf32>
    %26 = vector.broadcast %8 : vector<162x1xf32> to vector<162x32xf32>
    %27 = vector.broadcast %25 : vector<1x32xf32> to vector<162x32xf32>
    %28 = arith.mulf %26, %27 : vector<162x32xf32>
    %29 = arith.addf %17, %28 : vector<162x32xf32>
    %30 = vector.extract_strided_slice %6 {offsets = [1, 0], sizes = [1, 32], strides = [1, 1]} : vector<4x32xf32> to vector<1x32xf32>
    %31 = vector.broadcast %8 : vector<162x1xf32> to vector<162x32xf32>
    %32 = vector.broadcast %30 : vector<1x32xf32> to vector<162x32xf32>
    %33 = arith.mulf %31, %32 : vector<162x32xf32>
    %34 = arith.addf %24, %33 : vector<162x32xf32>
    %35 = vector.extract_strided_slice %5 {offsets = [2, 0], sizes = [1, 32], strides = [1, 1]} : vector<4x32xf32> to vector<1x32xf32>
    %36 = vector.broadcast %9 : vector<162x1xf32> to vector<162x32xf32>
    %37 = vector.broadcast %35 : vector<1x32xf32> to vector<162x32xf32>
    %38 = arith.mulf %36, %37 : vector<162x32xf32>
    %39 = arith.addf %29, %38 : vector<162x32xf32>
    %40 = vector.extract_strided_slice %6 {offsets = [2, 0], sizes = [1, 32], strides = [1, 1]} : vector<4x32xf32> to vector<1x32xf32>
    %41 = vector.broadcast %9 : vector<162x1xf32> to vector<162x32xf32>
    %42 = vector.broadcast %40 : vector<1x32xf32> to vector<162x32xf32>
    %43 = arith.mulf %41, %42 : vector<162x32xf32>
    %44 = arith.addf %34, %43 : vector<162x32xf32>
    %45 = vector.extract_strided_slice %5 {offsets = [3, 0], sizes = [1, 32], strides = [1, 1]} : vector<4x32xf32> to vector<1x32xf32>
    %46 = vector.broadcast %10 : vector<162x1xf32> to vector<162x32xf32>
    %47 = vector.broadcast %45 : vector<1x32xf32> to vector<162x32xf32>
    %48 = arith.mulf %46, %47 : vector<162x32xf32>
    %49 = arith.addf %39, %48 : vector<162x32xf32>
    %50 = vector.extract_strided_slice %6 {offsets = [3, 0], sizes = [1, 32], strides = [1, 1]} : vector<4x32xf32> to vector<1x32xf32>
    %51 = vector.broadcast %10 : vector<162x1xf32> to vector<162x32xf32>
    %52 = vector.broadcast %50 : vector<1x32xf32> to vector<162x32xf32>
    %53 = arith.mulf %51, %52 : vector<162x32xf32>
    %54 = arith.addf %44, %53 : vector<162x32xf32>
    %55 = arith.negf %49 : vector<162x32xf32>
    %56 = math.exp %55 : vector<162x32xf32>
    %cst = arith.constant 1.000000e+00 : f32
    %57 = vector.broadcast %cst : f32 to vector<162x32xf32>
    %58 = arith.addf %57, %56 : vector<162x32xf32>
    %59 = arith.divf %57, %58 : vector<162x32xf32>
    %60 = arith.mulf %49, %59 : vector<162x32xf32>
    %61 = arith.negf %54 : vector<162x32xf32>
    %62 = math.exp %61 : vector<162x32xf32>
    %cst_9 = arith.constant 1.000000e+00 : f32
    %63 = vector.broadcast %cst_9 : f32 to vector<162x32xf32>
    %64 = arith.addf %63, %62 : vector<162x32xf32>
    %65 = arith.divf %63, %64 : vector<162x32xf32>
    %66 = arith.mulf %54, %65 : vector<162x32xf32>
    %67 = tpu.iota {dimensions = array<i32: 0>} : vector<162x1xi32>
    %c17_i32 = arith.constant 17 : i32
    %68 = arith.subi %1, %c17_i32 : i32
    %69 = vector.broadcast %68 : i32 to vector<162x1xi32>
    %70 = arith.addi %67, %69 : vector<162x1xi32>
    %c0_i32 = arith.constant 0 : i32
    %71 = vector.broadcast %c0_i32 : i32 to vector<162x1xi32>
    %72 = arith.cmpi sge, %70, %71 : vector<162x1xi32>
    %c256_i32 = arith.constant 256 : i32
    %73 = vector.broadcast %c256_i32 : i32 to vector<162x1xi32>
    %74 = arith.cmpi slt, %70, %73 : vector<162x1xi32>
    %75 = arith.andi %72, %74 : vector<162x1xi1>
    %cst_10 = arith.constant 0.000000e+00 : f32
    %76 = vector.shape_cast %75 : vector<162x1xi1> to vector<162x1xi1>
    %77 = vector.broadcast %76 : vector<162x1xi1> to vector<162x32xi1>
    %78 = vector.broadcast %cst_10 : f32 to vector<162x32xf32>
    %79 = arith.select %77, %60, %78 : vector<162x32xi1>, vector<162x32xf32>
    %cst_11 = arith.constant 0.000000e+00 : f32
    %80 = vector.shape_cast %75 : vector<162x1xi1> to vector<162x1xi1>
    %81 = vector.broadcast %80 : vector<162x1xi1> to vector<162x32xi1>
    %82 = vector.broadcast %cst_11 : f32 to vector<162x32xf32>
    %83 = arith.select %81, %66, %82 : vector<162x32xi1>, vector<162x32xf32>
    %84 = tpu.iota {dimensions = array<i32: 0>} : vector<128x1xi32>
    %c16_i32 = arith.constant 16 : i32
    %c0_i32_12 = arith.constant 0 : i32
    %85 = arith.cmpi eq, %c16_i32, %c0_i32_12 : i32
    %c1_i32 = arith.constant 1 : i32
    %86 = arith.select %85, %c1_i32, %c16_i32 : i32
    %87 = vector.broadcast %86 : i32 to vector<128x1xi32>
    %88 = arith.remsi %84, %87 : vector<128x1xi32>
    %c0_i32_13 = arith.constant 0 : i32
    %89 = vector.broadcast %c0_i32_13 : i32 to vector<128x1xi32>
    %90 = arith.cmpi ne, %88, %89 : vector<128x1xi32>
    %c0_i32_14 = arith.constant 0 : i32
    %91 = vector.broadcast %c0_i32_14 : i32 to vector<128x1xi32>
    %92 = arith.cmpi slt, %88, %91 : vector<128x1xi32>
    %c0_i32_15 = arith.constant 0 : i32
    %93 = arith.cmpi slt, %86, %c0_i32_15 : i32
    %94 = vector.broadcast %93 : i1 to vector<128x1xi1>
    %95 = vector.broadcast %94 : vector<128x1xi1> to vector<128x1xi1>
    %96 = arith.xori %92, %95 : vector<128x1xi1>
    %97 = arith.andi %96, %90 : vector<128x1xi1>
    %98 = vector.broadcast %86 : i32 to vector<128x1xi32>
    %99 = arith.addi %88, %98 : vector<128x1xi32>
    %100 = arith.select %97, %99, %88 : vector<128x1xi1>, vector<128x1xi32>
    %c0_i32_16 = arith.constant 0 : i32
    %101 = vector.broadcast %c0_i32_16 : i32 to vector<128x1xi32>
    %102 = arith.cmpi sgt, %100, %101 : vector<128x1xi32>
    %c15_i32 = arith.constant 15 : i32
    %103 = vector.broadcast %c15_i32 : i32 to vector<128x1xi32>
    %104 = arith.cmpi slt, %100, %103 : vector<128x1xi32>
    %c0_17 = arith.constant 0 : index
    %c0_18 = arith.constant 0 : index
    %105 = vector.load %arg7[%c0_17, %c0_18] : memref<9x32xf32, #tpu.memory_space<vmem>>, vector<9x32xf32>
    %c0_19 = arith.constant 0 : index
    %c0_20 = arith.constant 0 : index
    %106 = vector.load %arg8[%c0_19, %c0_20] : memref<9x32xf32, #tpu.memory_space<vmem>>, vector<9x32xf32>
    %107 = vector.extract_strided_slice %105 {offsets = [0, 0], sizes = [1, 32], strides = [1, 1]} : vector<9x32xf32> to vector<1x32xf32>
    %108 = vector.extract_strided_slice %105 {offsets = [1, 0], sizes = [1, 32], strides = [1, 1]} : vector<9x32xf32> to vector<1x32xf32>
    %109 = vector.extract_strided_slice %105 {offsets = [2, 0], sizes = [1, 32], strides = [1, 1]} : vector<9x32xf32> to vector<1x32xf32>
    %110 = vector.extract_strided_slice %105 {offsets = [3, 0], sizes = [1, 32], strides = [1, 1]} : vector<9x32xf32> to vector<1x32xf32>
    %111 = vector.extract_strided_slice %105 {offsets = [4, 0], sizes = [1, 32], strides = [1, 1]} : vector<9x32xf32> to vector<1x32xf32>
    %112 = vector.extract_strided_slice %105 {offsets = [5, 0], sizes = [1, 32], strides = [1, 1]} : vector<9x32xf32> to vector<1x32xf32>
    %113 = vector.extract_strided_slice %105 {offsets = [6, 0], sizes = [1, 32], strides = [1, 1]} : vector<9x32xf32> to vector<1x32xf32>
    %114 = vector.extract_strided_slice %105 {offsets = [7, 0], sizes = [1, 32], strides = [1, 1]} : vector<9x32xf32> to vector<1x32xf32>
    %115 = vector.extract_strided_slice %105 {offsets = [8, 0], sizes = [1, 32], strides = [1, 1]} : vector<9x32xf32> to vector<1x32xf32>
    %116 = vector.extract_strided_slice %106 {offsets = [0, 0], sizes = [1, 32], strides = [1, 1]} : vector<9x32xf32> to vector<1x32xf32>
    %117 = vector.extract_strided_slice %106 {offsets = [1, 0], sizes = [1, 32], strides = [1, 1]} : vector<9x32xf32> to vector<1x32xf32>
    %118 = vector.extract_strided_slice %106 {offsets = [2, 0], sizes = [1, 32], strides = [1, 1]} : vector<9x32xf32> to vector<1x32xf32>
    %119 = vector.extract_strided_slice %106 {offsets = [3, 0], sizes = [1, 32], strides = [1, 1]} : vector<9x32xf32> to vector<1x32xf32>
    %120 = vector.extract_strided_slice %106 {offsets = [4, 0], sizes = [1, 32], strides = [1, 1]} : vector<9x32xf32> to vector<1x32xf32>
    %121 = vector.extract_strided_slice %106 {offsets = [5, 0], sizes = [1, 32], strides = [1, 1]} : vector<9x32xf32> to vector<1x32xf32>
    %122 = vector.extract_strided_slice %106 {offsets = [6, 0], sizes = [1, 32], strides = [1, 1]} : vector<9x32xf32> to vector<1x32xf32>
    %123 = vector.extract_strided_slice %106 {offsets = [7, 0], sizes = [1, 32], strides = [1, 1]} : vector<9x32xf32> to vector<1x32xf32>
    %124 = vector.extract_strided_slice %106 {offsets = [8, 0], sizes = [1, 32], strides = [1, 1]} : vector<9x32xf32> to vector<1x32xf32>
    %c0_21 = arith.constant 0 : index
    %c0_22 = arith.constant 0 : index
    %125 = vector.load %arg9[%c0_21, %c0_22] : memref<1x32xf32, #tpu.memory_space<vmem>>, vector<1x32xf32>
    %126 = vector.shape_cast %125 : vector<1x32xf32> to vector<1x32xf32>
    %127 = vector.broadcast %126 : vector<1x32xf32> to vector<128x32xf32>
    %c0_23 = arith.constant 0 : index
    %c0_24 = arith.constant 0 : index
    %128 = vector.load %arg10[%c0_23, %c0_24] : memref<1x32xf32, #tpu.memory_space<vmem>>, vector<1x32xf32>
    %129 = vector.shape_cast %128 : vector<1x32xf32> to vector<1x32xf32>
    %130 = vector.broadcast %129 : vector<1x32xf32> to vector<128x32xf32>
    %131 = vector.extract_strided_slice %79 {offsets = [0, 0], sizes = [128, 32], strides = [1, 1]} : vector<162x32xf32> to vector<128x32xf32>
    %132 = vector.extract_strided_slice %83 {offsets = [0, 0], sizes = [128, 32], strides = [1, 1]} : vector<162x32xf32> to vector<128x32xf32>
    %cst_25 = arith.constant 0.000000e+00 : f32
    %133 = vector.shape_cast %102 : vector<128x1xi1> to vector<128x1xi1>
    %134 = vector.broadcast %133 : vector<128x1xi1> to vector<128x32xi1>
    %135 = vector.broadcast %cst_25 : f32 to vector<128x32xf32>
    %136 = arith.select %134, %131, %135 : vector<128x32xi1>, vector<128x32xf32>
    %cst_26 = arith.constant 0.000000e+00 : f32
    %137 = vector.shape_cast %102 : vector<128x1xi1> to vector<128x1xi1>
    %138 = vector.broadcast %137 : vector<128x1xi1> to vector<128x32xi1>
    %139 = vector.broadcast %cst_26 : f32 to vector<128x32xf32>
    %140 = arith.select %138, %132, %139 : vector<128x32xi1>, vector<128x32xf32>
    %141 = vector.broadcast %107 : vector<1x32xf32> to vector<128x32xf32>
    %142 = arith.mulf %136, %141 : vector<128x32xf32>
    %143 = arith.addf %127, %142 : vector<128x32xf32>
    %144 = vector.broadcast %116 : vector<1x32xf32> to vector<128x32xf32>
    %145 = arith.mulf %140, %144 : vector<128x32xf32>
    %146 = arith.addf %130, %145 : vector<128x32xf32>
    %147 = vector.extract_strided_slice %79 {offsets = [1, 0], sizes = [128, 32], strides = [1, 1]} : vector<162x32xf32> to vector<128x32xf32>
    %148 = vector.extract_strided_slice %83 {offsets = [1, 0], sizes = [128, 32], strides = [1, 1]} : vector<162x32xf32> to vector<128x32xf32>
    %149 = vector.broadcast %108 : vector<1x32xf32> to vector<128x32xf32>
    %150 = arith.mulf %147, %149 : vector<128x32xf32>
    %151 = arith.addf %143, %150 : vector<128x32xf32>
    %152 = vector.broadcast %117 : vector<1x32xf32> to vector<128x32xf32>
    %153 = arith.mulf %148, %152 : vector<128x32xf32>
    %154 = arith.addf %146, %153 : vector<128x32xf32>
    %155 = vector.extract_strided_slice %79 {offsets = [2, 0], sizes = [128, 32], strides = [1, 1]} : vector<162x32xf32> to vector<128x32xf32>
    %156 = vector.extract_strided_slice %83 {offsets = [2, 0], sizes = [128, 32], strides = [1, 1]} : vector<162x32xf32> to vector<128x32xf32>
    %cst_27 = arith.constant 0.000000e+00 : f32
    %157 = vector.shape_cast %104 : vector<128x1xi1> to vector<128x1xi1>
    %158 = vector.broadcast %157 : vector<128x1xi1> to vector<128x32xi1>
    %159 = vector.broadcast %cst_27 : f32 to vector<128x32xf32>
    %160 = arith.select %158, %155, %159 : vector<128x32xi1>, vector<128x32xf32>
    %cst_28 = arith.constant 0.000000e+00 : f32
    %161 = vector.shape_cast %104 : vector<128x1xi1> to vector<128x1xi1>
    %162 = vector.broadcast %161 : vector<128x1xi1> to vector<128x32xi1>
    %163 = vector.broadcast %cst_28 : f32 to vector<128x32xf32>
    %164 = arith.select %162, %156, %163 : vector<128x32xi1>, vector<128x32xf32>
    %165 = vector.broadcast %109 : vector<1x32xf32> to vector<128x32xf32>
    %166 = arith.mulf %160, %165 : vector<128x32xf32>
    %167 = arith.addf %151, %166 : vector<128x32xf32>
    %168 = vector.broadcast %118 : vector<1x32xf32> to vector<128x32xf32>
    %169 = arith.mulf %164, %168 : vector<128x32xf32>
    %170 = arith.addf %154, %169 : vector<128x32xf32>
    %171 = vector.extract_strided_slice %79 {offsets = [16, 0], sizes = [128, 32], strides = [1, 1]} : vector<162x32xf32> to vector<128x32xf32>
    %172 = vector.extract_strided_slice %83 {offsets = [16, 0], sizes = [128, 32], strides = [1, 1]} : vector<162x32xf32> to vector<128x32xf32>
    %cst_29 = arith.constant 0.000000e+00 : f32
    %173 = vector.shape_cast %102 : vector<128x1xi1> to vector<128x1xi1>
    %174 = vector.broadcast %173 : vector<128x1xi1> to vector<128x32xi1>
    %175 = vector.broadcast %cst_29 : f32 to vector<128x32xf32>
    %176 = arith.select %174, %171, %175 : vector<128x32xi1>, vector<128x32xf32>
    %cst_30 = arith.constant 0.000000e+00 : f32
    %177 = vector.shape_cast %102 : vector<128x1xi1> to vector<128x1xi1>
    %178 = vector.broadcast %177 : vector<128x1xi1> to vector<128x32xi1>
    %179 = vector.broadcast %cst_30 : f32 to vector<128x32xf32>
    %180 = arith.select %178, %172, %179 : vector<128x32xi1>, vector<128x32xf32>
    %181 = vector.broadcast %110 : vector<1x32xf32> to vector<128x32xf32>
    %182 = arith.mulf %176, %181 : vector<128x32xf32>
    %183 = arith.addf %167, %182 : vector<128x32xf32>
    %184 = vector.broadcast %119 : vector<1x32xf32> to vector<128x32xf32>
    %185 = arith.mulf %180, %184 : vector<128x32xf32>
    %186 = arith.addf %170, %185 : vector<128x32xf32>
    %187 = vector.extract_strided_slice %79 {offsets = [17, 0], sizes = [128, 32], strides = [1, 1]} : vector<162x32xf32> to vector<128x32xf32>
    %188 = vector.extract_strided_slice %83 {offsets = [17, 0], sizes = [128, 32], strides = [1, 1]} : vector<162x32xf32> to vector<128x32xf32>
    %189 = vector.broadcast %111 : vector<1x32xf32> to vector<128x32xf32>
    %190 = arith.mulf %187, %189 : vector<128x32xf32>
    %191 = arith.addf %183, %190 : vector<128x32xf32>
    %192 = vector.broadcast %120 : vector<1x32xf32> to vector<128x32xf32>
    %193 = arith.mulf %188, %192 : vector<128x32xf32>
    %194 = arith.addf %186, %193 : vector<128x32xf32>
    %195 = vector.extract_strided_slice %79 {offsets = [18, 0], sizes = [128, 32], strides = [1, 1]} : vector<162x32xf32> to vector<128x32xf32>
    %196 = vector.extract_strided_slice %83 {offsets = [18, 0], sizes = [128, 32], strides = [1, 1]} : vector<162x32xf32> to vector<128x32xf32>
    %cst_31 = arith.constant 0.000000e+00 : f32
    %197 = vector.shape_cast %104 : vector<128x1xi1> to vector<128x1xi1>
    %198 = vector.broadcast %197 : vector<128x1xi1> to vector<128x32xi1>
    %199 = vector.broadcast %cst_31 : f32 to vector<128x32xf32>
    %200 = arith.select %198, %195, %199 : vector<128x32xi1>, vector<128x32xf32>
    %cst_32 = arith.constant 0.000000e+00 : f32
    %201 = vector.shape_cast %104 : vector<128x1xi1> to vector<128x1xi1>
    %202 = vector.broadcast %201 : vector<128x1xi1> to vector<128x32xi1>
    %203 = vector.broadcast %cst_32 : f32 to vector<128x32xf32>
    %204 = arith.select %202, %196, %203 : vector<128x32xi1>, vector<128x32xf32>
    %205 = vector.broadcast %112 : vector<1x32xf32> to vector<128x32xf32>
    %206 = arith.mulf %200, %205 : vector<128x32xf32>
    %207 = arith.addf %191, %206 : vector<128x32xf32>
    %208 = vector.broadcast %121 : vector<1x32xf32> to vector<128x32xf32>
    %209 = arith.mulf %204, %208 : vector<128x32xf32>
    %210 = arith.addf %194, %209 : vector<128x32xf32>
    %211 = vector.extract_strided_slice %79 {offsets = [32, 0], sizes = [128, 32], strides = [1, 1]} : vector<162x32xf32> to vector<128x32xf32>
    %212 = vector.extract_strided_slice %83 {offsets = [32, 0], sizes = [128, 32], strides = [1, 1]} : vector<162x32xf32> to vector<128x32xf32>
    %cst_33 = arith.constant 0.000000e+00 : f32
    %213 = vector.shape_cast %102 : vector<128x1xi1> to vector<128x1xi1>
    %214 = vector.broadcast %213 : vector<128x1xi1> to vector<128x32xi1>
    %215 = vector.broadcast %cst_33 : f32 to vector<128x32xf32>
    %216 = arith.select %214, %211, %215 : vector<128x32xi1>, vector<128x32xf32>
    %cst_34 = arith.constant 0.000000e+00 : f32
    %217 = vector.shape_cast %102 : vector<128x1xi1> to vector<128x1xi1>
    %218 = vector.broadcast %217 : vector<128x1xi1> to vector<128x32xi1>
    %219 = vector.broadcast %cst_34 : f32 to vector<128x32xf32>
    %220 = arith.select %218, %212, %219 : vector<128x32xi1>, vector<128x32xf32>
    %221 = vector.broadcast %113 : vector<1x32xf32> to vector<128x32xf32>
    %222 = arith.mulf %216, %221 : vector<128x32xf32>
    %223 = arith.addf %207, %222 : vector<128x32xf32>
    %224 = vector.broadcast %122 : vector<1x32xf32> to vector<128x32xf32>
    %225 = arith.mulf %220, %224 : vector<128x32xf32>
    %226 = arith.addf %210, %225 : vector<128x32xf32>
    %227 = vector.extract_strided_slice %79 {offsets = [33, 0], sizes = [128, 32], strides = [1, 1]} : vector<162x32xf32> to vector<128x32xf32>
    %228 = vector.extract_strided_slice %83 {offsets = [33, 0], sizes = [128, 32], strides = [1, 1]} : vector<162x32xf32> to vector<128x32xf32>
    %229 = vector.broadcast %114 : vector<1x32xf32> to vector<128x32xf32>
    %230 = arith.mulf %227, %229 : vector<128x32xf32>
    %231 = arith.addf %223, %230 : vector<128x32xf32>
    %232 = vector.broadcast %123 : vector<1x32xf32> to vector<128x32xf32>
    %233 = arith.mulf %228, %232 : vector<128x32xf32>
    %234 = arith.addf %226, %233 : vector<128x32xf32>
    %235 = vector.extract_strided_slice %79 {offsets = [34, 0], sizes = [128, 32], strides = [1, 1]} : vector<162x32xf32> to vector<128x32xf32>
    %236 = vector.extract_strided_slice %83 {offsets = [34, 0], sizes = [128, 32], strides = [1, 1]} : vector<162x32xf32> to vector<128x32xf32>
    %cst_35 = arith.constant 0.000000e+00 : f32
    %237 = vector.shape_cast %104 : vector<128x1xi1> to vector<128x1xi1>
    %238 = vector.broadcast %237 : vector<128x1xi1> to vector<128x32xi1>
    %239 = vector.broadcast %cst_35 : f32 to vector<128x32xf32>
    %240 = arith.select %238, %235, %239 : vector<128x32xi1>, vector<128x32xf32>
    %cst_36 = arith.constant 0.000000e+00 : f32
    %241 = vector.shape_cast %104 : vector<128x1xi1> to vector<128x1xi1>
    %242 = vector.broadcast %241 : vector<128x1xi1> to vector<128x32xi1>
    %243 = vector.broadcast %cst_36 : f32 to vector<128x32xf32>
    %244 = arith.select %242, %236, %243 : vector<128x32xi1>, vector<128x32xf32>
    %245 = vector.broadcast %115 : vector<1x32xf32> to vector<128x32xf32>
    %246 = arith.mulf %240, %245 : vector<128x32xf32>
    %247 = arith.addf %231, %246 : vector<128x32xf32>
    %248 = vector.broadcast %124 : vector<1x32xf32> to vector<128x32xf32>
    %249 = arith.mulf %244, %248 : vector<128x32xf32>
    %250 = arith.addf %234, %249 : vector<128x32xf32>
    %251 = arith.negf %250 : vector<128x32xf32>
    %252 = math.exp %251 : vector<128x32xf32>
    %cst_37 = arith.constant 1.000000e+00 : f32
    %253 = vector.broadcast %cst_37 : f32 to vector<128x32xf32>
    %254 = arith.addf %253, %252 : vector<128x32xf32>
    %255 = arith.divf %253, %254 : vector<128x32xf32>
    %256 = arith.mulf %250, %255 : vector<128x32xf32>
    %257 = arith.mulf %247, %256 : vector<128x32xf32>
    %c0_38 = arith.constant 0 : index
    %c0_39 = arith.constant 0 : index
    %258 = vector.load %arg11[%c0_38, %c0_39] : memref<32x128xf32, #tpu.memory_space<vmem>>, vector<32x128xf32>
    %cst_40 = arith.constant dense<0.000000e+00> : vector<128x128xf32>
    %259 = tpu.matmul %257, %258, %cst_40 {dimension_numbers = #tpu.dot_dimension_numbers<[1], [0], [0], [1], [0, 0, 1, 1], [], []>} : vector<128x32xf32>, vector<32x128xf32>, vector<128x128xf32> -> vector<128x128xf32>
    %c0_41 = arith.constant 0 : index
    %c0_42 = arith.constant 0 : index
    %c0_43 = arith.constant 0 : index
    %260 = vector.load %arg12[%c0_41, %c0_42, %c0_43] : memref<1x128x128xf32, #tpu.memory_space<vmem>>, vector<1x128x128xf32>
    %261 = vector.shape_cast %260 : vector<1x128x128xf32> to vector<128x128xf32>
    %262 = vector.shape_cast %259 : vector<128x128xf32> to vector<1x128x128xf32>
    tpu.vector_store %arg12[%c0_41, %c0_42, %c0_43], %262 {strides = array<i32>} : memref<1x128x128xf32, #tpu.memory_space<vmem>>, vector<1x128x128xf32>,
    return
  }
  func.func @transform_0(%arg0: i32, %arg1: i32) -> (i32, i32, i32) {
    %c0_i32 = arith.constant 0 : i32
    %c0_i32_0 = arith.constant 0 : i32
    %c0_i32_1 = arith.constant 0 : i32
    return %arg0, %c0_i32, %c0_i32_0 : i32, i32, i32
  }
  func.func @transform_1(%arg0: i32, %arg1: i32) -> (i32, i32) {
    %c0_i32 = arith.constant 0 : i32
    %c0_i32_0 = arith.constant 0 : i32
    %c0_i32_1 = arith.constant 0 : i32
    return %c0_i32, %c0_i32_0 : i32, i32
  }
  func.func @transform_2(%arg0: i32, %arg1: i32) -> (i32, i32) {
    %c0_i32 = arith.constant 0 : i32
    %c0_i32_0 = arith.constant 0 : i32
    %c0_i32_1 = arith.constant 0 : i32
    return %c0_i32, %c0_i32_0 : i32, i32
  }
  func.func @transform_3(%arg0: i32, %arg1: i32) -> (i32, i32) {
    %c0_i32 = arith.constant 0 : i32
    %c0_i32_0 = arith.constant 0 : i32
    %c0_i32_1 = arith.constant 0 : i32
    return %c0_i32, %c0_i32_0 : i32, i32
  }
  func.func @transform_4(%arg0: i32, %arg1: i32) -> (i32, i32) {
    %c0_i32 = arith.constant 0 : i32
    %c0_i32_0 = arith.constant 0 : i32
    %c0_i32_1 = arith.constant 0 : i32
    return %c0_i32, %c0_i32_0 : i32, i32
  }
  func.func @transform_5(%arg0: i32, %arg1: i32) -> (i32, i32) {
    %c0_i32 = arith.constant 0 : i32
    %c0_i32_0 = arith.constant 0 : i32
    %c0_i32_1 = arith.constant 0 : i32
    return %c0_i32, %c0_i32_0 : i32, i32
  }
  func.func @transform_6(%arg0: i32, %arg1: i32) -> (i32, i32) {
    %c0_i32 = arith.constant 0 : i32
    %c0_i32_0 = arith.constant 0 : i32
    %c0_i32_1 = arith.constant 0 : i32
    return %c0_i32, %c0_i32_0 : i32, i32
  }
  func.func @transform_7(%arg0: i32, %arg1: i32) -> (i32, i32) {
    %c0_i32 = arith.constant 0 : i32
    %c0_i32_0 = arith.constant 0 : i32
    %c0_i32_1 = arith.constant 0 : i32
    return %c0_i32, %c0_i32_0 : i32, i32
  }
  func.func @transform_8(%arg0: i32, %arg1: i32) -> (i32, i32) {
    %c0_i32 = arith.constant 0 : i32
    %c0_i32_0 = arith.constant 0 : i32
    %c0_i32_1 = arith.constant 0 : i32
    return %c0_i32, %c0_i32_0 : i32, i32
  }
  func.func @transform_9(%arg0: i32, %arg1: i32) -> (i32, i32) {
    %c0_i32 = arith.constant 0 : i32
    %c0_i32_0 = arith.constant 0 : i32
    %c0_i32_1 = arith.constant 0 : i32
    return %c0_i32, %c0_i32_0 : i32, i32
  }
  func.func @transform_10(%arg0: i32, %arg1: i32) -> (i32, i32, i32) {
    %c0_i32 = arith.constant 0 : i32
    %c0_i32_0 = arith.constant 0 : i32
    return %arg0, %arg1, %c0_i32 : i32, i32, i32
  }
}

</mosaic_0001>

<llo_original>
// kernel: tpu_custom_call.1
$region0: #{tpu_custom_call.1}
  #allocation0 [shape = 'u32[]', space=smem, size = 0x4, offset = 0x4, fixed_abs, tag = 'smem constant byte address 0x4 - core index']
  #allocation1 [shape = 'u32[144,128]{1,0:T(1,128)}', space=vmem, size = 0x12000, scoped, tag = 'internal scratch']
  %s0 = inlined_call_operand.vmem [shape: f32[2,290,4], index: 0, kind: input, shape index: {}]
  %s1 = inlined_call_operand.vmem [shape: f32[4,32], index: 1, kind: input, shape index: {}]
  %s2 = inlined_call_operand.vmem [shape: f32[4,32], index: 2, kind: input, shape index: {}]
  %s3 = inlined_call_operand.vmem [shape: f32[1,32], index: 3, kind: input, shape index: {}]
  %s4 = inlined_call_operand.vmem [shape: f32[1,32], index: 4, kind: input, shape index: {}]
  %s5 = inlined_call_operand.vmem [shape: f32[9,32], index: 5, kind: input, shape index: {}]
  %s6 = inlined_call_operand.vmem [shape: f32[9,32], index: 6, kind: input, shape index: {}]
  %s7 = inlined_call_operand.vmem [shape: f32[1,32], index: 7, kind: input, shape index: {}]
  %s8 = inlined_call_operand.vmem [shape: f32[1,32], index: 8, kind: input, shape index: {}]
  %s9 = inlined_call_operand.vmem [shape: f32[32,128], index: 9, kind: input, shape index: {}]
  %s10 = inlined_call_operand.hbm [shape: f32[2,256,128], index: 10, kind: output, shape index: {}]
  %s11 = sld [smem:[#allocation0]]
  $region73: #{tpu_custom_call.1} parent=0
    _
  %s13 = ssub.s32 1, %s11
  %s14 = scalar_select 0, %s13, %s11
  $region1: #{tpu_custom_call.1} parent=0
    #allocation2 [shape = 'u8[131072]{0}', space=vmem, size = 0x20000, scoped, tag = 'output window, operand 0']
    #allocation3 [shape = 's32[2]{0}', space=sflag, size = 0x8, scoped, tag = 'scoped memory for tpu_custom_call.1']
    %15 = vsyncpa [#allocation3], 0
    %s16 = scalar_lea.sflag [#allocation3], 1
    %17 = vsyncpa %s16, 0
    loop: start=0, step=1, limit=6
    $region2: #{tpu_custom_call.1} parent=1 // loop_pre_header
      _
    $region3: #{tpu_custom_call.1} parent=1 // loop_header
      %s19 = sphi 0, %s23
      %p20 = scmp.ge.s32.totalorder %s19, 6
      %s26 = sphi 0, %s38
      %s27 = sphi 0, %s34
      %s28 = sphi 0, %s26
      %s29 = sphi 0, %s27
      %s30 = sphi 0, %s28
      %s31 = sphi 0, %s29
      %s41 = sphi 0, %s43
      %s44 = sphi 0, %s41
      %s45 = sphi 0, %s44
      %s61 = sphi 0, %s45
      %s65 = sphi 0, %s65
      %s67 = sphi 0, %s65
      %s68 = sphi 0, %s67
      %s82 = sphi 0, %s68
      %s86 = sphi 0, %s86
      %s88 = sphi 0, %s86
      %s89 = sphi 0, %s88
      %s103 = sphi 0, %s89
      %s107 = sphi 0, %s107
      %s109 = sphi 0, %s107
      %s110 = sphi 0, %s109
      %s124 = sphi 0, %s110
      %s128 = sphi 0, %s128
      %s130 = sphi 0, %s128
      %s131 = sphi 0, %s130
      %s145 = sphi 0, %s131
      %s149 = sphi 0, %s149
      %s151 = sphi 0, %s149
      %s152 = sphi 0, %s151
      %s166 = sphi 0, %s152
      %s170 = sphi 0, %s170
      %s172 = sphi 0, %s170
      %s173 = sphi 0, %s172
      %s187 = sphi 0, %s173
      %s191 = sphi 0, %s191
      %s193 = sphi 0, %s191
      %s194 = sphi 0, %s193
      %s208 = sphi 0, %s194
      %s212 = sphi 0, %s212
      %s214 = sphi 0, %s212
      %s215 = sphi 0, %s214
      %s229 = sphi 0, %s215
      %s233 = sphi 0, %s233
      %s235 = sphi 0, %s233
      %s236 = sphi 0, %s235
      %s250 = sphi 0, %s236
      %s258 = sphi 0, %s260
      %s261 = sphi 0, %s258
      %s262 = sphi 0, %s261
      %s278 = sphi 0, %s262
    $region4: #{tpu_custom_call.1} parent=1 // loop_header_branch
      %22 = sbr.rel (%p20) target = $region8
    $region5: #{tpu_custom_call.1} parent=1 // loop_body
      %s24 = ssub.s32 %s19, 1
      %s25 = ssub.s32 %s19, 2
      %s32 = sadd.s32 1, %s27
      %p33 = scmp.ge.s32.totalorder %s32, 2
      %s34 = scalar_select %p33, 0, %s32
      %s35 = sadd.s32 1, %s26
      %s36 = scalar_select %p33, %s35, %s26
      %p37 = scmp.ge.s32.totalorder %s36, 2
      %s38 = scalar_select %p37, 0, %s36
      %s39 = ssub.s32 %s26, %s38
      %p40 = scmp.eq.s32.totalorder %s39, 0
      %s42 = sadd.s32 %s41, 1
      %s43 = scalar_select %p40, %s41, %s42
      %p46 = pneg %p40
      %p47 = scmp.eq.s32.totalorder %s19, 3
      %p48 = por %p46, %p47
      %p49 = scmp.ne.s32.totalorder %s41, %s44
      %p50 = scmp.eq.s32.totalorder %s19, 0
      %p51 = por %p49, %p50
      %p52 = scmp.ne.s32.totalorder %s41, %s44
      %p53 = scmp.eq.s32.totalorder %s24, 3
      %p54 = por %p52, %p53
      %p55 = scmp.ne.s32.totalorder %s44, %s45
      %p56 = scmp.eq.s32.totalorder %s24, 0
      %p57 = por %p55, %p56
      %p58 = scmp.ne.s32.totalorder %s44, %s45
      %p59 = scmp.eq.s32.totalorder %s25, 3
      %p60 = por %p58, %p59
      %p62 = scmp.ne.s32.totalorder %s45, %s61
      %p63 = scmp.eq.s32.totalorder %s25, 0
      %p64 = por %p62, %p63
      %s66 = sadd.s32 %s65, 1
      %p69 = scmp.eq.s32.totalorder %s19, 3
      %p70 = scmp.ne.s32.totalorder %s65, %s67
      %p71 = scmp.eq.s32.totalorder %s19, 0
      %p72 = por %p70, %p71
      %p73 = scmp.ne.s32.totalorder %s65, %s67
      %p74 = scmp.eq.s32.totalorder %s24, 3
      %p75 = por %p73, %p74
      %p76 = scmp.ne.s32.totalorder %s67, %s68
      %p77 = scmp.eq.s32.totalorder %s24, 0
      %p78 = por %p76, %p77
      %p79 = scmp.ne.s32.totalorder %s67, %s68
      %p80 = scmp.eq.s32.totalorder %s25, 3
      %p81 = por %p79, %p80
      %p83 = scmp.ne.s32.totalorder %s68, %s82
      %p84 = scmp.eq.s32.totalorder %s25, 0
      %p85 = por %p83, %p84
      %s87 = sadd.s32 %s86, 1
      %p90 = scmp.eq.s32.totalorder %s19, 3
      %p91 = scmp.ne.s32.totalorder %s86, %s88
      %p92 = scmp.eq.s32.totalorder %s19, 0
      %p93 = por %p91, %p92
      %p94 = scmp.ne.s32.totalorder %s86, %s88
      %p95 = scmp.eq.s32.totalorder %s24, 3
      %p96 = por %p94, %p95
      %p97 = scmp.ne.s32.totalorder %s88, %s89
      %p98 = scmp.eq.s32.totalorder %s24, 0
      %p99 = por %p97, %p98
      %p100 = scmp.ne.s32.totalorder %s88, %s89
      %p101 = scmp.eq.s32.totalorder %s25, 3
      %p102 = por %p100, %p101
      %p104 = scmp.ne.s32.totalorder %s89, %s103
      %p105 = scmp.eq.s32.totalorder %s25, 0
      %p106 = por %p104, %p105
      %s108 = sadd.s32 %s107, 1
      %p111 = scmp.eq.s32.totalorder %s19, 3
      %p112 = scmp.ne.s32.totalorder %s107, %s109
      %p113 = scmp.eq.s32.totalorder %s19, 0
      %p114 = por %p112, %p113
      %p115 = scmp.ne.s32.totalorder %s107, %s109
      %p116 = scmp.eq.s32.totalorder %s24, 3
      %p117 = por %p115, %p116
      %p118 = scmp.ne.s32.totalorder %s109, %s110
      %p119 = scmp.eq.s32.totalorder %s24, 0
      %p120 = por %p118, %p119
      %p121 = scmp.ne.s32.totalorder %s109, %s110
      %p122 = scmp.eq.s32.totalorder %s25, 3
      %p123 = por %p121, %p122
      %p125 = scmp.ne.s32.totalorder %s110, %s124
      %p126 = scmp.eq.s32.totalorder %s25, 0
      %p127 = por %p125, %p126
      %s129 = sadd.s32 %s128, 1
      %p132 = scmp.eq.s32.totalorder %s19, 3
      %p133 = scmp.ne.s32.totalorder %s128, %s130
      %p134 = scmp.eq.s32.totalorder %s19, 0
      %p135 = por %p133, %p134
      %p136 = scmp.ne.s32.totalorder %s128, %s130
      %p137 = scmp.eq.s32.totalorder %s24, 3
      %p138 = por %p136, %p137
      %p139 = scmp.ne.s32.totalorder %s130, %s131
      %p140 = scmp.eq.s32.totalorder %s24, 0
      %p141 = por %p139, %p140
      %p142 = scmp.ne.s32.totalorder %s130, %s131
      %p143 = scmp.eq.s32.totalorder %s25, 3
      %p144 = por %p142, %p143
      %p146 = scmp.ne.s32.totalorder %s131, %s145
      %p147 = scmp.eq.s32.totalorder %s25, 0
      %p148 = por %p146, %p147
      %s150 = sadd.s32 %s149, 1
      %p153 = scmp.eq.s32.totalorder %s19, 3
      %p154 = scmp.ne.s32.totalorder %s149, %s151
      %p155 = scmp.eq.s32.totalorder %s19, 0
      %p156 = por %p154, %p155
      %p157 = scmp.ne.s32.totalorder %s149, %s151
      %p158 = scmp.eq.s32.totalorder %s24, 3
      %p159 = por %p157, %p158
      %p160 = scmp.ne.s32.totalorder %s151, %s152
      %p161 = scmp.eq.s32.totalorder %s24, 0
      %p162 = por %p160, %p161
      %p163 = scmp.ne.s32.totalorder %s151, %s152
      %p164 = scmp.eq.s32.totalorder %s25, 3
      %p165 = por %p163, %p164
      %p167 = scmp.ne.s32.totalorder %s152, %s166
      %p168 = scmp.eq.s32.totalorder %s25, 0
      %p169 = por %p167, %p168
      %s171 = sadd.s32 %s170, 1
      %p174 = scmp.eq.s32.totalorder %s19, 3
      %p175 = scmp.ne.s32.totalorder %s170, %s172
      %p176 = scmp.eq.s32.totalorder %s19, 0
      %p177 = por %p175, %p176
      %p178 = scmp.ne.s32.totalorder %s170, %s172
      %p179 = scmp.eq.s32.totalorder %s24, 3
      %p180 = por %p178, %p179
      %p181 = scmp.ne.s32.totalorder %s172, %s173
      %p182 = scmp.eq.s32.totalorder %s24, 0
      %p183 = por %p181, %p182
      %p184 = scmp.ne.s32.totalorder %s172, %s173
      %p185 = scmp.eq.s32.totalorder %s25, 3
      %p186 = por %p184, %p185
      %p188 = scmp.ne.s32.totalorder %s173, %s187
      %p189 = scmp.eq.s32.totalorder %s25, 0
      %p190 = por %p188, %p189
      %s192 = sadd.s32 %s191, 1
      %p195 = scmp.eq.s32.totalorder %s19, 3
      %p196 = scmp.ne.s32.totalorder %s191, %s193
      %p197 = scmp.eq.s32.totalorder %s19, 0
      %p198 = por %p196, %p197
      %p199 = scmp.ne.s32.totalorder %s191, %s193
      %p200 = scmp.eq.s32.totalorder %s24, 3
      %p201 = por %p199, %p200
      %p202 = scmp.ne.s32.totalorder %s193, %s194
      %p203 = scmp.eq.s32.totalorder %s24, 0
      %p204 = por %p202, %p203
      %p205 = scmp.ne.s32.totalorder %s193, %s194
      %p206 = scmp.eq.s32.totalorder %s25, 3
      %p207 = por %p205, %p206
      %p209 = scmp.ne.s32.totalorder %s194, %s208
      %p210 = scmp.eq.s32.totalorder %s25, 0
      %p211 = por %p209, %p210
      %s213 = sadd.s32 %s212, 1
      %p216 = scmp.eq.s32.totalorder %s19, 3
      %p217 = scmp.ne.s32.totalorder %s212, %s214
      %p218 = scmp.eq.s32.totalorder %s19, 0
      %p219 = por %p217, %p218
      %p220 = scmp.ne.s32.totalorder %s212, %s214
      %p221 = scmp.eq.s32.totalorder %s24, 3
      %p222 = por %p220, %p221
      %p223 = scmp.ne.s32.totalorder %s214, %s215
      %p224 = scmp.eq.s32.totalorder %s24, 0
      %p225 = por %p223, %p224
      %p226 = scmp.ne.s32.totalorder %s214, %s215
      %p227 = scmp.eq.s32.totalorder %s25, 3
      %p228 = por %p226, %p227
      %p230 = scmp.ne.s32.totalorder %s215, %s229
      %p231 = scmp.eq.s32.totalorder %s25, 0
      %p232 = por %p230, %p231
      %s234 = sadd.s32 %s233, 1
      %p237 = scmp.eq.s32.totalorder %s19, 3
      %p238 = scmp.ne.s32.totalorder %s233, %s235
      %p239 = scmp.eq.s32.totalorder %s19, 0
      %p240 = por %p238, %p239
      %p241 = scmp.ne.s32.totalorder %s233, %s235
      %p242 = scmp.eq.s32.totalorder %s24, 3
      %p243 = por %p241, %p242
      %p244 = scmp.ne.s32.totalorder %s235, %s236
      %p245 = scmp.eq.s32.totalorder %s24, 0
      %p246 = por %p244, %p245
      %p247 = scmp.ne.s32.totalorder %s235, %s236
      %p248 = scmp.eq.s32.totalorder %s25, 3
      %p249 = por %p247, %p248
      %p251 = scmp.ne.s32.totalorder %s236, %s250
      %p252 = scmp.eq.s32.totalorder %s25, 0
      %p253 = por %p251, %p252
      %s254 = ssub.s32 %s26, %s38
      %s255 = ssub.s32 %s27, %s34
      %s256 = sor.u32 %s254, %s255
      %p257 = scmp.eq.s32.totalorder %s256, 0
      %s259 = sadd.s32 %s258, 1
      %s260 = scalar_select %p257, %s258, %s259
      %p263 = pneg %p257
      %p264 = scmp.eq.s32.totalorder %s19, 3
      %p265 = por %p263, %p264
      %p266 = scmp.ne.s32.totalorder %s258, %s261
      %p267 = scmp.eq.s32.totalorder %s19, 0
      %p268 = por %p266, %p267
      %p269 = scmp.ne.s32.totalorder %s258, %s261
      %p270 = scmp.eq.s32.totalorder %s24, 3
      %p271 = por %p269, %p270
      %p272 = scmp.ne.s32.totalorder %s261, %s262
      %p273 = scmp.eq.s32.totalorder %s24, 0
      %p274 = por %p272, %p273
      %p275 = scmp.ne.s32.totalorder %s261, %s262
      %p276 = scmp.eq.s32.totalorder %s25, 3
      %p277 = por %p275, %p276
      %p279 = scmp.ne.s32.totalorder %s262, %s278
      %p280 = scmp.eq.s32.totalorder %s25, 0
      %p281 = por %p279, %p280
      %p282 = scmp.le.s32.totalorder 1, %s19
      %p283 = scmp.lt.s32.totalorder %s19, 5
      %p284 = pnand %p282, %p283
      %p285 = pneg %p284
      // Predicated region
      $region9: #{tpu_custom_call.1} parent=5 // pred_check
        _
      $region10: #{tpu_custom_call.1} parent=5 // pred_check_branch
        %287 = sbr.rel (%p284) target = $region12
      $region11: #{tpu_custom_call.1} parent=5 // pred_region
        %s288 = ssub.s32 %s19, 1
        // Predicated region
        $region13: #{tpu_custom_call.1} parent=11 // pred_check
          %p289 = pneg %p78
        $region14: #{tpu_custom_call.1} parent=11 // pred_check_branch
          %291 = sbr.rel (%p289) target = $region16
        $region15: #{tpu_custom_call.1} parent=11 // pred_region
          _
        $region16: #{tpu_custom_call.1} parent=11 // pred_fallthru
          _
        // Predicated region
        $region17: #{tpu_custom_call.1} parent=11 // pred_check
          %p292 = pneg %p99
        $region18: #{tpu_custom_call.1} parent=11 // pred_check_branch
          %294 = sbr.rel (%p292) target = $region20
        $region19: #{tpu_custom_call.1} parent=11 // pred_region
          _
        $region20: #{tpu_custom_call.1} parent=11 // pred_fallthru
          _
        // Predicated region
        $region21: #{tpu_custom_call.1} parent=11 // pred_check
          %p295 = pneg %p120
        $region22: #{tpu_custom_call.1} parent=11 // pred_check_branch
          %297 = sbr.rel (%p295) target = $region24
        $region23: #{tpu_custom_call.1} parent=11 // pred_region
          _
        $region24: #{tpu_custom_call.1} parent=11 // pred_fallthru
          _
        // Predicated region
        $region25: #{tpu_custom_call.1} parent=11 // pred_check
          %p298 = pneg %p141
        $region26: #{tpu_custom_call.1} parent=11 // pred_check_branch
          %300 = sbr.rel (%p298) target = $region28
        $region27: #{tpu_custom_call.1} parent=11 // pred_region
          _
        $region28: #{tpu_custom_call.1} parent=11 // pred_fallthru
          _
        // Predicated region
        $region29: #{tpu_custom_call.1} parent=11 // pred_check
          %p301 = pneg %p162
        $region30: #{tpu_custom_call.1} parent=11 // pred_check_branch
          %303 = sbr.rel (%p301) target = $region32
        $region31: #{tpu_custom_call.1} parent=11 // pred_region
          _
        $region32: #{tpu_custom_call.1} parent=11 // pred_fallthru
          _
        // Predicated region
        $region33: #{tpu_custom_call.1} parent=11 // pred_check
          %p304 = pneg %p183
        $region34: #{tpu_custom_call.1} parent=11 // pred_check_branch
          %306 = sbr.rel (%p304) target = $region36
        $region35: #{tpu_custom_call.1} parent=11 // pred_region
          _
        $region36: #{tpu_custom_call.1} parent=11 // pred_fallthru
          _
        // Predicated region
        $region37: #{tpu_custom_call.1} parent=11 // pred_check
          %p307 = pneg %p204
        $region38: #{tpu_custom_call.1} parent=11 // pred_check_branch
          %309 = sbr.rel (%p307) target = $region40
        $region39: #{tpu_custom_call.1} parent=11 // pred_region
          _
        $region40: #{tpu_custom_call.1} parent=11 // pred_fallthru
          _
        // Predicated region
        $region41: #{tpu_custom_call.1} parent=11 // pred_check
          %p310 = pneg %p225
        $region42: #{tpu_custom_call.1} parent=11 // pred_check_branch
          %312 = sbr.rel (%p310) target = $region44
        $region43: #{tpu_custom_call.1} parent=11 // pred_region
          _
        $region44: #{tpu_custom_call.1} parent=11 // pred_fallthru
          _
        // Predicated region
        $region45: #{tpu_custom_call.1} parent=11 // pred_check
          %p313 = pneg %p246
        $region46: #{tpu_custom_call.1} parent=11 // pred_check_branch
          %315 = sbr.rel (%p313) target = $region48
        $region47: #{tpu_custom_call.1} parent=11 // pred_region
          _
        $region48: #{tpu_custom_call.1} parent=11 // pred_fallthru
          _
      $region12: #{tpu_custom_call.1} parent=5 // pred_fallthru
        _
      %p316 = scmp.lt.s32.totalorder %s19, 4
      // Predicated region
      $region49: #{tpu_custom_call.1} parent=5 // pred_check
        %p317 = pneg %p316
      $region50: #{tpu_custom_call.1} parent=5 // pred_check_branch
        %319 = sbr.rel (%p317) target = $region52
      $region51: #{tpu_custom_call.1} parent=5 // pred_region
        // Predicated region
        $region53: #{tpu_custom_call.1} parent=51 // pred_check
          %p320 = pneg %p51
        $region54: #{tpu_custom_call.1} parent=51 // pred_check_branch
          %322 = sbr.rel (%p320) target = $region56
        $region55: #{tpu_custom_call.1} parent=51 // pred_region
          %p323 = scmp.lt.s32.totalorder %s26, 1
          %s324 = scalar_select %p323, %s26, 1
          %s325 = smul.addr %s324, 37
          %s326 = smul.addr %s325, 8
          %s327 = scalar_lea.vmem %s0, %s326
        $region56: #{tpu_custom_call.1} parent=51 // pred_fallthru
          _
      $region52: #{tpu_custom_call.1} parent=5 // pred_fallthru
        _
      %p328 = scmp.le.s32.totalorder 1, %s19
      %p329 = scmp.lt.s32.totalorder %s19, 5
      %p330 = pnand %p328, %p329
      %p331 = pneg %p330
      // Predicated region
      $region57: #{tpu_custom_call.1} parent=5 // pred_check
        _
      $region58: #{tpu_custom_call.1} parent=5 // pred_check_branch
        %333 = sbr.rel (%p330) target = $region60
      $region59: #{tpu_custom_call.1} parent=5 // pred_region
        %s334 = ssub.s32 %s19, 1
        %p335 = scmp.lt.s32.totalorder %s28, 1
        %s336 = scalar_select %p335, %s28, 1
        %s337 = smul.addr %s336, 37
        %s338 = smul.addr %s337, 8
        %s339 = scalar_lea.vmem %s0, %s338
        %p340 = pneg %p57
        %p341 = pneg %p54
        %p342 = pneg %p78
        %p343 = pneg %p75
        %p344 = pneg %p99
        %p345 = pneg %p96
        %p346 = pneg %p120
        %p347 = pneg %p117
        %p348 = pneg %p141
        %p349 = pneg %p138
        %p350 = pneg %p162
        %p351 = pneg %p159
        %p352 = pneg %p183
        %p353 = pneg %p180
        %p354 = pneg %p204
        %p355 = pneg %p201
        %p356 = pneg %p225
        %p357 = pneg %p222
        %p358 = pneg %p246
        %p359 = pneg %p243
        %p360 = pneg %p274
        %p361 = pneg %p271
        %s362 = sand.u32 %s261, 1
        %s363 = scalar_lea.sflag [#allocation3], %s362
        %s364 = sand.u32 %s261, 1
        %s365 = smul.addr %s364, 128
        %s366 = scalar_lea.vmem [#allocation2], %s365
        %p367 = scmp.lt.s32.totalorder %s28, 1
        %s368 = scalar_select %p367, %s28, 1
        %s369 = smul.addr %s368, 37
        %s370 = smul.addr %s369, 8
        %s371 = scalar_lea.vmem %s0, %s370
        %s372 = smul.u32 16, %s29
        %s373 = smul.u32 %s29, 128
        %s374 = scalar_lea.vmem %s371, %s373
        %v375 = vld [vmem:[%s374] sm:$0xff]
        %v376 = vld [vmem:[%s374 + $0x8] sm:$0xff]
        %v377 = vld [vmem:[%s374 + $0x10] sm:$0xff]
        %v378 = vld [vmem:[%s374 + $0x18] sm:$0xff]
        %v379 = vld [vmem:[%s374 + $0x20] sm:$0xff]
        %v380 = vld [vmem:[%s374 + $0x28] sm:$0xff]
        %v381 = vld [vmem:[%s374 + $0x30] sm:$0xff]
        %v382 = vld [vmem:[%s374 + $0x38] sm:$0xff]
        %v383 = vld [vmem:[%s374 + $0x40] sm:$0xff]
        %v384 = vld [vmem:[%s374 + $0x48] sm:$0xff]
        %v385 = vld [vmem:[%s374 + $0x50] sm:$0xff]
        %v386 = vld [vmem:[%s374 + $0x58] sm:$0xff]
        %v387 = vld [vmem:[%s374 + $0x60] sm:$0xff]
        %v388 = vld [vmem:[%s374 + $0x68] sm:$0xff]
        %v389 = vld [vmem:[%s374 + $0x70] sm:$0xff]
        %v390 = vld [vmem:[%s374 + $0x78] sm:$0xff]
        %v391 = vld [vmem:[%s374 + $0x80] sm:$0xff]
        %v392 = vld [vmem:[%s374 + $0x88] sm:$0xff]
        %v393 = vld [vmem:[%s374 + $0x90] sm:$0xff]
        %v394 = vld [vmem:[%s374 + $0x98] sm:$0xff]
        %v395 = vld [vmem:[%s374 + $0xa0] sm:$0x3]
        %v396 = vld [vmem:[%s1] sm:$0xf]
        %v397 = vld [vmem:[%s2] sm:$0xf]
        %399 = vset.pattern.permute.xlu0 0
        %400 = vperm.xlu0 %399, %v375
        %v401 = vpop.permute.xlu0 %400
        %404 = vset.pattern.permute.xlu0 0
        %405 = vperm.xlu0 %404, %v376
        %v406 = vpop.permute.xlu0 %405
        %409 = vset.pattern.permute.xlu0 0
        %410 = vperm.xlu0 %409, %v377
        %v411 = vpop.permute.xlu0 %410
        %414 = vset.pattern.permute.xlu0 0
        %415 = vperm.xlu0 %414, %v378
        %v416 = vpop.permute.xlu0 %415
        %419 = vset.pattern.permute.xlu0 0
        %420 = vperm.xlu0 %419, %v379
        %v421 = vpop.permute.xlu0 %420
        %424 = vset.pattern.permute.xlu0 0
        %425 = vperm.xlu0 %424, %v380
        %v426 = vpop.permute.xlu0 %425
        %429 = vset.pattern.permute.xlu0 0
        %430 = vperm.xlu0 %429, %v381
        %v431 = vpop.permute.xlu0 %430
        %434 = vset.pattern.permute.xlu0 0
        %435 = vperm.xlu0 %434, %v382
        %v436 = vpop.permute.xlu0 %435
        %439 = vset.pattern.permute.xlu0 0
        %440 = vperm.xlu0 %439, %v383
        %v441 = vpop.permute.xlu0 %440
        %444 = vset.pattern.permute.xlu0 0
        %445 = vperm.xlu0 %444, %v384
        %v446 = vpop.permute.xlu0 %445
        %449 = vset.pattern.permute.xlu0 0
        %450 = vperm.xlu0 %449, %v385
        %v451 = vpop.permute.xlu0 %450
        %454 = vset.pattern.permute.xlu0 0
        %455 = vperm.xlu0 %454, %v386
        %v456 = vpop.permute.xlu0 %455
        %459 = vset.pattern.permute.xlu0 0
        %460 = vperm.xlu0 %459, %v387
        %v461 = vpop.permute.xlu0 %460
        %464 = vset.pattern.permute.xlu0 0
        %465 = vperm.xlu0 %464, %v388
        %v466 = vpop.permute.xlu0 %465
        %469 = vset.pattern.permute.xlu0 0
        %470 = vperm.xlu0 %469, %v389
        %v471 = vpop.permute.xlu0 %470
        %474 = vset.pattern.permute.xlu0 0
        %475 = vperm.xlu0 %474, %v390
        %v476 = vpop.permute.xlu0 %475
        %479 = vset.pattern.permute.xlu0 0
        %480 = vperm.xlu0 %479, %v391
        %v481 = vpop.permute.xlu0 %480
        %484 = vset.pattern.permute.xlu0 0
        %485 = vperm.xlu0 %484, %v392
        %v486 = vpop.permute.xlu0 %485
        %489 = vset.pattern.permute.xlu0 0
        %490 = vperm.xlu0 %489, %v393
        %v491 = vpop.permute.xlu0 %490
        %494 = vset.pattern.permute.xlu0 0
        %495 = vperm.xlu0 %494, %v394
        %v496 = vpop.permute.xlu0 %495
        %499 = vset.pattern.permute.xlu0 0
        %500 = vperm.xlu0 %499, %v395
        %v501 = vpop.permute.xlu0 %500
        %v503 = vlaneseq
        %v504 = vshrl.u32 %v503, 7
        %v505 = vsub.s32 0, %v504
        %v506 = vrot.slane %v396, %v505
        %v507 = vmul.f32 %v401, %v506
        %v508 = vmul.f32 %v406, %v506
        %v509 = vmul.f32 %v411, %v506
        %v510 = vmul.f32 %v416, %v506
        %v511 = vmul.f32 %v421, %v506
        %v512 = vmul.f32 %v426, %v506
        %v513 = vmul.f32 %v431, %v506
        %v514 = vmul.f32 %v436, %v506
        %v515 = vmul.f32 %v441, %v506
        %v516 = vmul.f32 %v446, %v506
        %v517 = vmul.f32 %v451, %v506
        %v518 = vmul.f32 %v456, %v506
        %v519 = vmul.f32 %v461, %v506
        %v520 = vmul.f32 %v466, %v506
        %v521 = vmul.f32 %v471, %v506
        %v522 = vmul.f32 %v476, %v506
        %v523 = vmul.f32 %v481, %v506
        %v524 = vmul.f32 %v486, %v506
        %v525 = vmul.f32 %v491, %v506
        %v526 = vmul.f32 %v496, %v506
        %v527 = vmul.f32 %v501, %v506
        %v528 = vld [vmem:[%s3] sm:$0x1]
        %v530 = vlaneseq
        %v531 = vshrl.u32 %v530, 7
        %v532 = vsub.s32 0, %v531
        %v533 = vrot.slane %v528, %v532
        %v535 = vadd.f32 %v507, %v533
        %v536 = vadd.f32 %v508, %v533
        %v537 = vadd.f32 %v509, %v533
        %v538 = vadd.f32 %v510, %v533
        %v539 = vadd.f32 %v511, %v533
        %v540 = vadd.f32 %v512, %v533
        %v541 = vadd.f32 %v513, %v533
        %v542 = vadd.f32 %v514, %v533
        %v543 = vadd.f32 %v515, %v533
        %v544 = vadd.f32 %v516, %v533
        %v545 = vadd.f32 %v517, %v533
        %v546 = vadd.f32 %v518, %v533
        %v547 = vadd.f32 %v519, %v533
        %v548 = vadd.f32 %v520, %v533
        %v549 = vadd.f32 %v521, %v533
        %v550 = vadd.f32 %v522, %v533
        %v551 = vadd.f32 %v523, %v533
        %v552 = vadd.f32 %v524, %v533
        %v553 = vadd.f32 %v525, %v533
        %v554 = vadd.f32 %v526, %v533
        %v555 = vadd.f32 %v527, %v533
        %v556 = vlaneseq
        %v557 = vshrl.u32 %v556, 7
        %v558 = vsub.s32 0, %v557
        %v559 = vrot.slane %v397, %v558
        %v560 = vmul.f32 %v401, %v559
        %v561 = vmul.f32 %v406, %v559
        %v562 = vmul.f32 %v411, %v559
        %v563 = vmul.f32 %v416, %v559
        %v564 = vmul.f32 %v421, %v559
        %v565 = vmul.f32 %v426, %v559
        %v566 = vmul.f32 %v431, %v559
        %v567 = vmul.f32 %v436, %v559
        %v568 = vmul.f32 %v441, %v559
        %v569 = vmul.f32 %v446, %v559
        %v570 = vmul.f32 %v451, %v559
        %v571 = vmul.f32 %v456, %v559
        %v572 = vmul.f32 %v461, %v559
        %v573 = vmul.f32 %v466, %v559
        %v574 = vmul.f32 %v471, %v559
        %v575 = vmul.f32 %v476, %v559
        %v576 = vmul.f32 %v481, %v559
        %v577 = vmul.f32 %v486, %v559
        %v578 = vmul.f32 %v491, %v559
        %v579 = vmul.f32 %v496, %v559
        %v580 = vmul.f32 %v501, %v559
        %v581 = vld [vmem:[%s4] sm:$0x1]
        %v583 = vlaneseq
        %v584 = vshrl.u32 %v583, 7
        %v585 = vsub.s32 0, %v584
        %v586 = vrot.slane %v581, %v585
        %v588 = vadd.f32 %v560, %v586
        %v589 = vadd.f32 %v561, %v586
        %v590 = vadd.f32 %v562, %v586
        %v591 = vadd.f32 %v563, %v586
        %v592 = vadd.f32 %v564, %v586
        %v593 = vadd.f32 %v565, %v586
        %v594 = vadd.f32 %v566, %v586
        %v595 = vadd.f32 %v567, %v586
        %v596 = vadd.f32 %v568, %v586
        %v597 = vadd.f32 %v569, %v586
        %v598 = vadd.f32 %v570, %v586
        %v599 = vadd.f32 %v571, %v586
        %v600 = vadd.f32 %v572, %v586
        %v601 = vadd.f32 %v573, %v586
        %v602 = vadd.f32 %v574, %v586
        %v603 = vadd.f32 %v575, %v586
        %v604 = vadd.f32 %v576, %v586
        %v605 = vadd.f32 %v577, %v586
        %v606 = vadd.f32 %v578, %v586
        %v607 = vadd.f32 %v579, %v586
        %v608 = vadd.f32 %v580, %v586
        %609 = vset.pattern.permute.xlu0 1
        %610 = vperm.xlu0 %609, %v375
        %v611 = vpop.permute.xlu0 %610
        %613 = vset.pattern.permute.xlu0 1
        %614 = vperm.xlu0 %613, %v376
        %v615 = vpop.permute.xlu0 %614
        %617 = vset.pattern.permute.xlu0 1
        %618 = vperm.xlu0 %617, %v377
        %v619 = vpop.permute.xlu0 %618
        %621 = vset.pattern.permute.xlu0 1
        %622 = vperm.xlu0 %621, %v378
        %v623 = vpop.permute.xlu0 %622
        %625 = vset.pattern.permute.xlu0 1
        %626 = vperm.xlu0 %625, %v379
        %v627 = vpop.permute.xlu0 %626
        %629 = vset.pattern.permute.xlu0 1
        %630 = vperm.xlu0 %629, %v380
        %v631 = vpop.permute.xlu0 %630
        %633 = vset.pattern.permute.xlu0 1
        %634 = vperm.xlu0 %633, %v381
        %v635 = vpop.permute.xlu0 %634
        %637 = vset.pattern.permute.xlu0 1
        %638 = vperm.xlu0 %637, %v382
        %v639 = vpop.permute.xlu0 %638
        %641 = vset.pattern.permute.xlu0 1
        %642 = vperm.xlu0 %641, %v383
        %v643 = vpop.permute.xlu0 %642
        %645 = vset.pattern.permute.xlu0 1
        %646 = vperm.xlu0 %645, %v384
        %v647 = vpop.permute.xlu0 %646
        %649 = vset.pattern.permute.xlu0 1
        %650 = vperm.xlu0 %649, %v385
        %v651 = vpop.permute.xlu0 %650
        %653 = vset.pattern.permute.xlu0 1
        %654 = vperm.xlu0 %653, %v386
        %v655 = vpop.permute.xlu0 %654
        %657 = vset.pattern.permute.xlu0 1
        %658 = vperm.xlu0 %657, %v387
        %v659 = vpop.permute.xlu0 %658
        %661 = vset.pattern.permute.xlu0 1
        %662 = vperm.xlu0 %661, %v388
        %v663 = vpop.permute.xlu0 %662
        %665 = vset.pattern.permute.xlu0 1
        %666 = vperm.xlu0 %665, %v389
        %v667 = vpop.permute.xlu0 %666
        %669 = vset.pattern.permute.xlu0 1
        %670 = vperm.xlu0 %669, %v390
        %v671 = vpop.permute.xlu0 %670
        %673 = vset.pattern.permute.xlu0 1
        %674 = vperm.xlu0 %673, %v391
        %v675 = vpop.permute.xlu0 %674
        %677 = vset.pattern.permute.xlu0 1
        %678 = vperm.xlu0 %677, %v392
        %v679 = vpop.permute.xlu0 %678
        %681 = vset.pattern.permute.xlu0 1
        %682 = vperm.xlu0 %681, %v393
        %v683 = vpop.permute.xlu0 %682
        %685 = vset.pattern.permute.xlu0 1
        %686 = vperm.xlu0 %685, %v394
        %v687 = vpop.permute.xlu0 %686
        %689 = vset.pattern.permute.xlu0 1
        %690 = vperm.xlu0 %689, %v395
        %v691 = vpop.permute.xlu0 %690
        %v693 = vlaneseq
        %v694 = vshrl.u32 %v693, 7
        %v695 = vsub.s32 1, %v694
        %v696 = vrot.slane %v396, %v695
        %v697 = vmul.f32 %v611, %v696
        %v698 = vmul.f32 %v615, %v696
        %v699 = vmul.f32 %v619, %v696
        %v700 = vmul.f32 %v623, %v696
        %v701 = vmul.f32 %v627, %v696
        %v702 = vmul.f32 %v631, %v696
        %v703 = vmul.f32 %v635, %v696
        %v704 = vmul.f32 %v639, %v696
        %v705 = vmul.f32 %v643, %v696
        %v706 = vmul.f32 %v647, %v696
        %v707 = vmul.f32 %v651, %v696
        %v708 = vmul.f32 %v655, %v696
        %v709 = vmul.f32 %v659, %v696
        %v710 = vmul.f32 %v663, %v696
        %v711 = vmul.f32 %v667, %v696
        %v712 = vmul.f32 %v671, %v696
        %v713 = vmul.f32 %v675, %v696
        %v714 = vmul.f32 %v679, %v696
        %v715 = vmul.f32 %v683, %v696
        %v716 = vmul.f32 %v687, %v696
        %v717 = vmul.f32 %v691, %v696
        %v718 = vadd.f32 %v535, %v697
        %v719 = vadd.f32 %v536, %v698
        %v720 = vadd.f32 %v537, %v699
        %v721 = vadd.f32 %v538, %v700
        %v722 = vadd.f32 %v539, %v701
        %v723 = vadd.f32 %v540, %v702
        %v724 = vadd.f32 %v541, %v703
        %v725 = vadd.f32 %v542, %v704
        %v726 = vadd.f32 %v543, %v705
        %v727 = vadd.f32 %v544, %v706
        %v728 = vadd.f32 %v545, %v707
        %v729 = vadd.f32 %v546, %v708
        %v730 = vadd.f32 %v547, %v709
        %v731 = vadd.f32 %v548, %v710
        %v732 = vadd.f32 %v549, %v711
        %v733 = vadd.f32 %v550, %v712
        %v734 = vadd.f32 %v551, %v713
        %v735 = vadd.f32 %v552, %v714
        %v736 = vadd.f32 %v553, %v715
        %v737 = vadd.f32 %v554, %v716
        %v738 = vadd.f32 %v555, %v717
        %v739 = vlaneseq
        %v740 = vshrl.u32 %v739, 7
        %v741 = vsub.s32 1, %v740
        %v742 = vrot.slane %v397, %v741
        %v743 = vmul.f32 %v611, %v742
        %v744 = vmul.f32 %v615, %v742
        %v745 = vmul.f32 %v619, %v742
        %v746 = vmul.f32 %v623, %v742
        %v747 = vmul.f32 %v627, %v742
        %v748 = vmul.f32 %v631, %v742
        %v749 = vmul.f32 %v635, %v742
        %v750 = vmul.f32 %v639, %v742
        %v751 = vmul.f32 %v643, %v742
        %v752 = vmul.f32 %v647, %v742
        %v753 = vmul.f32 %v651, %v742
        %v754 = vmul.f32 %v655, %v742
        %v755 = vmul.f32 %v659, %v742
        %v756 = vmul.f32 %v663, %v742
        %v757 = vmul.f32 %v667, %v742
        %v758 = vmul.f32 %v671, %v742
        %v759 = vmul.f32 %v675, %v742
        %v760 = vmul.f32 %v679, %v742
        %v761 = vmul.f32 %v683, %v742
        %v762 = vmul.f32 %v687, %v742
        %v763 = vmul.f32 %v691, %v742
        %v764 = vadd.f32 %v588, %v743
        %v765 = vadd.f32 %v589, %v744
        %v766 = vadd.f32 %v590, %v745
        %v767 = vadd.f32 %v591, %v746
        %v768 = vadd.f32 %v592, %v747
        %v769 = vadd.f32 %v593, %v748
        %v770 = vadd.f32 %v594, %v749
        %v771 = vadd.f32 %v595, %v750
        %v772 = vadd.f32 %v596, %v751
        %v773 = vadd.f32 %v597, %v752
        %v774 = vadd.f32 %v598, %v753
        %v775 = vadd.f32 %v599, %v754
        %v776 = vadd.f32 %v600, %v755
        %v777 = vadd.f32 %v601, %v756
        %v778 = vadd.f32 %v602, %v757
        %v779 = vadd.f32 %v603, %v758
        %v780 = vadd.f32 %v604, %v759
        %v781 = vadd.f32 %v605, %v760
        %v782 = vadd.f32 %v606, %v761
        %v783 = vadd.f32 %v607, %v762
        %v784 = vadd.f32 %v608, %v763
        %785 = vset.pattern.permute.xlu0 2
        %786 = vperm.xlu0 %785, %v375
        %v787 = vpop.permute.xlu0 %786
        %789 = vset.pattern.permute.xlu0 2
        %790 = vperm.xlu0 %789, %v376
        %v791 = vpop.permute.xlu0 %790
        %793 = vset.pattern.permute.xlu0 2
        %794 = vperm.xlu0 %793, %v377
        %v795 = vpop.permute.xlu0 %794
        %797 = vset.pattern.permute.xlu0 2
        %798 = vperm.xlu0 %797, %v378
        %v799 = vpop.permute.xlu0 %798
        %801 = vset.pattern.permute.xlu0 2
        %802 = vperm.xlu0 %801, %v379
        %v803 = vpop.permute.xlu0 %802
        %805 = vset.pattern.permute.xlu0 2
        %806 = vperm.xlu0 %805, %v380
        %v807 = vpop.permute.xlu0 %806
        %809 = vset.pattern.permute.xlu0 2
        %810 = vperm.xlu0 %809, %v381
        %v811 = vpop.permute.xlu0 %810
        %813 = vset.pattern.permute.xlu0 2
        %814 = vperm.xlu0 %813, %v382
        %v815 = vpop.permute.xlu0 %814
        %817 = vset.pattern.permute.xlu0 2
        %818 = vperm.xlu0 %817, %v383
        %v819 = vpop.permute.xlu0 %818
        %821 = vset.pattern.permute.xlu0 2
        %822 = vperm.xlu0 %821, %v384
        %v823 = vpop.permute.xlu0 %822
        %825 = vset.pattern.permute.xlu0 2
        %826 = vperm.xlu0 %825, %v385
        %v827 = vpop.permute.xlu0 %826
        %829 = vset.pattern.permute.xlu0 2
        %830 = vperm.xlu0 %829, %v386
        %v831 = vpop.permute.xlu0 %830
        %833 = vset.pattern.permute.xlu0 2
        %834 = vperm.xlu0 %833, %v387
        %v835 = vpop.permute.xlu0 %834
        %837 = vset.pattern.permute.xlu0 2
        %838 = vperm.xlu0 %837, %v388
        %v839 = vpop.permute.xlu0 %838
        %841 = vset.pattern.permute.xlu0 2
        %842 = vperm.xlu0 %841, %v389
        %v843 = vpop.permute.xlu0 %842
        %845 = vset.pattern.permute.xlu0 2
        %846 = vperm.xlu0 %845, %v390
        %v847 = vpop.permute.xlu0 %846
        %849 = vset.pattern.permute.xlu0 2
        %850 = vperm.xlu0 %849, %v391
        %v851 = vpop.permute.xlu0 %850
        %853 = vset.pattern.permute.xlu0 2
        %854 = vperm.xlu0 %853, %v392
        %v855 = vpop.permute.xlu0 %854
        %857 = vset.pattern.permute.xlu0 2
        %858 = vperm.xlu0 %857, %v393
        %v859 = vpop.permute.xlu0 %858
        %861 = vset.pattern.permute.xlu0 2
        %862 = vperm.xlu0 %861, %v394
        %v863 = vpop.permute.xlu0 %862
        %865 = vset.pattern.permute.xlu0 2
        %866 = vperm.xlu0 %865, %v395
        %v867 = vpop.permute.xlu0 %866
        %v869 = vlaneseq
        %v870 = vshrl.u32 %v869, 7
        %v871 = vsub.s32 2, %v870
        %v872 = vrot.slane %v396, %v871
        %v873 = vmul.f32 %v787, %v872
        %v874 = vmul.f32 %v791, %v872
        %v875 = vmul.f32 %v795, %v872
        %v876 = vmul.f32 %v799, %v872
        %v877 = vmul.f32 %v803, %v872
        %v878 = vmul.f32 %v807, %v872
        %v879 = vmul.f32 %v811, %v872
        %v880 = vmul.f32 %v815, %v872
        %v881 = vmul.f32 %v819, %v872
        %v882 = vmul.f32 %v823, %v872
        %v883 = vmul.f32 %v827, %v872
        %v884 = vmul.f32 %v831, %v872
        %v885 = vmul.f32 %v835, %v872
        %v886 = vmul.f32 %v839, %v872
        %v887 = vmul.f32 %v843, %v872
        %v888 = vmul.f32 %v847, %v872
        %v889 = vmul.f32 %v851, %v872
        %v890 = vmul.f32 %v855, %v872
        %v891 = vmul.f32 %v859, %v872
        %v892 = vmul.f32 %v863, %v872
        %v893 = vmul.f32 %v867, %v872
        %v894 = vadd.f32 %v718, %v873
        %v895 = vadd.f32 %v719, %v874
        %v896 = vadd.f32 %v720, %v875
        %v897 = vadd.f32 %v721, %v876
        %v898 = vadd.f32 %v722, %v877
        %v899 = vadd.f32 %v723, %v878
        %v900 = vadd.f32 %v724, %v879
        %v901 = vadd.f32 %v725, %v880
        %v902 = vadd.f32 %v726, %v881
        %v903 = vadd.f32 %v727, %v882
        %v904 = vadd.f32 %v728, %v883
        %v905 = vadd.f32 %v729, %v884
        %v906 = vadd.f32 %v730, %v885
        %v907 = vadd.f32 %v731, %v886
        %v908 = vadd.f32 %v732, %v887
        %v909 = vadd.f32 %v733, %v888
        %v910 = vadd.f32 %v734, %v889
        %v911 = vadd.f32 %v735, %v890
        %v912 = vadd.f32 %v736, %v891
        %v913 = vadd.f32 %v737, %v892
        %v914 = vadd.f32 %v738, %v893
        %v915 = vlaneseq
        %v916 = vshrl.u32 %v915, 7
        %v917 = vsub.s32 2, %v916
        %v918 = vrot.slane %v397, %v917
        %v919 = vmul.f32 %v787, %v918
        %v920 = vmul.f32 %v791, %v918
        %v921 = vmul.f32 %v795, %v918
        %v922 = vmul.f32 %v799, %v918
        %v923 = vmul.f32 %v803, %v918
        %v924 = vmul.f32 %v807, %v918
        %v925 = vmul.f32 %v811, %v918
        %v926 = vmul.f32 %v815, %v918
        %v927 = vmul.f32 %v819, %v918
        %v928 = vmul.f32 %v823, %v918
        %v929 = vmul.f32 %v827, %v918
        %v930 = vmul.f32 %v831, %v918
        %v931 = vmul.f32 %v835, %v918
        %v932 = vmul.f32 %v839, %v918
        %v933 = vmul.f32 %v843, %v918
        %v934 = vmul.f32 %v847, %v918
        %v935 = vmul.f32 %v851, %v918
        %v936 = vmul.f32 %v855, %v918
        %v937 = vmul.f32 %v859, %v918
        %v938 = vmul.f32 %v863, %v918
        %v939 = vmul.f32 %v867, %v918
        %v940 = vadd.f32 %v764, %v919
        %v941 = vadd.f32 %v765, %v920
        %v942 = vadd.f32 %v766, %v921
        %v943 = vadd.f32 %v767, %v922
        %v944 = vadd.f32 %v768, %v923
        %v945 = vadd.f32 %v769, %v924
        %v946 = vadd.f32 %v770, %v925
        %v947 = vadd.f32 %v771, %v926
        %v948 = vadd.f32 %v772, %v927
        %v949 = vadd.f32 %v773, %v928
        %v950 = vadd.f32 %v774, %v929
        %v951 = vadd.f32 %v775, %v930
        %v952 = vadd.f32 %v776, %v931
        %v953 = vadd.f32 %v777, %v932
        %v954 = vadd.f32 %v778, %v933
        %v955 = vadd.f32 %v779, %v934
        %v956 = vadd.f32 %v780, %v935
        %v957 = vadd.f32 %v781, %v936
        %v958 = vadd.f32 %v782, %v937
        %v959 = vadd.f32 %v783, %v938
        %v960 = vadd.f32 %v784, %v939
        %961 = vset.pattern.permute.xlu0 3
        %962 = vperm.xlu0 %961, %v375
        %v963 = vpop.permute.xlu0 %962
        %965 = vset.pattern.permute.xlu0 3
        %966 = vperm.xlu0 %965, %v376
        %v967 = vpop.permute.xlu0 %966
        %969 = vset.pattern.permute.xlu0 3
        %970 = vperm.xlu0 %969, %v377
        %v971 = vpop.permute.xlu0 %970
        %973 = vset.pattern.permute.xlu0 3
        %974 = vperm.xlu0 %973, %v378
        %v975 = vpop.permute.xlu0 %974
        %977 = vset.pattern.permute.xlu0 3
        %978 = vperm.xlu0 %977, %v379
        %v979 = vpop.permute.xlu0 %978
        %981 = vset.pattern.permute.xlu0 3
        %982 = vperm.xlu0 %981, %v380
        %v983 = vpop.permute.xlu0 %982
        %985 = vset.pattern.permute.xlu0 3
        %986 = vperm.xlu0 %985, %v381
        %v987 = vpop.permute.xlu0 %986
        %989 = vset.pattern.permute.xlu0 3
        %990 = vperm.xlu0 %989, %v382
        %v991 = vpop.permute.xlu0 %990
        %993 = vset.pattern.permute.xlu0 3
        %994 = vperm.xlu0 %993, %v383
        %v995 = vpop.permute.xlu0 %994
        %997 = vset.pattern.permute.xlu0 3
        %998 = vperm.xlu0 %997, %v384
        %v999 = vpop.permute.xlu0 %998
        %1001 = vset.pattern.permute.xlu0 3
        %1002 = vperm.xlu0 %1001, %v385
        %v1003 = vpop.permute.xlu0 %1002
        %1005 = vset.pattern.permute.xlu0 3
        %1006 = vperm.xlu0 %1005, %v386
        %v1007 = vpop.permute.xlu0 %1006
        %1009 = vset.pattern.permute.xlu0 3
        %1010 = vperm.xlu0 %1009, %v387
        %v1011 = vpop.permute.xlu0 %1010
        %1013 = vset.pattern.permute.xlu0 3
        %1014 = vperm.xlu0 %1013, %v388
        %v1015 = vpop.permute.xlu0 %1014
        %1017 = vset.pattern.permute.xlu0 3
        %1018 = vperm.xlu0 %1017, %v389
        %v1019 = vpop.permute.xlu0 %1018
        %1021 = vset.pattern.permute.xlu0 3
        %1022 = vperm.xlu0 %1021, %v390
        %v1023 = vpop.permute.xlu0 %1022
        %1025 = vset.pattern.permute.xlu0 3
        %1026 = vperm.xlu0 %1025, %v391
        %v1027 = vpop.permute.xlu0 %1026
        %1029 = vset.pattern.permute.xlu0 3
        %1030 = vperm.xlu0 %1029, %v392
        %v1031 = vpop.permute.xlu0 %1030
        %1033 = vset.pattern.permute.xlu0 3
        %1034 = vperm.xlu0 %1033, %v393
        %v1035 = vpop.permute.xlu0 %1034
        %1037 = vset.pattern.permute.xlu0 3
        %1038 = vperm.xlu0 %1037, %v394
        %v1039 = vpop.permute.xlu0 %1038
        %1041 = vset.pattern.permute.xlu0 3
        %1042 = vperm.xlu0 %1041, %v395
        %v1043 = vpop.permute.xlu0 %1042
        %v1045 = vlaneseq
        %v1046 = vshrl.u32 %v1045, 7
        %v1047 = vsub.s32 3, %v1046
        %v1048 = vrot.slane %v396, %v1047
        %v1049 = vmul.f32 %v963, %v1048
        %v1050 = vmul.f32 %v967, %v1048
        %v1051 = vmul.f32 %v971, %v1048
        %v1052 = vmul.f32 %v975, %v1048
        %v1053 = vmul.f32 %v979, %v1048
        %v1054 = vmul.f32 %v983, %v1048
        %v1055 = vmul.f32 %v987, %v1048
        %v1056 = vmul.f32 %v991, %v1048
        %v1057 = vmul.f32 %v995, %v1048
        %v1058 = vmul.f32 %v999, %v1048
        %v1059 = vmul.f32 %v1003, %v1048
        %v1060 = vmul.f32 %v1007, %v1048
        %v1061 = vmul.f32 %v1011, %v1048
        %v1062 = vmul.f32 %v1015, %v1048
        %v1063 = vmul.f32 %v1019, %v1048
        %v1064 = vmul.f32 %v1023, %v1048
        %v1065 = vmul.f32 %v1027, %v1048
        %v1066 = vmul.f32 %v1031, %v1048
        %v1067 = vmul.f32 %v1035, %v1048
        %v1068 = vmul.f32 %v1039, %v1048
        %v1069 = vmul.f32 %v1043, %v1048
        %v1070 = vadd.f32 %v894, %v1049
        %v1071 = vadd.f32 %v895, %v1050
        %v1072 = vadd.f32 %v896, %v1051
        %v1073 = vadd.f32 %v897, %v1052
        %v1074 = vadd.f32 %v898, %v1053
        %v1075 = vadd.f32 %v899, %v1054
        %v1076 = vadd.f32 %v900, %v1055
        %v1077 = vadd.f32 %v901, %v1056
        %v1078 = vadd.f32 %v902, %v1057
        %v1079 = vadd.f32 %v903, %v1058
        %v1080 = vadd.f32 %v904, %v1059
        %v1081 = vadd.f32 %v905, %v1060
        %v1082 = vadd.f32 %v906, %v1061
        %v1083 = vadd.f32 %v907, %v1062
        %v1084 = vadd.f32 %v908, %v1063
        %v1085 = vadd.f32 %v909, %v1064
        %v1086 = vadd.f32 %v910, %v1065
        %v1087 = vadd.f32 %v911, %v1066
        %v1088 = vadd.f32 %v912, %v1067
        %v1089 = vadd.f32 %v913, %v1068
        %v1090 = vadd.f32 %v914, %v1069
        %v1091 = vlaneseq
        %v1092 = vshrl.u32 %v1091, 7
        %v1093 = vsub.s32 3, %v1092
        %v1094 = vrot.slane %v397, %v1093
        %v1095 = vmul.f32 %v963, %v1094
        %v1096 = vmul.f32 %v967, %v1094
        %v1097 = vmul.f32 %v971, %v1094
        %v1098 = vmul.f32 %v975, %v1094
        %v1099 = vmul.f32 %v979, %v1094
        %v1100 = vmul.f32 %v983, %v1094
        %v1101 = vmul.f32 %v987, %v1094
        %v1102 = vmul.f32 %v991, %v1094
        %v1103 = vmul.f32 %v995, %v1094
        %v1104 = vmul.f32 %v999, %v1094
        %v1105 = vmul.f32 %v1003, %v1094
        %v1106 = vmul.f32 %v1007, %v1094
        %v1107 = vmul.f32 %v1011, %v1094
        %v1108 = vmul.f32 %v1015, %v1094
        %v1109 = vmul.f32 %v1019, %v1094
        %v1110 = vmul.f32 %v1023, %v1094
        %v1111 = vmul.f32 %v1027, %v1094
        %v1112 = vmul.f32 %v1031, %v1094
        %v1113 = vmul.f32 %v1035, %v1094
        %v1114 = vmul.f32 %v1039, %v1094
        %v1115 = vmul.f32 %v1043, %v1094
        %v1116 = vadd.f32 %v940, %v1095
        %v1117 = vadd.f32 %v941, %v1096
        %v1118 = vadd.f32 %v942, %v1097
        %v1119 = vadd.f32 %v943, %v1098
        %v1120 = vadd.f32 %v944, %v1099
        %v1121 = vadd.f32 %v945, %v1100
        %v1122 = vadd.f32 %v946, %v1101
        %v1123 = vadd.f32 %v947, %v1102
        %v1124 = vadd.f32 %v948, %v1103
        %v1125 = vadd.f32 %v949, %v1104
        %v1126 = vadd.f32 %v950, %v1105
        %v1127 = vadd.f32 %v951, %v1106
        %v1128 = vadd.f32 %v952, %v1107
        %v1129 = vadd.f32 %v953, %v1108
        %v1130 = vadd.f32 %v954, %v1109
        %v1131 = vadd.f32 %v955, %v1110
        %v1132 = vadd.f32 %v956, %v1111
        %v1133 = vadd.f32 %v957, %v1112
        %v1134 = vadd.f32 %v958, %v1113
        %v1135 = vadd.f32 %v959, %v1114
        %v1136 = vadd.f32 %v960, %v1115
        %v1137 = vxor.u32 %v1070, 2147483648
        %v1138 = vxor.u32 %v1071, 2147483648
        %v1139 = vxor.u32 %v1072, 2147483648
        %v1140 = vxor.u32 %v1073, 2147483648
        %v1141 = vxor.u32 %v1074, 2147483648
        %v1142 = vxor.u32 %v1075, 2147483648
        %v1143 = vxor.u32 %v1076, 2147483648
        %v1144 = vxor.u32 %v1077, 2147483648
        %v1145 = vxor.u32 %v1078, 2147483648
        %v1146 = vxor.u32 %v1079, 2147483648
        %v1147 = vxor.u32 %v1080, 2147483648
        %v1148 = vxor.u32 %v1081, 2147483648
        %v1149 = vxor.u32 %v1082, 2147483648
        %v1150 = vxor.u32 %v1083, 2147483648
        %v1151 = vxor.u32 %v1084, 2147483648
        %v1152 = vxor.u32 %v1085, 2147483648
        %v1153 = vxor.u32 %v1086, 2147483648
        %v1154 = vxor.u32 %v1087, 2147483648
        %v1155 = vxor.u32 %v1088, 2147483648
        %v1156 = vxor.u32 %v1089, 2147483648
        %v1157 = vxor.u32 %v1090, 2147483648
        %v1158 = vmul.f32 %v1137, 1.442695
        %v1159 = vpow.pop %v1158
        %v1160 = vmul.f32 %v1138, 1.442695
        %v1161 = vpow.pop %v1160
        %v1162 = vmul.f32 %v1139, 1.442695
        %v1163 = vpow.pop %v1162
        %v1164 = vmul.f32 %v1140, 1.442695
        %v1165 = vpow.pop %v1164
        %v1166 = vmul.f32 %v1141, 1.442695
        %v1167 = vpow.pop %v1166
        %v1168 = vmul.f32 %v1142, 1.442695
        %v1169 = vpow.pop %v1168
        %v1170 = vmul.f32 %v1143, 1.442695
        %v1171 = vpow.pop %v1170
        %v1172 = vmul.f32 %v1144, 1.442695
        %v1173 = vpow.pop %v1172
        %v1174 = vmul.f32 %v1145, 1.442695
        %v1175 = vpow.pop %v1174
        %v1176 = vmul.f32 %v1146, 1.442695
        %v1177 = vpow.pop %v1176
        %v1178 = vmul.f32 %v1147, 1.442695
        %v1179 = vpow.pop %v1178
        %v1180 = vmul.f32 %v1148, 1.442695
        %v1181 = vpow.pop %v1180
        %v1182 = vmul.f32 %v1149, 1.442695
        %v1183 = vpow.pop %v1182
        %v1184 = vmul.f32 %v1150, 1.442695
        %v1185 = vpow.pop %v1184
        %v1186 = vmul.f32 %v1151, 1.442695
        %v1187 = vpow.pop %v1186
        %v1188 = vmul.f32 %v1152, 1.442695
        %v1189 = vpow.pop %v1188
        %v1190 = vmul.f32 %v1153, 1.442695
        %v1191 = vpow.pop %v1190
        %v1192 = vmul.f32 %v1154, 1.442695
        %v1193 = vpow.pop %v1192
        %v1194 = vmul.f32 %v1155, 1.442695
        %v1195 = vpow.pop %v1194
        %v1196 = vmul.f32 %v1156, 1.442695
        %v1197 = vpow.pop %v1196
        %v1198 = vmul.f32 %v1157, 1.442695
        %v1199 = vpow.pop %v1198
        %v1200 = vadd.f32 %v1159, 1.0
        %v1201 = vadd.f32 %v1161, 1.0
        %v1202 = vadd.f32 %v1163, 1.0
        %v1203 = vadd.f32 %v1165, 1.0
        %v1204 = vadd.f32 %v1167, 1.0
        %v1205 = vadd.f32 %v1169, 1.0
        %v1206 = vadd.f32 %v1171, 1.0
        %v1207 = vadd.f32 %v1173, 1.0
        %v1208 = vadd.f32 %v1175, 1.0
        %v1209 = vadd.f32 %v1177, 1.0
        %v1210 = vadd.f32 %v1179, 1.0
        %v1211 = vadd.f32 %v1181, 1.0
        %v1212 = vadd.f32 %v1183, 1.0
        %v1213 = vadd.f32 %v1185, 1.0
        %v1214 = vadd.f32 %v1187, 1.0
        %v1215 = vadd.f32 %v1189, 1.0
        %v1216 = vadd.f32 %v1191, 1.0
        %v1217 = vadd.f32 %v1193, 1.0
        %v1218 = vadd.f32 %v1195, 1.0
        %v1219 = vadd.f32 %v1197, 1.0
        %v1220 = vadd.f32 %v1199, 1.0
        %v1221 = vrcp.pop %v1200
        %v1222 = vmul.f32 1.0, %v1221
        %v1223 = vrcp.pop %v1201
        %v1224 = vmul.f32 1.0, %v1223
        %v1225 = vrcp.pop %v1202
        %v1226 = vmul.f32 1.0, %v1225
        %v1227 = vrcp.pop %v1203
        %v1228 = vmul.f32 1.0, %v1227
        %v1229 = vrcp.pop %v1204
        %v1230 = vmul.f32 1.0, %v1229
        %v1231 = vrcp.pop %v1205
        %v1232 = vmul.f32 1.0, %v1231
        %v1233 = vrcp.pop %v1206
        %v1234 = vmul.f32 1.0, %v1233
        %v1235 = vrcp.pop %v1207
        %v1236 = vmul.f32 1.0, %v1235
        %v1237 = vrcp.pop %v1208
        %v1238 = vmul.f32 1.0, %v1237
        %v1239 = vrcp.pop %v1209
        %v1240 = vmul.f32 1.0, %v1239
        %v1241 = vrcp.pop %v1210
        %v1242 = vmul.f32 1.0, %v1241
        %v1243 = vrcp.pop %v1211
        %v1244 = vmul.f32 1.0, %v1243
        %v1245 = vrcp.pop %v1212
        %v1246 = vmul.f32 1.0, %v1245
        %v1247 = vrcp.pop %v1213
        %v1248 = vmul.f32 1.0, %v1247
        %v1249 = vrcp.pop %v1214
        %v1250 = vmul.f32 1.0, %v1249
        %v1251 = vrcp.pop %v1215
        %v1252 = vmul.f32 1.0, %v1251
        %v1253 = vrcp.pop %v1216
        %v1254 = vmul.f32 1.0, %v1253
        %v1255 = vrcp.pop %v1217
        %v1256 = vmul.f32 1.0, %v1255
        %v1257 = vrcp.pop %v1218
        %v1258 = vmul.f32 1.0, %v1257
        %v1259 = vrcp.pop %v1219
        %v1260 = vmul.f32 1.0, %v1259
        %v1261 = vrcp.pop %v1220
        %v1262 = vmul.f32 1.0, %v1261
        %v1263 = vmul.f32 %v1070, %v1222
        %v1264 = vmul.f32 %v1071, %v1224
        %v1265 = vmul.f32 %v1072, %v1226
        %v1266 = vmul.f32 %v1073, %v1228
        %v1267 = vmul.f32 %v1074, %v1230
        %v1268 = vmul.f32 %v1075, %v1232
        %v1269 = vmul.f32 %v1076, %v1234
        %v1270 = vmul.f32 %v1077, %v1236
        %v1271 = vmul.f32 %v1078, %v1238
        %v1272 = vmul.f32 %v1079, %v1240
        %v1273 = vmul.f32 %v1080, %v1242
        %v1274 = vmul.f32 %v1081, %v1244
        %v1275 = vmul.f32 %v1082, %v1246
        %v1276 = vmul.f32 %v1083, %v1248
        %v1277 = vmul.f32 %v1084, %v1250
        %v1278 = vmul.f32 %v1085, %v1252
        %v1279 = vmul.f32 %v1086, %v1254
        %v1280 = vmul.f32 %v1087, %v1256
        %v1281 = vmul.f32 %v1088, %v1258
        %v1282 = vmul.f32 %v1089, %v1260
        %v1283 = vmul.f32 %v1090, %v1262
        %v1284 = vxor.u32 %v1116, 2147483648
        %v1285 = vxor.u32 %v1117, 2147483648
        %v1286 = vxor.u32 %v1118, 2147483648
        %v1287 = vxor.u32 %v1119, 2147483648
        %v1288 = vxor.u32 %v1120, 2147483648
        %v1289 = vxor.u32 %v1121, 2147483648
        %v1290 = vxor.u32 %v1122, 2147483648
        %v1291 = vxor.u32 %v1123, 2147483648
        %v1292 = vxor.u32 %v1124, 2147483648
        %v1293 = vxor.u32 %v1125, 2147483648
        %v1294 = vxor.u32 %v1126, 2147483648
        %v1295 = vxor.u32 %v1127, 2147483648
        %v1296 = vxor.u32 %v1128, 2147483648
        %v1297 = vxor.u32 %v1129, 2147483648
        %v1298 = vxor.u32 %v1130, 2147483648
        %v1299 = vxor.u32 %v1131, 2147483648
        %v1300 = vxor.u32 %v1132, 2147483648
        %v1301 = vxor.u32 %v1133, 2147483648
        %v1302 = vxor.u32 %v1134, 2147483648
        %v1303 = vxor.u32 %v1135, 2147483648
        %v1304 = vxor.u32 %v1136, 2147483648
        %v1305 = vmul.f32 %v1284, 1.442695
        %v1306 = vpow.pop %v1305
        %v1307 = vmul.f32 %v1285, 1.442695
        %v1308 = vpow.pop %v1307
        %v1309 = vmul.f32 %v1286, 1.442695
        %v1310 = vpow.pop %v1309
        %v1311 = vmul.f32 %v1287, 1.442695
        %v1312 = vpow.pop %v1311
        %v1313 = vmul.f32 %v1288, 1.442695
        %v1314 = vpow.pop %v1313
        %v1315 = vmul.f32 %v1289, 1.442695
        %v1316 = vpow.pop %v1315
        %v1317 = vmul.f32 %v1290, 1.442695
        %v1318 = vpow.pop %v1317
        %v1319 = vmul.f32 %v1291, 1.442695
        %v1320 = vpow.pop %v1319
        %v1321 = vmul.f32 %v1292, 1.442695
        %v1322 = vpow.pop %v1321
        %v1323 = vmul.f32 %v1293, 1.442695
        %v1324 = vpow.pop %v1323
        %v1325 = vmul.f32 %v1294, 1.442695
        %v1326 = vpow.pop %v1325
        %v1327 = vmul.f32 %v1295, 1.442695
        %v1328 = vpow.pop %v1327
        %v1329 = vmul.f32 %v1296, 1.442695
        %v1330 = vpow.pop %v1329
        %v1331 = vmul.f32 %v1297, 1.442695
        %v1332 = vpow.pop %v1331
        %v1333 = vmul.f32 %v1298, 1.442695
        %v1334 = vpow.pop %v1333
        %v1335 = vmul.f32 %v1299, 1.442695
        %v1336 = vpow.pop %v1335
        %v1337 = vmul.f32 %v1300, 1.442695
        %v1338 = vpow.pop %v1337
        %v1339 = vmul.f32 %v1301, 1.442695
        %v1340 = vpow.pop %v1339
        %v1341 = vmul.f32 %v1302, 1.442695
        %v1342 = vpow.pop %v1341
        %v1343 = vmul.f32 %v1303, 1.442695
        %v1344 = vpow.pop %v1343
        %v1345 = vmul.f32 %v1304, 1.442695
        %v1346 = vpow.pop %v1345
        %v1347 = vadd.f32 %v1306, 1.0
        %v1348 = vadd.f32 %v1308, 1.0
        %v1349 = vadd.f32 %v1310, 1.0
        %v1350 = vadd.f32 %v1312, 1.0
        %v1351 = vadd.f32 %v1314, 1.0
        %v1352 = vadd.f32 %v1316, 1.0
        %v1353 = vadd.f32 %v1318, 1.0
        %v1354 = vadd.f32 %v1320, 1.0
        %v1355 = vadd.f32 %v1322, 1.0
        %v1356 = vadd.f32 %v1324, 1.0
        %v1357 = vadd.f32 %v1326, 1.0
        %v1358 = vadd.f32 %v1328, 1.0
        %v1359 = vadd.f32 %v1330, 1.0
        %v1360 = vadd.f32 %v1332, 1.0
        %v1361 = vadd.f32 %v1334, 1.0
        %v1362 = vadd.f32 %v1336, 1.0
        %v1363 = vadd.f32 %v1338, 1.0
        %v1364 = vadd.f32 %v1340, 1.0
        %v1365 = vadd.f32 %v1342, 1.0
        %v1366 = vadd.f32 %v1344, 1.0
        %v1367 = vadd.f32 %v1346, 1.0
        %v1368 = vrcp.pop %v1347
        %v1369 = vmul.f32 1.0, %v1368
        %v1370 = vrcp.pop %v1348
        %v1371 = vmul.f32 1.0, %v1370
        %v1372 = vrcp.pop %v1349
        %v1373 = vmul.f32 1.0, %v1372
        %v1374 = vrcp.pop %v1350
        %v1375 = vmul.f32 1.0, %v1374
        %v1376 = vrcp.pop %v1351
        %v1377 = vmul.f32 1.0, %v1376
        %v1378 = vrcp.pop %v1352
        %v1379 = vmul.f32 1.0, %v1378
        %v1380 = vrcp.pop %v1353
        %v1381 = vmul.f32 1.0, %v1380
        %v1382 = vrcp.pop %v1354
        %v1383 = vmul.f32 1.0, %v1382
        %v1384 = vrcp.pop %v1355
        %v1385 = vmul.f32 1.0, %v1384
        %v1386 = vrcp.pop %v1356
        %v1387 = vmul.f32 1.0, %v1386
        %v1388 = vrcp.pop %v1357
        %v1389 = vmul.f32 1.0, %v1388
        %v1390 = vrcp.pop %v1358
        %v1391 = vmul.f32 1.0, %v1390
        %v1392 = vrcp.pop %v1359
        %v1393 = vmul.f32 1.0, %v1392
        %v1394 = vrcp.pop %v1360
        %v1395 = vmul.f32 1.0, %v1394
        %v1396 = vrcp.pop %v1361
        %v1397 = vmul.f32 1.0, %v1396
        %v1398 = vrcp.pop %v1362
        %v1399 = vmul.f32 1.0, %v1398
        %v1400 = vrcp.pop %v1363
        %v1401 = vmul.f32 1.0, %v1400
        %v1402 = vrcp.pop %v1364
        %v1403 = vmul.f32 1.0, %v1402
        %v1404 = vrcp.pop %v1365
        %v1405 = vmul.f32 1.0, %v1404
        %v1406 = vrcp.pop %v1366
        %v1407 = vmul.f32 1.0, %v1406
        %v1408 = vrcp.pop %v1367
        %v1409 = vmul.f32 1.0, %v1408
        %v1410 = vmul.f32 %v1116, %v1369
        %v1411 = vmul.f32 %v1117, %v1371
        %v1412 = vmul.f32 %v1118, %v1373
        %v1413 = vmul.f32 %v1119, %v1375
        %v1414 = vmul.f32 %v1120, %v1377
        %v1415 = vmul.f32 %v1121, %v1379
        %v1416 = vmul.f32 %v1122, %v1381
        %v1417 = vmul.f32 %v1123, %v1383
        %v1418 = vmul.f32 %v1124, %v1385
        %v1419 = vmul.f32 %v1125, %v1387
        %v1420 = vmul.f32 %v1126, %v1389
        %v1421 = vmul.f32 %v1127, %v1391
        %v1422 = vmul.f32 %v1128, %v1393
        %v1423 = vmul.f32 %v1129, %v1395
        %v1424 = vmul.f32 %v1130, %v1397
        %v1425 = vmul.f32 %v1131, %v1399
        %v1426 = vmul.f32 %v1132, %v1401
        %v1427 = vmul.f32 %v1133, %v1403
        %v1428 = vmul.f32 %v1134, %v1405
        %v1429 = vmul.f32 %v1135, %v1407
        %v1430 = vmul.f32 %v1136, %v1409
        %v1431 = vlaneseq
        %v1432 = vshrl.u32 %v1431, 7
        %v1433 = vadd.s32 %v1432, 8
        %v1434 = vadd.s32 %v1432, 16
        %v1435 = vadd.s32 %v1432, 24
        %v1436 = vadd.s32 %v1432, 32
        %v1437 = vadd.s32 %v1432, 40
        %v1438 = vadd.s32 %v1432, 48
        %v1439 = vadd.s32 %v1432, 56
        %v1440 = vadd.s32 %v1432, 64
        %v1441 = vadd.s32 %v1432, 72
        %v1442 = vadd.s32 %v1432, 80
        %v1443 = vadd.s32 %v1432, 88
        %v1444 = vadd.s32 %v1432, 96
        %v1445 = vadd.s32 %v1432, 104
        %v1446 = vadd.s32 %v1432, 112
        %v1447 = vadd.s32 %v1432, 120
        %v1448 = vadd.s32 %v1432, 128
        %v1449 = vadd.s32 %v1432, 136
        %v1450 = vadd.s32 %v1432, 144
        %v1451 = vadd.s32 %v1432, 152
        %v1452 = vadd.s32 %v1432, 160
        %s1453 = ssub.s32 %s373, 17
        %v1454 = vstv %s1453
        %v1455 = vadd.s32 %v1432, %v1454
        %v1456 = vadd.s32 %v1433, %v1454
        %v1457 = vadd.s32 %v1434, %v1454
        %v1458 = vadd.s32 %v1435, %v1454
        %v1459 = vadd.s32 %v1436, %v1454
        %v1460 = vadd.s32 %v1437, %v1454
        %v1461 = vadd.s32 %v1438, %v1454
        %v1462 = vadd.s32 %v1439, %v1454
        %v1463 = vadd.s32 %v1440, %v1454
        %v1464 = vadd.s32 %v1441, %v1454
        %v1465 = vadd.s32 %v1442, %v1454
        %v1466 = vadd.s32 %v1443, %v1454
        %v1467 = vadd.s32 %v1444, %v1454
        %v1468 = vadd.s32 %v1445, %v1454
        %v1469 = vadd.s32 %v1446, %v1454
        %v1470 = vadd.s32 %v1447, %v1454
        %v1471 = vadd.s32 %v1448, %v1454
        %v1472 = vadd.s32 %v1449, %v1454
        %v1473 = vadd.s32 %v1450, %v1454
        %v1474 = vadd.s32 %v1451, %v1454
        %v1475 = vadd.s32 %v1452, %v1454
        %vm1476 = vcmp.ge.s32.totalorder %v1455, 0
        %vm1477 = vcmp.ge.s32.totalorder %v1456, 0
        %vm1478 = vcmp.ge.s32.totalorder %v1457, 0
        %vm1479 = vcmp.ge.s32.totalorder %v1458, 0
        %vm1480 = vcmp.ge.s32.totalorder %v1459, 0
        %vm1481 = vcmp.ge.s32.totalorder %v1460, 0
        %vm1482 = vcmp.ge.s32.totalorder %v1461, 0
        %vm1483 = vcmp.ge.s32.totalorder %v1462, 0
        %vm1484 = vcmp.ge.s32.totalorder %v1463, 0
        %vm1485 = vcmp.ge.s32.totalorder %v1464, 0
        %vm1486 = vcmp.ge.s32.totalorder %v1465, 0
        %vm1487 = vcmp.ge.s32.totalorder %v1466, 0
        %vm1488 = vcmp.ge.s32.totalorder %v1467, 0
        %vm1489 = vcmp.ge.s32.totalorder %v1468, 0
        %vm1490 = vcmp.ge.s32.totalorder %v1469, 0
        %vm1491 = vcmp.ge.s32.totalorder %v1470, 0
        %vm1492 = vcmp.ge.s32.totalorder %v1471, 0
        %vm1493 = vcmp.ge.s32.totalorder %v1472, 0
        %vm1494 = vcmp.ge.s32.totalorder %v1473, 0
        %vm1495 = vcmp.ge.s32.totalorder %v1474, 0
        %vm1496 = vcmp.ge.s32.totalorder %v1475, 0
        %vm1497 = vcmp.lt.s32.totalorder %v1455, 256
        %vm1498 = vcmp.lt.s32.totalorder %v1456, 256
        %vm1499 = vcmp.lt.s32.totalorder %v1457, 256
        %vm1500 = vcmp.lt.s32.totalorder %v1458, 256
        %vm1501 = vcmp.lt.s32.totalorder %v1459, 256
        %vm1502 = vcmp.lt.s32.totalorder %v1460, 256
        %vm1503 = vcmp.lt.s32.totalorder %v1461, 256
        %vm1504 = vcmp.lt.s32.totalorder %v1462, 256
        %vm1505 = vcmp.lt.s32.totalorder %v1463, 256
        %vm1506 = vcmp.lt.s32.totalorder %v1464, 256
        %vm1507 = vcmp.lt.s32.totalorder %v1465, 256
        %vm1508 = vcmp.lt.s32.totalorder %v1466, 256
        %vm1509 = vcmp.lt.s32.totalorder %v1467, 256
        %vm1510 = vcmp.lt.s32.totalorder %v1468, 256
        %vm1511 = vcmp.lt.s32.totalorder %v1469, 256
        %vm1512 = vcmp.lt.s32.totalorder %v1470, 256
        %vm1513 = vcmp.lt.s32.totalorder %v1471, 256
        %vm1514 = vcmp.lt.s32.totalorder %v1472, 256
        %vm1515 = vcmp.lt.s32.totalorder %v1473, 256
        %vm1516 = vcmp.lt.s32.totalorder %v1474, 256
        %vm1517 = vcmp.lt.s32.totalorder %v1475, 256
        %vm1518 = vmand %vm1476, %vm1497
        %vm1519 = vmand %vm1477, %vm1498
        %vm1520 = vmand %vm1478, %vm1499
        %vm1521 = vmand %vm1479, %vm1500
        %vm1522 = vmand %vm1480, %vm1501
        %vm1523 = vmand %vm1481, %vm1502
        %vm1524 = vmand %vm1482, %vm1503
        %vm1525 = vmand %vm1483, %vm1504
        %vm1526 = vmand %vm1484, %vm1505
        %vm1527 = vmand %vm1485, %vm1506
        %vm1528 = vmand %vm1486, %vm1507
        %vm1529 = vmand %vm1487, %vm1508
        %vm1530 = vmand %vm1488, %vm1509
        %vm1531 = vmand %vm1489, %vm1510
        %vm1532 = vmand %vm1490, %vm1511
        %vm1533 = vmand %vm1491, %vm1512
        %vm1534 = vmand %vm1492, %vm1513
        %vm1535 = vmand %vm1493, %vm1514
        %vm1536 = vmand %vm1494, %vm1515
        %vm1537 = vmand %vm1495, %vm1516
        %vm1538 = vmand %vm1496, %vm1517
        %v1539 = vsel %vm1518, 1, 0
        %v1540 = vsel %vm1519, 1, 0
        %v1541 = vsel %vm1520, 1, 0
        %v1542 = vsel %vm1521, 1, 0
        %v1543 = vsel %vm1522, 1, 0
        %v1544 = vsel %vm1523, 1, 0
        %v1545 = vsel %vm1524, 1, 0
        %v1546 = vsel %vm1525, 1, 0
        %v1547 = vsel %vm1526, 1, 0
        %v1548 = vsel %vm1527, 1, 0
        %v1549 = vsel %vm1528, 1, 0
        %v1550 = vsel %vm1529, 1, 0
        %v1551 = vsel %vm1530, 1, 0
        %v1552 = vsel %vm1531, 1, 0
        %v1553 = vsel %vm1532, 1, 0
        %v1554 = vsel %vm1533, 1, 0
        %v1555 = vsel %vm1534, 1, 0
        %v1556 = vsel %vm1535, 1, 0
        %v1557 = vsel %vm1536, 1, 0
        %v1558 = vsel %vm1537, 1, 0
        %v1559 = vsel %vm1538, 1, 0
        %vm1560 = vcmp.eq.s32.totalorder %v1539, 1
        %vm1561 = vcmp.eq.s32.totalorder %v1540, 1
        %vm1562 = vcmp.eq.s32.totalorder %v1541, 1
        %vm1563 = vcmp.eq.s32.totalorder %v1542, 1
        %vm1564 = vcmp.eq.s32.totalorder %v1543, 1
        %vm1565 = vcmp.eq.s32.totalorder %v1544, 1
        %vm1566 = vcmp.eq.s32.totalorder %v1545, 1
        %vm1567 = vcmp.eq.s32.totalorder %v1546, 1
        %vm1568 = vcmp.eq.s32.totalorder %v1547, 1
        %vm1569 = vcmp.eq.s32.totalorder %v1548, 1
        %vm1570 = vcmp.eq.s32.totalorder %v1549, 1
        %vm1571 = vcmp.eq.s32.totalorder %v1550, 1
        %vm1572 = vcmp.eq.s32.totalorder %v1551, 1
        %vm1573 = vcmp.eq.s32.totalorder %v1552, 1
        %vm1574 = vcmp.eq.s32.totalorder %v1553, 1
        %vm1575 = vcmp.eq.s32.totalorder %v1554, 1
        %vm1576 = vcmp.eq.s32.totalorder %v1555, 1
        %vm1577 = vcmp.eq.s32.totalorder %v1556, 1
        %vm1578 = vcmp.eq.s32.totalorder %v1557, 1
        %vm1579 = vcmp.eq.s32.totalorder %v1558, 1
        %vm1580 = vcmp.eq.s32.totalorder %v1559, 1
        %v1581 = vsel %vm1560, %v1263, 0.0
        %v1582 = vsel %vm1561, %v1264, 0.0
        %v1583 = vsel %vm1562, %v1265, 0.0
        %v1584 = vsel %vm1563, %v1266, 0.0
        %v1585 = vsel %vm1564, %v1267, 0.0
        %v1586 = vsel %vm1565, %v1268, 0.0
        %v1587 = vsel %vm1566, %v1269, 0.0
        %v1588 = vsel %vm1567, %v1270, 0.0
        %v1589 = vsel %vm1568, %v1271, 0.0
        %v1590 = vsel %vm1569, %v1272, 0.0
        %v1591 = vsel %vm1570, %v1273, 0.0
        %v1592 = vsel %vm1571, %v1274, 0.0
        %v1593 = vsel %vm1572, %v1275, 0.0
        %v1594 = vsel %vm1573, %v1276, 0.0
        %v1595 = vsel %vm1574, %v1277, 0.0
        %v1596 = vsel %vm1575, %v1278, 0.0
        %v1597 = vsel %vm1576, %v1279, 0.0
        %v1598 = vsel %vm1577, %v1280, 0.0
        %v1599 = vsel %vm1578, %v1281, 0.0
        %v1600 = vsel %vm1579, %v1282, 0.0
        %v1601 = vsel %vm1580, %v1283, 0.0
        %v1602 = vsel %vm1560, %v1410, 0.0
        %v1603 = vsel %vm1561, %v1411, 0.0
        %v1604 = vsel %vm1562, %v1412, 0.0
        %v1605 = vsel %vm1563, %v1413, 0.0
        %v1606 = vsel %vm1564, %v1414, 0.0
        %v1607 = vsel %vm1565, %v1415, 0.0
        %v1608 = vsel %vm1566, %v1416, 0.0
        %v1609 = vsel %vm1567, %v1417, 0.0
        %v1610 = vsel %vm1568, %v1418, 0.0
        %v1611 = vsel %vm1569, %v1419, 0.0
        %v1612 = vsel %vm1570, %v1420, 0.0
        %v1613 = vsel %vm1571, %v1421, 0.0
        %v1614 = vsel %vm1572, %v1422, 0.0
        %v1615 = vsel %vm1573, %v1423, 0.0
        %v1616 = vsel %vm1574, %v1424, 0.0
        %v1617 = vsel %vm1575, %v1425, 0.0
        %v1618 = vsel %vm1576, %v1426, 0.0
        %v1619 = vsel %vm1577, %v1427, 0.0
        %v1620 = vsel %vm1578, %v1428, 0.0
        %v1621 = vsel %vm1579, %v1429, 0.0
        %v1622 = vsel %vm1580, %v1430, 0.0
        %vm1623 = vcmp.lt.s32.totalorder %v1432, 0
        %v1624 = vsub.s32 0, %v1432
        %v1625 = vsel %vm1623, %v1624, %v1432
        %v1626 = vshrl.u32 %v1625, 4
        %v1627 = vand.u32 %v1625, 15
        %v1628 = vsub.s32 0, %v1627
        %v1629 = vsel %vm1623, %v1628, %v1627
        %vm1630 = vcmp.lt.s32.totalorder %v1433, 0
        %v1631 = vsub.s32 0, %v1433
        %v1632 = vsel %vm1630, %v1631, %v1433
        %v1633 = vshrl.u32 %v1632, 4
        %v1634 = vand.u32 %v1632, 15
        %v1635 = vsub.s32 0, %v1634
        %v1636 = vsel %vm1630, %v1635, %v1634
        %vm1637 = vcmp.lt.s32.totalorder %v1434, 0
        %v1638 = vsub.s32 0, %v1434
        %v1639 = vsel %vm1637, %v1638, %v1434
        %v1640 = vshrl.u32 %v1639, 4
        %v1641 = vand.u32 %v1639, 15
        %v1642 = vsub.s32 0, %v1641
        %v1643 = vsel %vm1637, %v1642, %v1641
        %vm1644 = vcmp.lt.s32.totalorder %v1435, 0
        %v1645 = vsub.s32 0, %v1435
        %v1646 = vsel %vm1644, %v1645, %v1435
        %v1647 = vshrl.u32 %v1646, 4
        %v1648 = vand.u32 %v1646, 15
        %v1649 = vsub.s32 0, %v1648
        %v1650 = vsel %vm1644, %v1649, %v1648
        %vm1651 = vcmp.lt.s32.totalorder %v1436, 0
        %v1652 = vsub.s32 0, %v1436
        %v1653 = vsel %vm1651, %v1652, %v1436
        %v1654 = vshrl.u32 %v1653, 4
        %v1655 = vand.u32 %v1653, 15
        %v1656 = vsub.s32 0, %v1655
        %v1657 = vsel %vm1651, %v1656, %v1655
        %vm1658 = vcmp.lt.s32.totalorder %v1437, 0
        %v1659 = vsub.s32 0, %v1437
        %v1660 = vsel %vm1658, %v1659, %v1437
        %v1661 = vshrl.u32 %v1660, 4
        %v1662 = vand.u32 %v1660, 15
        %v1663 = vsub.s32 0, %v1662
        %v1664 = vsel %vm1658, %v1663, %v1662
        %vm1665 = vcmp.lt.s32.totalorder %v1438, 0
        %v1666 = vsub.s32 0, %v1438
        %v1667 = vsel %vm1665, %v1666, %v1438
        %v1668 = vshrl.u32 %v1667, 4
        %v1669 = vand.u32 %v1667, 15
        %v1670 = vsub.s32 0, %v1669
        %v1671 = vsel %vm1665, %v1670, %v1669
        %vm1672 = vcmp.lt.s32.totalorder %v1439, 0
        %v1673 = vsub.s32 0, %v1439
        %v1674 = vsel %vm1672, %v1673, %v1439
        %v1675 = vshrl.u32 %v1674, 4
        %v1676 = vand.u32 %v1674, 15
        %v1677 = vsub.s32 0, %v1676
        %v1678 = vsel %vm1672, %v1677, %v1676
        %vm1679 = vcmp.lt.s32.totalorder %v1440, 0
        %v1680 = vsub.s32 0, %v1440
        %v1681 = vsel %vm1679, %v1680, %v1440
        %v1682 = vshrl.u32 %v1681, 4
        %v1683 = vand.u32 %v1681, 15
        %v1684 = vsub.s32 0, %v1683
        %v1685 = vsel %vm1679, %v1684, %v1683
        %vm1686 = vcmp.lt.s32.totalorder %v1441, 0
        %v1687 = vsub.s32 0, %v1441
        %v1688 = vsel %vm1686, %v1687, %v1441
        %v1689 = vshrl.u32 %v1688, 4
        %v1690 = vand.u32 %v1688, 15
        %v1691 = vsub.s32 0, %v1690
        %v1692 = vsel %vm1686, %v1691, %v1690
        %vm1693 = vcmp.lt.s32.totalorder %v1442, 0
        %v1694 = vsub.s32 0, %v1442
        %v1695 = vsel %vm1693, %v1694, %v1442
        %v1696 = vshrl.u32 %v1695, 4
        %v1697 = vand.u32 %v1695, 15
        %v1698 = vsub.s32 0, %v1697
        %v1699 = vsel %vm1693, %v1698, %v1697
        %vm1700 = vcmp.lt.s32.totalorder %v1443, 0
        %v1701 = vsub.s32 0, %v1443
        %v1702 = vsel %vm1700, %v1701, %v1443
        %v1703 = vshrl.u32 %v1702, 4
        %v1704 = vand.u32 %v1702, 15
        %v1705 = vsub.s32 0, %v1704
        %v1706 = vsel %vm1700, %v1705, %v1704
        %vm1707 = vcmp.lt.s32.totalorder %v1444, 0
        %v1708 = vsub.s32 0, %v1444
        %v1709 = vsel %vm1707, %v1708, %v1444
        %v1710 = vshrl.u32 %v1709, 4
        %v1711 = vand.u32 %v1709, 15
        %v1712 = vsub.s32 0, %v1711
        %v1713 = vsel %vm1707, %v1712, %v1711
        %vm1714 = vcmp.lt.s32.totalorder %v1445, 0
        %v1715 = vsub.s32 0, %v1445
        %v1716 = vsel %vm1714, %v1715, %v1445
        %v1717 = vshrl.u32 %v1716, 4
        %v1718 = vand.u32 %v1716, 15
        %v1719 = vsub.s32 0, %v1718
        %v1720 = vsel %vm1714, %v1719, %v1718
        %vm1721 = vcmp.lt.s32.totalorder %v1446, 0
        %v1722 = vsub.s32 0, %v1446
        %v1723 = vsel %vm1721, %v1722, %v1446
        %v1724 = vshrl.u32 %v1723, 4
        %v1725 = vand.u32 %v1723, 15
        %v1726 = vsub.s32 0, %v1725
        %v1727 = vsel %vm1721, %v1726, %v1725
        %vm1728 = vcmp.lt.s32.totalorder %v1447, 0
        %v1729 = vsub.s32 0, %v1447
        %v1730 = vsel %vm1728, %v1729, %v1447
        %v1731 = vshrl.u32 %v1730, 4
        %v1732 = vand.u32 %v1730, 15
        %v1733 = vsub.s32 0, %v1732
        %v1734 = vsel %vm1728, %v1733, %v1732
        %vm1735 = vcmp.ne.s32.totalorder %v1629, 0
        %vm1736 = vcmp.ne.s32.totalorder %v1636, 0
        %vm1737 = vcmp.ne.s32.totalorder %v1643, 0
        %vm1738 = vcmp.ne.s32.totalorder %v1650, 0
        %vm1739 = vcmp.ne.s32.totalorder %v1657, 0
        %vm1740 = vcmp.ne.s32.totalorder %v1664, 0
        %vm1741 = vcmp.ne.s32.totalorder %v1671, 0
        %vm1742 = vcmp.ne.s32.totalorder %v1678, 0
        %vm1743 = vcmp.ne.s32.totalorder %v1685, 0
        %vm1744 = vcmp.ne.s32.totalorder %v1692, 0
        %vm1745 = vcmp.ne.s32.totalorder %v1699, 0
        %vm1746 = vcmp.ne.s32.totalorder %v1706, 0
        %vm1747 = vcmp.ne.s32.totalorder %v1713, 0
        %vm1748 = vcmp.ne.s32.totalorder %v1720, 0
        %vm1749 = vcmp.ne.s32.totalorder %v1727, 0
        %vm1750 = vcmp.ne.s32.totalorder %v1734, 0
        %vm1751 = vcmp.lt.s32.totalorder %v1629, 0
        %vm1752 = vcmp.lt.s32.totalorder %v1636, 0
        %vm1753 = vcmp.lt.s32.totalorder %v1643, 0
        %vm1754 = vcmp.lt.s32.totalorder %v1650, 0
        %vm1755 = vcmp.lt.s32.totalorder %v1657, 0
        %vm1756 = vcmp.lt.s32.totalorder %v1664, 0
        %vm1757 = vcmp.lt.s32.totalorder %v1671, 0
        %vm1758 = vcmp.lt.s32.totalorder %v1678, 0
        %vm1759 = vcmp.lt.s32.totalorder %v1685, 0
        %vm1760 = vcmp.lt.s32.totalorder %v1692, 0
        %vm1761 = vcmp.lt.s32.totalorder %v1699, 0
        %vm1762 = vcmp.lt.s32.totalorder %v1706, 0
        %vm1763 = vcmp.lt.s32.totalorder %v1713, 0
        %vm1764 = vcmp.lt.s32.totalorder %v1720, 0
        %vm1765 = vcmp.lt.s32.totalorder %v1727, 0
        %vm1766 = vcmp.lt.s32.totalorder %v1734, 0
        %vm1767 = vmand %vm1751, %vm1735
        %vm1768 = vmand %vm1752, %vm1736
        %vm1769 = vmand %vm1753, %vm1737
        %vm1770 = vmand %vm1754, %vm1738
        %vm1771 = vmand %vm1755, %vm1739
        %vm1772 = vmand %vm1756, %vm1740
        %vm1773 = vmand %vm1757, %vm1741
        %vm1774 = vmand %vm1758, %vm1742
        %vm1775 = vmand %vm1759, %vm1743
        %vm1776 = vmand %vm1760, %vm1744
        %vm1777 = vmand %vm1761, %vm1745
        %vm1778 = vmand %vm1762, %vm1746
        %vm1779 = vmand %vm1763, %vm1747
        %vm1780 = vmand %vm1764, %vm1748
        %vm1781 = vmand %vm1765, %vm1749
        %vm1782 = vmand %vm1766, %vm1750
        %v1783 = vadd.s32 %v1629, 16
        %v1784 = vadd.s32 %v1636, 16
        %v1785 = vadd.s32 %v1643, 16
        %v1786 = vadd.s32 %v1650, 16
        %v1787 = vadd.s32 %v1657, 16
        %v1788 = vadd.s32 %v1664, 16
        %v1789 = vadd.s32 %v1671, 16
        %v1790 = vadd.s32 %v1678, 16
        %v1791 = vadd.s32 %v1685, 16
        %v1792 = vadd.s32 %v1692, 16
        %v1793 = vadd.s32 %v1699, 16
        %v1794 = vadd.s32 %v1706, 16
        %v1795 = vadd.s32 %v1713, 16
        %v1796 = vadd.s32 %v1720, 16
        %v1797 = vadd.s32 %v1727, 16
        %v1798 = vadd.s32 %v1734, 16
        %v1799 = vsel %vm1767, %v1783, %v1629
        %v1800 = vsel %vm1768, %v1784, %v1636
        %v1801 = vsel %vm1769, %v1785, %v1643
        %v1802 = vsel %vm1770, %v1786, %v1650
        %v1803 = vsel %vm1771, %v1787, %v1657
        %v1804 = vsel %vm1772, %v1788, %v1664
        %v1805 = vsel %vm1773, %v1789, %v1671
        %v1806 = vsel %vm1774, %v1790, %v1678
        %v1807 = vsel %vm1775, %v1791, %v1685
        %v1808 = vsel %vm1776, %v1792, %v1692
        %v1809 = vsel %vm1777, %v1793, %v1699
        %v1810 = vsel %vm1778, %v1794, %v1706
        %v1811 = vsel %vm1779, %v1795, %v1713
        %v1812 = vsel %vm1780, %v1796, %v1720
        %v1813 = vsel %vm1781, %v1797, %v1727
        %v1814 = vsel %vm1782, %v1798, %v1734
        %vm1815 = vcmp.gt.s32.totalorder %v1799, 0
        %vm1816 = vcmp.gt.s32.totalorder %v1800, 0
        %vm1817 = vcmp.gt.s32.totalorder %v1801, 0
        %vm1818 = vcmp.gt.s32.totalorder %v1802, 0
        %vm1819 = vcmp.gt.s32.totalorder %v1803, 0
        %vm1820 = vcmp.gt.s32.totalorder %v1804, 0
        %vm1821 = vcmp.gt.s32.totalorder %v1805, 0
        %vm1822 = vcmp.gt.s32.totalorder %v1806, 0
        %vm1823 = vcmp.gt.s32.totalorder %v1807, 0
        %vm1824 = vcmp.gt.s32.totalorder %v1808, 0
        %vm1825 = vcmp.gt.s32.totalorder %v1809, 0
        %vm1826 = vcmp.gt.s32.totalorder %v1810, 0
        %vm1827 = vcmp.gt.s32.totalorder %v1811, 0
        %vm1828 = vcmp.gt.s32.totalorder %v1812, 0
        %vm1829 = vcmp.gt.s32.totalorder %v1813, 0
        %vm1830 = vcmp.gt.s32.totalorder %v1814, 0
        %vm1831 = vcmp.lt.s32.totalorder %v1799, 15
        %vm1832 = vcmp.lt.s32.totalorder %v1800, 15
        %vm1833 = vcmp.lt.s32.totalorder %v1801, 15
        %vm1834 = vcmp.lt.s32.totalorder %v1802, 15
        %vm1835 = vcmp.lt.s32.totalorder %v1803, 15
        %vm1836 = vcmp.lt.s32.totalorder %v1804, 15
        %vm1837 = vcmp.lt.s32.totalorder %v1805, 15
        %vm1838 = vcmp.lt.s32.totalorder %v1806, 15
        %vm1839 = vcmp.lt.s32.totalorder %v1807, 15
        %vm1840 = vcmp.lt.s32.totalorder %v1808, 15
        %vm1841 = vcmp.lt.s32.totalorder %v1809, 15
        %vm1842 = vcmp.lt.s32.totalorder %v1810, 15
        %vm1843 = vcmp.lt.s32.totalorder %v1811, 15
        %vm1844 = vcmp.lt.s32.totalorder %v1812, 15
        %vm1845 = vcmp.lt.s32.totalorder %v1813, 15
        %vm1846 = vcmp.lt.s32.totalorder %v1814, 15
        %v1847 = vld [vmem:[%s5] sm:$0xff]
        %v1848 = vld [vmem:[%s5 + $0x8] sm:$0x1]
        %v1849 = vld [vmem:[%s6] sm:$0xff]
        %v1850 = vld [vmem:[%s6 + $0x8] sm:$0x1]
        %v1851 = vld [vmem:[%s7] sm:$0x1]
        %v1853 = vlaneseq
        %v1854 = vshrl.u32 %v1853, 7
        %v1855 = vsub.s32 0, %v1854
        %v1856 = vrot.slane %v1851, %v1855
        %v1858 = vld [vmem:[%s8] sm:$0x1]
        %v1860 = vlaneseq
        %v1861 = vshrl.u32 %v1860, 7
        %v1862 = vsub.s32 0, %v1861
        %v1863 = vrot.slane %v1858, %v1862
        %v1865 = vsel %vm1815, 1, 0
        %v1866 = vsel %vm1816, 1, 0
        %v1867 = vsel %vm1817, 1, 0
        %v1868 = vsel %vm1818, 1, 0
        %v1869 = vsel %vm1819, 1, 0
        %v1870 = vsel %vm1820, 1, 0
        %v1871 = vsel %vm1821, 1, 0
        %v1872 = vsel %vm1822, 1, 0
        %v1873 = vsel %vm1823, 1, 0
        %v1874 = vsel %vm1824, 1, 0
        %v1875 = vsel %vm1825, 1, 0
        %v1876 = vsel %vm1826, 1, 0
        %v1877 = vsel %vm1827, 1, 0
        %v1878 = vsel %vm1828, 1, 0
        %v1879 = vsel %vm1829, 1, 0
        %v1880 = vsel %vm1830, 1, 0
        %vm1881 = vcmp.eq.s32.totalorder %v1865, 1
        %vm1882 = vcmp.eq.s32.totalorder %v1866, 1
        %vm1883 = vcmp.eq.s32.totalorder %v1867, 1
        %vm1884 = vcmp.eq.s32.totalorder %v1868, 1
        %vm1885 = vcmp.eq.s32.totalorder %v1869, 1
        %vm1886 = vcmp.eq.s32.totalorder %v1870, 1
        %vm1887 = vcmp.eq.s32.totalorder %v1871, 1
        %vm1888 = vcmp.eq.s32.totalorder %v1872, 1
        %vm1889 = vcmp.eq.s32.totalorder %v1873, 1
        %vm1890 = vcmp.eq.s32.totalorder %v1874, 1
        %vm1891 = vcmp.eq.s32.totalorder %v1875, 1
        %vm1892 = vcmp.eq.s32.totalorder %v1876, 1
        %vm1893 = vcmp.eq.s32.totalorder %v1877, 1
        %vm1894 = vcmp.eq.s32.totalorder %v1878, 1
        %vm1895 = vcmp.eq.s32.totalorder %v1879, 1
        %vm1896 = vcmp.eq.s32.totalorder %v1880, 1
        %v1897 = vsel %vm1881, %v1581, 0.0
        %v1898 = vsel %vm1882, %v1582, 0.0
        %v1899 = vsel %vm1883, %v1583, 0.0
        %v1900 = vsel %vm1884, %v1584, 0.0
        %v1901 = vsel %vm1885, %v1585, 0.0
        %v1902 = vsel %vm1886, %v1586, 0.0
        %v1903 = vsel %vm1887, %v1587, 0.0
        %v1904 = vsel %vm1888, %v1588, 0.0
        %v1905 = vsel %vm1889, %v1589, 0.0
        %v1906 = vsel %vm1890, %v1590, 0.0
        %v1907 = vsel %vm1891, %v1591, 0.0
        %v1908 = vsel %vm1892, %v1592, 0.0
        %v1909 = vsel %vm1893, %v1593, 0.0
        %v1910 = vsel %vm1894, %v1594, 0.0
        %v1911 = vsel %vm1895, %v1595, 0.0
        %v1912 = vsel %vm1896, %v1596, 0.0
        %v1913 = vsel %vm1881, %v1602, 0.0
        %v1914 = vsel %vm1882, %v1603, 0.0
        %v1915 = vsel %vm1883, %v1604, 0.0
        %v1916 = vsel %vm1884, %v1605, 0.0
        %v1917 = vsel %vm1885, %v1606, 0.0
        %v1918 = vsel %vm1886, %v1607, 0.0
        %v1919 = vsel %vm1887, %v1608, 0.0
        %v1920 = vsel %vm1888, %v1609, 0.0
        %v1921 = vsel %vm1889, %v1610, 0.0
        %v1922 = vsel %vm1890, %v1611, 0.0
        %v1923 = vsel %vm1891, %v1612, 0.0
        %v1924 = vsel %vm1892, %v1613, 0.0
        %v1925 = vsel %vm1893, %v1614, 0.0
        %v1926 = vsel %vm1894, %v1615, 0.0
        %v1927 = vsel %vm1895, %v1616, 0.0
        %v1928 = vsel %vm1896, %v1617, 0.0
        %v1929 = vlaneseq
        %v1930 = vshrl.u32 %v1929, 7
        %v1931 = vsub.s32 0, %v1930
        %v1932 = vrot.slane %v1847, %v1931
        %v1933 = vmul.f32 %v1897, %v1932
        %v1934 = vmul.f32 %v1898, %v1932
        %v1935 = vmul.f32 %v1899, %v1932
        %v1936 = vmul.f32 %v1900, %v1932
        %v1937 = vmul.f32 %v1901, %v1932
        %v1938 = vmul.f32 %v1902, %v1932
        %v1939 = vmul.f32 %v1903, %v1932
        %v1940 = vmul.f32 %v1904, %v1932
        %v1941 = vmul.f32 %v1905, %v1932
        %v1942 = vmul.f32 %v1906, %v1932
        %v1943 = vmul.f32 %v1907, %v1932
        %v1944 = vmul.f32 %v1908, %v1932
        %v1945 = vmul.f32 %v1909, %v1932
        %v1946 = vmul.f32 %v1910, %v1932
        %v1947 = vmul.f32 %v1911, %v1932
        %v1948 = vmul.f32 %v1912, %v1932
        %v1949 = vadd.f32 %v1856, %v1933
        %v1950 = vadd.f32 %v1856, %v1934
        %v1951 = vadd.f32 %v1856, %v1935
        %v1952 = vadd.f32 %v1856, %v1936
        %v1953 = vadd.f32 %v1856, %v1937
        %v1954 = vadd.f32 %v1856, %v1938
        %v1955 = vadd.f32 %v1856, %v1939
        %v1956 = vadd.f32 %v1856, %v1940
        %v1957 = vadd.f32 %v1856, %v1941
        %v1958 = vadd.f32 %v1856, %v1942
        %v1959 = vadd.f32 %v1856, %v1943
        %v1960 = vadd.f32 %v1856, %v1944
        %v1961 = vadd.f32 %v1856, %v1945
        %v1962 = vadd.f32 %v1856, %v1946
        %v1963 = vadd.f32 %v1856, %v1947
        %v1964 = vadd.f32 %v1856, %v1948
        %v1965 = vlaneseq
        %v1966 = vshrl.u32 %v1965, 7
        %v1967 = vsub.s32 0, %v1966
        %v1968 = vrot.slane %v1849, %v1967
        %v1969 = vmul.f32 %v1913, %v1968
        %v1970 = vmul.f32 %v1914, %v1968
        %v1971 = vmul.f32 %v1915, %v1968
        %v1972 = vmul.f32 %v1916, %v1968
        %v1973 = vmul.f32 %v1917, %v1968
        %v1974 = vmul.f32 %v1918, %v1968
        %v1975 = vmul.f32 %v1919, %v1968
        %v1976 = vmul.f32 %v1920, %v1968
        %v1977 = vmul.f32 %v1921, %v1968
        %v1978 = vmul.f32 %v1922, %v1968
        %v1979 = vmul.f32 %v1923, %v1968
        %v1980 = vmul.f32 %v1924, %v1968
        %v1981 = vmul.f32 %v1925, %v1968
        %v1982 = vmul.f32 %v1926, %v1968
        %v1983 = vmul.f32 %v1927, %v1968
        %v1984 = vmul.f32 %v1928, %v1968
        %v1985 = vadd.f32 %v1863, %v1969
        %v1986 = vadd.f32 %v1863, %v1970
        %v1987 = vadd.f32 %v1863, %v1971
        %v1988 = vadd.f32 %v1863, %v1972
        %v1989 = vadd.f32 %v1863, %v1973
        %v1990 = vadd.f32 %v1863, %v1974
        %v1991 = vadd.f32 %v1863, %v1975
        %v1992 = vadd.f32 %v1863, %v1976
        %v1993 = vadd.f32 %v1863, %v1977
        %v1994 = vadd.f32 %v1863, %v1978
        %v1995 = vadd.f32 %v1863, %v1979
        %v1996 = vadd.f32 %v1863, %v1980
        %v1997 = vadd.f32 %v1863, %v1981
        %v1998 = vadd.f32 %v1863, %v1982
        %v1999 = vadd.f32 %v1863, %v1983
        %v2000 = vadd.f32 %v1863, %v1984
        %v2001 = vlaneseq
        %v2002 = vshrl.u32 %v2001, 7
        %v2003 = vsub.s32 1, %v2002
        %v2004 = vrot.slane %v1847, %v2003
        %v2005 = vmul.f32 %v1581, %v2004
        %v2006 = vmul.f32 %v1582, %v2004
        %v2007 = vmul.f32 %v1583, %v2004
        %v2008 = vmul.f32 %v1584, %v2004
        %v2009 = vmul.f32 %v1585, %v2004
        %v2010 = vmul.f32 %v1586, %v2004
        %v2011 = vmul.f32 %v1587, %v2004
        %v2012 = vmul.f32 %v1588, %v2004
        %v2013 = vmul.f32 %v1589, %v2004
        %v2014 = vmul.f32 %v1590, %v2004
        %v2015 = vmul.f32 %v1591, %v2004
        %v2016 = vmul.f32 %v1592, %v2004
        %v2017 = vmul.f32 %v1593, %v2004
        %v2018 = vmul.f32 %v1594, %v2004
        %v2019 = vmul.f32 %v1595, %v2004
        %v2020 = vmul.f32 %v1596, %v2004
        %v2021 = vmul.f32 %v1597, %v2004
        %vm2039 = vcmask 1046528
        %v2040 = vrot.slane %v2005, 1
        %v2041 = vrot.slane %v2006, 1
        %v2042 = vsel %vm2039, %v2040, %v2041
        %v2043 = vrot.slane %v2007, 1
        %v2044 = vsel %vm2039, %v2041, %v2043
        %v2045 = vrot.slane %v2008, 1
        %v2046 = vsel %vm2039, %v2043, %v2045
        %v2047 = vrot.slane %v2009, 1
        %v2048 = vsel %vm2039, %v2045, %v2047
        %v2049 = vrot.slane %v2010, 1
        %v2050 = vsel %vm2039, %v2047, %v2049
        %v2051 = vrot.slane %v2011, 1
        %v2052 = vsel %vm2039, %v2049, %v2051
        %v2053 = vrot.slane %v2012, 1
        %v2054 = vsel %vm2039, %v2051, %v2053
        %v2055 = vrot.slane %v2013, 1
        %v2056 = vsel %vm2039, %v2053, %v2055
        %v2057 = vrot.slane %v2014, 1
        %v2058 = vsel %vm2039, %v2055, %v2057
        %v2059 = vrot.slane %v2015, 1
        %v2060 = vsel %vm2039, %v2057, %v2059
        %v2061 = vrot.slane %v2016, 1
        %v2062 = vsel %vm2039, %v2059, %v2061
        %v2063 = vrot.slane %v2017, 1
        %v2064 = vsel %vm2039, %v2061, %v2063
        %v2065 = vrot.slane %v2018, 1
        %v2066 = vsel %vm2039, %v2063, %v2065
        %v2067 = vrot.slane %v2019, 1
        %v2068 = vsel %vm2039, %v2065, %v2067
        %v2069 = vrot.slane %v2020, 1
        %v2070 = vsel %vm2039, %v2067, %v2069
        %v2071 = vrot.slane %v2021, 1
        %v2072 = vsel %vm2039, %v2069, %v2071
        %v2089 = vadd.f32 %v1949, %v2042
        %v2090 = vadd.f32 %v1950, %v2044
        %v2091 = vadd.f32 %v1951, %v2046
        %v2092 = vadd.f32 %v1952, %v2048
        %v2093 = vadd.f32 %v1953, %v2050
        %v2094 = vadd.f32 %v1954, %v2052
        %v2095 = vadd.f32 %v1955, %v2054
        %v2096 = vadd.f32 %v1956, %v2056
        %v2097 = vadd.f32 %v1957, %v2058
        %v2098 = vadd.f32 %v1958, %v2060
        %v2099 = vadd.f32 %v1959, %v2062
        %v2100 = vadd.f32 %v1960, %v2064
        %v2101 = vadd.f32 %v1961, %v2066
        %v2102 = vadd.f32 %v1962, %v2068
        %v2103 = vadd.f32 %v1963, %v2070
        %v2104 = vadd.f32 %v1964, %v2072
        %v2105 = vlaneseq
        %v2106 = vshrl.u32 %v2105, 7
        %v2107 = vsub.s32 1, %v2106
        %v2108 = vrot.slane %v1849, %v2107
        %v2109 = vmul.f32 %v1602, %v2108
        %v2110 = vmul.f32 %v1603, %v2108
        %v2111 = vmul.f32 %v1604, %v2108
        %v2112 = vmul.f32 %v1605, %v2108
        %v2113 = vmul.f32 %v1606, %v2108
        %v2114 = vmul.f32 %v1607, %v2108
        %v2115 = vmul.f32 %v1608, %v2108
        %v2116 = vmul.f32 %v1609, %v2108
        %v2117 = vmul.f32 %v1610, %v2108
        %v2118 = vmul.f32 %v1611, %v2108
        %v2119 = vmul.f32 %v1612, %v2108
        %v2120 = vmul.f32 %v1613, %v2108
        %v2121 = vmul.f32 %v1614, %v2108
        %v2122 = vmul.f32 %v1615, %v2108
        %v2123 = vmul.f32 %v1616, %v2108
        %v2124 = vmul.f32 %v1617, %v2108
        %v2125 = vmul.f32 %v1618, %v2108
        %v2143 = vrot.slane %v2109, 1
        %v2144 = vrot.slane %v2110, 1
        %v2145 = vsel %vm2039, %v2143, %v2144
        %v2146 = vrot.slane %v2111, 1
        %v2147 = vsel %vm2039, %v2144, %v2146
        %v2148 = vrot.slane %v2112, 1
        %v2149 = vsel %vm2039, %v2146, %v2148
        %v2150 = vrot.slane %v2113, 1
        %v2151 = vsel %vm2039, %v2148, %v2150
        %v2152 = vrot.slane %v2114, 1
        %v2153 = vsel %vm2039, %v2150, %v2152
        %v2154 = vrot.slane %v2115, 1
        %v2155 = vsel %vm2039, %v2152, %v2154
        %v2156 = vrot.slane %v2116, 1
        %v2157 = vsel %vm2039, %v2154, %v2156
        %v2158 = vrot.slane %v2117, 1
        %v2159 = vsel %vm2039, %v2156, %v2158
        %v2160 = vrot.slane %v2118, 1
        %v2161 = vsel %vm2039, %v2158, %v2160
        %v2162 = vrot.slane %v2119, 1
        %v2163 = vsel %vm2039, %v2160, %v2162
        %v2164 = vrot.slane %v2120, 1
        %v2165 = vsel %vm2039, %v2162, %v2164
        %v2166 = vrot.slane %v2121, 1
        %v2167 = vsel %vm2039, %v2164, %v2166
        %v2168 = vrot.slane %v2122, 1
        %v2169 = vsel %vm2039, %v2166, %v2168
        %v2170 = vrot.slane %v2123, 1
        %v2171 = vsel %vm2039, %v2168, %v2170
        %v2172 = vrot.slane %v2124, 1
        %v2173 = vsel %vm2039, %v2170, %v2172
        %v2174 = vrot.slane %v2125, 1
        %v2175 = vsel %vm2039, %v2172, %v2174
        %v2192 = vadd.f32 %v1985, %v2145
        %v2193 = vadd.f32 %v1986, %v2147
        %v2194 = vadd.f32 %v1987, %v2149
        %v2195 = vadd.f32 %v1988, %v2151
        %v2196 = vadd.f32 %v1989, %v2153
        %v2197 = vadd.f32 %v1990, %v2155
        %v2198 = vadd.f32 %v1991, %v2157
        %v2199 = vadd.f32 %v1992, %v2159
        %v2200 = vadd.f32 %v1993, %v2161
        %v2201 = vadd.f32 %v1994, %v2163
        %v2202 = vadd.f32 %v1995, %v2165
        %v2203 = vadd.f32 %v1996, %v2167
        %v2204 = vadd.f32 %v1997, %v2169
        %v2205 = vadd.f32 %v1998, %v2171
        %v2206 = vadd.f32 %v1999, %v2173
        %v2207 = vadd.f32 %v2000, %v2175
        %v2208 = vsel %vm1831, 1, 0
        %v2209 = vsel %vm1832, 1, 0
        %v2210 = vsel %vm1833, 1, 0
        %v2211 = vsel %vm1834, 1, 0
        %v2212 = vsel %vm1835, 1, 0
        %v2213 = vsel %vm1836, 1, 0
        %v2214 = vsel %vm1837, 1, 0
        %v2215 = vsel %vm1838, 1, 0
        %v2216 = vsel %vm1839, 1, 0
        %v2217 = vsel %vm1840, 1, 0
        %v2218 = vsel %vm1841, 1, 0
        %v2219 = vsel %vm1842, 1, 0
        %v2220 = vsel %vm1843, 1, 0
        %v2221 = vsel %vm1844, 1, 0
        %v2222 = vsel %vm1845, 1, 0
        %v2223 = vsel %vm1846, 1, 0
        %vm2224 = vcmp.eq.s32.totalorder %v2208, 1
        %vm2225 = vcmp.eq.s32.totalorder %v2209, 1
        %vm2226 = vcmp.eq.s32.totalorder %v2210, 1
        %vm2227 = vcmp.eq.s32.totalorder %v2211, 1
        %vm2228 = vcmp.eq.s32.totalorder %v2212, 1
        %vm2229 = vcmp.eq.s32.totalorder %v2213, 1
        %vm2230 = vcmp.eq.s32.totalorder %v2214, 1
        %vm2231 = vcmp.eq.s32.totalorder %v2215, 1
        %vm2232 = vcmp.eq.s32.totalorder %v2216, 1
        %vm2233 = vcmp.eq.s32.totalorder %v2217, 1
        %vm2234 = vcmp.eq.s32.totalorder %v2218, 1
        %vm2235 = vcmp.eq.s32.totalorder %v2219, 1
        %vm2236 = vcmp.eq.s32.totalorder %v2220, 1
        %vm2237 = vcmp.eq.s32.totalorder %v2221, 1
        %vm2238 = vcmp.eq.s32.totalorder %v2222, 1
        %vm2239 = vcmp.eq.s32.totalorder %v2223, 1
        %vm2257 = vcmask 1045504
        %v2258 = vrot.slane %v1581, 2
        %v2259 = vrot.slane %v1582, 2
        %v2260 = vsel %vm2257, %v2258, %v2259
        %v2261 = vrot.slane %v1583, 2
        %v2262 = vsel %vm2257, %v2259, %v2261
        %v2263 = vrot.slane %v1584, 2
        %v2264 = vsel %vm2257, %v2261, %v2263
        %v2265 = vrot.slane %v1585, 2
        %v2266 = vsel %vm2257, %v2263, %v2265
        %v2267 = vrot.slane %v1586, 2
        %v2268 = vsel %vm2257, %v2265, %v2267
        %v2269 = vrot.slane %v1587, 2
        %v2270 = vsel %vm2257, %v2267, %v2269
        %v2271 = vrot.slane %v1588, 2
        %v2272 = vsel %vm2257, %v2269, %v2271
        %v2273 = vrot.slane %v1589, 2
        %v2274 = vsel %vm2257, %v2271, %v2273
        %v2275 = vrot.slane %v1590, 2
        %v2276 = vsel %vm2257, %v2273, %v2275
        %v2277 = vrot.slane %v1591, 2
        %v2278 = vsel %vm2257, %v2275, %v2277
        %v2279 = vrot.slane %v1592, 2
        %v2280 = vsel %vm2257, %v2277, %v2279
        %v2281 = vrot.slane %v1593, 2
        %v2282 = vsel %vm2257, %v2279, %v2281
        %v2283 = vrot.slane %v1594, 2
        %v2284 = vsel %vm2257, %v2281, %v2283
        %v2285 = vrot.slane %v1595, 2
        %v2286 = vsel %vm2257, %v2283, %v2285
        %v2287 = vrot.slane %v1596, 2
        %v2288 = vsel %vm2257, %v2285, %v2287
        %v2289 = vrot.slane %v1597, 2
        %v2290 = vsel %vm2257, %v2287, %v2289
        %v2307 = vsel %vm2224, %v2260, 0.0
        %v2308 = vsel %vm2225, %v2262, 0.0
        %v2309 = vsel %vm2226, %v2264, 0.0
        %v2310 = vsel %vm2227, %v2266, 0.0
        %v2311 = vsel %vm2228, %v2268, 0.0
        %v2312 = vsel %vm2229, %v2270, 0.0
        %v2313 = vsel %vm2230, %v2272, 0.0
        %v2314 = vsel %vm2231, %v2274, 0.0
        %v2315 = vsel %vm2232, %v2276, 0.0
        %v2316 = vsel %vm2233, %v2278, 0.0
        %v2317 = vsel %vm2234, %v2280, 0.0
        %v2318 = vsel %vm2235, %v2282, 0.0
        %v2319 = vsel %vm2236, %v2284, 0.0
        %v2320 = vsel %vm2237, %v2286, 0.0
        %v2321 = vsel %vm2238, %v2288, 0.0
        %v2322 = vsel %vm2239, %v2290, 0.0
        %v2340 = vrot.slane %v1602, 2
        %v2341 = vrot.slane %v1603, 2
        %v2342 = vsel %vm2257, %v2340, %v2341
        %v2343 = vrot.slane %v1604, 2
        %v2344 = vsel %vm2257, %v2341, %v2343
        %v2345 = vrot.slane %v1605, 2
        %v2346 = vsel %vm2257, %v2343, %v2345
        %v2347 = vrot.slane %v1606, 2
        %v2348 = vsel %vm2257, %v2345, %v2347
        %v2349 = vrot.slane %v1607, 2
        %v2350 = vsel %vm2257, %v2347, %v2349
        %v2351 = vrot.slane %v1608, 2
        %v2352 = vsel %vm2257, %v2349, %v2351
        %v2353 = vrot.slane %v1609, 2
        %v2354 = vsel %vm2257, %v2351, %v2353
        %v2355 = vrot.slane %v1610, 2
        %v2356 = vsel %vm2257, %v2353, %v2355
        %v2357 = vrot.slane %v1611, 2
        %v2358 = vsel %vm2257, %v2355, %v2357
        %v2359 = vrot.slane %v1612, 2
        %v2360 = vsel %vm2257, %v2357, %v2359
        %v2361 = vrot.slane %v1613, 2
        %v2362 = vsel %vm2257, %v2359, %v2361
        %v2363 = vrot.slane %v1614, 2
        %v2364 = vsel %vm2257, %v2361, %v2363
        %v2365 = vrot.slane %v1615, 2
        %v2366 = vsel %vm2257, %v2363, %v2365
        %v2367 = vrot.slane %v1616, 2
        %v2368 = vsel %vm2257, %v2365, %v2367
        %v2369 = vrot.slane %v1617, 2
        %v2370 = vsel %vm2257, %v2367, %v2369
        %v2371 = vrot.slane %v1618, 2
        %v2372 = vsel %vm2257, %v2369, %v2371
        %v2389 = vsel %vm2224, %v2342, 0.0
        %v2390 = vsel %vm2225, %v2344, 0.0
        %v2391 = vsel %vm2226, %v2346, 0.0
        %v2392 = vsel %vm2227, %v2348, 0.0
        %v2393 = vsel %vm2228, %v2350, 0.0
        %v2394 = vsel %vm2229, %v2352, 0.0
        %v2395 = vsel %vm2230, %v2354, 0.0
        %v2396 = vsel %vm2231, %v2356, 0.0
        %v2397 = vsel %vm2232, %v2358, 0.0
        %v2398 = vsel %vm2233, %v2360, 0.0
        %v2399 = vsel %vm2234, %v2362, 0.0
        %v2400 = vsel %vm2235, %v2364, 0.0
        %v2401 = vsel %vm2236, %v2366, 0.0
        %v2402 = vsel %vm2237, %v2368, 0.0
        %v2403 = vsel %vm2238, %v2370, 0.0
        %v2404 = vsel %vm2239, %v2372, 0.0
        %v2405 = vlaneseq
        %v2406 = vshrl.u32 %v2405, 7
        %v2407 = vsub.s32 2, %v2406
        %v2408 = vrot.slane %v1847, %v2407
        %v2409 = vmul.f32 %v2307, %v2408
        %v2410 = vmul.f32 %v2308, %v2408
        %v2411 = vmul.f32 %v2309, %v2408
        %v2412 = vmul.f32 %v2310, %v2408
        %v2413 = vmul.f32 %v2311, %v2408
        %v2414 = vmul.f32 %v2312, %v2408
        %v2415 = vmul.f32 %v2313, %v2408
        %v2416 = vmul.f32 %v2314, %v2408
        %v2417 = vmul.f32 %v2315, %v2408
        %v2418 = vmul.f32 %v2316, %v2408
        %v2419 = vmul.f32 %v2317, %v2408
        %v2420 = vmul.f32 %v2318, %v2408
        %v2421 = vmul.f32 %v2319, %v2408
        %v2422 = vmul.f32 %v2320, %v2408
        %v2423 = vmul.f32 %v2321, %v2408
        %v2424 = vmul.f32 %v2322, %v2408
        %v2425 = vadd.f32 %v2089, %v2409
        %v2426 = vadd.f32 %v2090, %v2410
        %v2427 = vadd.f32 %v2091, %v2411
        %v2428 = vadd.f32 %v2092, %v2412
        %v2429 = vadd.f32 %v2093, %v2413
        %v2430 = vadd.f32 %v2094, %v2414
        %v2431 = vadd.f32 %v2095, %v2415
        %v2432 = vadd.f32 %v2096, %v2416
        %v2433 = vadd.f32 %v2097, %v2417
        %v2434 = vadd.f32 %v2098, %v2418
        %v2435 = vadd.f32 %v2099, %v2419
        %v2436 = vadd.f32 %v2100, %v2420
        %v2437 = vadd.f32 %v2101, %v2421
        %v2438 = vadd.f32 %v2102, %v2422
        %v2439 = vadd.f32 %v2103, %v2423
        %v2440 = vadd.f32 %v2104, %v2424
        %v2441 = vlaneseq
        %v2442 = vshrl.u32 %v2441, 7
        %v2443 = vsub.s32 2, %v2442
        %v2444 = vrot.slane %v1849, %v2443
        %v2445 = vmul.f32 %v2389, %v2444
        %v2446 = vmul.f32 %v2390, %v2444
        %v2447 = vmul.f32 %v2391, %v2444
        %v2448 = vmul.f32 %v2392, %v2444
        %v2449 = vmul.f32 %v2393, %v2444
        %v2450 = vmul.f32 %v2394, %v2444
        %v2451 = vmul.f32 %v2395, %v2444
        %v2452 = vmul.f32 %v2396, %v2444
        %v2453 = vmul.f32 %v2397, %v2444
        %v2454 = vmul.f32 %v2398, %v2444
        %v2455 = vmul.f32 %v2399, %v2444
        %v2456 = vmul.f32 %v2400, %v2444
        %v2457 = vmul.f32 %v2401, %v2444
        %v2458 = vmul.f32 %v2402, %v2444
        %v2459 = vmul.f32 %v2403, %v2444
        %v2460 = vmul.f32 %v2404, %v2444
        %v2461 = vadd.f32 %v2192, %v2445
        %v2462 = vadd.f32 %v2193, %v2446
        %v2463 = vadd.f32 %v2194, %v2447
        %v2464 = vadd.f32 %v2195, %v2448
        %v2465 = vadd.f32 %v2196, %v2449
        %v2466 = vadd.f32 %v2197, %v2450
        %v2467 = vadd.f32 %v2198, %v2451
        %v2468 = vadd.f32 %v2199, %v2452
        %v2469 = vadd.f32 %v2200, %v2453
        %v2470 = vadd.f32 %v2201, %v2454
        %v2471 = vadd.f32 %v2202, %v2455
        %v2472 = vadd.f32 %v2203, %v2456
        %v2473 = vadd.f32 %v2204, %v2457
        %v2474 = vadd.f32 %v2205, %v2458
        %v2475 = vadd.f32 %v2206, %v2459
        %v2476 = vadd.f32 %v2207, %v2460
        %v2477 = vsel %vm1881, %v1583, 0.0
        %v2478 = vsel %vm1882, %v1584, 0.0
        %v2479 = vsel %vm1883, %v1585, 0.0
        %v2480 = vsel %vm1884, %v1586, 0.0
        %v2481 = vsel %vm1885, %v1587, 0.0
        %v2482 = vsel %vm1886, %v1588, 0.0
        %v2483 = vsel %vm1887, %v1589, 0.0
        %v2484 = vsel %vm1888, %v1590, 0.0
        %v2485 = vsel %vm1889, %v1591, 0.0
        %v2486 = vsel %vm1890, %v1592, 0.0
        %v2487 = vsel %vm1891, %v1593, 0.0
        %v2488 = vsel %vm1892, %v1594, 0.0
        %v2489 = vsel %vm1893, %v1595, 0.0
        %v2490 = vsel %vm1894, %v1596, 0.0
        %v2491 = vsel %vm1895, %v1597, 0.0
        %v2492 = vsel %vm1896, %v1598, 0.0
        %v2493 = vsel %vm1881, %v1604, 0.0
        %v2494 = vsel %vm1882, %v1605, 0.0
        %v2495 = vsel %vm1883, %v1606, 0.0
        %v2496 = vsel %vm1884, %v1607, 0.0
        %v2497 = vsel %vm1885, %v1608, 0.0
        %v2498 = vsel %vm1886, %v1609, 0.0
        %v2499 = vsel %vm1887, %v1610, 0.0
        %v2500 = vsel %vm1888, %v1611, 0.0
        %v2501 = vsel %vm1889, %v1612, 0.0
        %v2502 = vsel %vm1890, %v1613, 0.0
        %v2503 = vsel %vm1891, %v1614, 0.0
        %v2504 = vsel %vm1892, %v1615, 0.0
        %v2505 = vsel %vm1893, %v1616, 0.0
        %v2506 = vsel %vm1894, %v1617, 0.0
        %v2507 = vsel %vm1895, %v1618, 0.0
        %v2508 = vsel %vm1896, %v1619, 0.0
        %v2509 = vlaneseq
        %v2510 = vshrl.u32 %v2509, 7
        %v2511 = vsub.s32 3, %v2510
        %v2512 = vrot.slane %v1847, %v2511
        %v2513 = vmul.f32 %v2477, %v2512
        %v2514 = vmul.f32 %v2478, %v2512
        %v2515 = vmul.f32 %v2479, %v2512
        %v2516 = vmul.f32 %v2480, %v2512
        %v2517 = vmul.f32 %v2481, %v2512
        %v2518 = vmul.f32 %v2482, %v2512
        %v2519 = vmul.f32 %v2483, %v2512
        %v2520 = vmul.f32 %v2484, %v2512
        %v2521 = vmul.f32 %v2485, %v2512
        %v2522 = vmul.f32 %v2486, %v2512
        %v2523 = vmul.f32 %v2487, %v2512
        %v2524 = vmul.f32 %v2488, %v2512
        %v2525 = vmul.f32 %v2489, %v2512
        %v2526 = vmul.f32 %v2490, %v2512
        %v2527 = vmul.f32 %v2491, %v2512
        %v2528 = vmul.f32 %v2492, %v2512
        %v2529 = vadd.f32 %v2425, %v2513
        %v2530 = vadd.f32 %v2426, %v2514
        %v2531 = vadd.f32 %v2427, %v2515
        %v2532 = vadd.f32 %v2428, %v2516
        %v2533 = vadd.f32 %v2429, %v2517
        %v2534 = vadd.f32 %v2430, %v2518
        %v2535 = vadd.f32 %v2431, %v2519
        %v2536 = vadd.f32 %v2432, %v2520
        %v2537 = vadd.f32 %v2433, %v2521
        %v2538 = vadd.f32 %v2434, %v2522
        %v2539 = vadd.f32 %v2435, %v2523
        %v2540 = vadd.f32 %v2436, %v2524
        %v2541 = vadd.f32 %v2437, %v2525
        %v2542 = vadd.f32 %v2438, %v2526
        %v2543 = vadd.f32 %v2439, %v2527
        %v2544 = vadd.f32 %v2440, %v2528
        %v2545 = vlaneseq
        %v2546 = vshrl.u32 %v2545, 7
        %v2547 = vsub.s32 3, %v2546
        %v2548 = vrot.slane %v1849, %v2547
        %v2549 = vmul.f32 %v2493, %v2548
        %v2550 = vmul.f32 %v2494, %v2548
        %v2551 = vmul.f32 %v2495, %v2548
        %v2552 = vmul.f32 %v2496, %v2548
        %v2553 = vmul.f32 %v2497, %v2548
        %v2554 = vmul.f32 %v2498, %v2548
        %v2555 = vmul.f32 %v2499, %v2548
        %v2556 = vmul.f32 %v2500, %v2548
        %v2557 = vmul.f32 %v2501, %v2548
        %v2558 = vmul.f32 %v2502, %v2548
        %v2559 = vmul.f32 %v2503, %v2548
        %v2560 = vmul.f32 %v2504, %v2548
        %v2561 = vmul.f32 %v2505, %v2548
        %v2562 = vmul.f32 %v2506, %v2548
        %v2563 = vmul.f32 %v2507, %v2548
        %v2564 = vmul.f32 %v2508, %v2548
        %v2565 = vadd.f32 %v2461, %v2549
        %v2566 = vadd.f32 %v2462, %v2550
        %v2567 = vadd.f32 %v2463, %v2551
        %v2568 = vadd.f32 %v2464, %v2552
        %v2569 = vadd.f32 %v2465, %v2553
        %v2570 = vadd.f32 %v2466, %v2554
        %v2571 = vadd.f32 %v2467, %v2555
        %v2572 = vadd.f32 %v2468, %v2556
        %v2573 = vadd.f32 %v2469, %v2557
        %v2574 = vadd.f32 %v2470, %v2558
        %v2575 = vadd.f32 %v2471, %v2559
        %v2576 = vadd.f32 %v2472, %v2560
        %v2577 = vadd.f32 %v2473, %v2561
        %v2578 = vadd.f32 %v2474, %v2562
        %v2579 = vadd.f32 %v2475, %v2563
        %v2580 = vadd.f32 %v2476, %v2564
        %v2581 = vlaneseq
        %v2582 = vshrl.u32 %v2581, 7
        %v2583 = vsub.s32 4, %v2582
        %v2584 = vrot.slane %v1847, %v2583
        %v2585 = vmul.f32 %v1583, %v2584
        %v2586 = vmul.f32 %v1584, %v2584
        %v2587 = vmul.f32 %v1585, %v2584
        %v2588 = vmul.f32 %v1586, %v2584
        %v2589 = vmul.f32 %v1587, %v2584
        %v2590 = vmul.f32 %v1588, %v2584
        %v2591 = vmul.f32 %v1589, %v2584
        %v2592 = vmul.f32 %v1590, %v2584
        %v2593 = vmul.f32 %v1591, %v2584
        %v2594 = vmul.f32 %v1592, %v2584
        %v2595 = vmul.f32 %v1593, %v2584
        %v2596 = vmul.f32 %v1594, %v2584
        %v2597 = vmul.f32 %v1595, %v2584
        %v2598 = vmul.f32 %v1596, %v2584
        %v2599 = vmul.f32 %v1597, %v2584
        %v2600 = vmul.f32 %v1598, %v2584
        %v2601 = vmul.f32 %v1599, %v2584
        %v2619 = vrot.slane %v2585, 1
        %v2620 = vrot.slane %v2586, 1
        %v2621 = vsel %vm2039, %v2619, %v2620
        %v2622 = vrot.slane %v2587, 1
        %v2623 = vsel %vm2039, %v2620, %v2622
        %v2624 = vrot.slane %v2588, 1
        %v2625 = vsel %vm2039, %v2622, %v2624
        %v2626 = vrot.slane %v2589, 1
        %v2627 = vsel %vm2039, %v2624, %v2626
        %v2628 = vrot.slane %v2590, 1
        %v2629 = vsel %vm2039, %v2626, %v2628
        %v2630 = vrot.slane %v2591, 1
        %v2631 = vsel %vm2039, %v2628, %v2630
        %v2632 = vrot.slane %v2592, 1
        %v2633 = vsel %vm2039, %v2630, %v2632
        %v2634 = vrot.slane %v2593, 1
        %v2635 = vsel %vm2039, %v2632, %v2634
        %v2636 = vrot.slane %v2594, 1
        %v2637 = vsel %vm2039, %v2634, %v2636
        %v2638 = vrot.slane %v2595, 1
        %v2639 = vsel %vm2039, %v2636, %v2638
        %v2640 = vrot.slane %v2596, 1
        %v2641 = vsel %vm2039, %v2638, %v2640
        %v2642 = vrot.slane %v2597, 1
        %v2643 = vsel %vm2039, %v2640, %v2642
        %v2644 = vrot.slane %v2598, 1
        %v2645 = vsel %vm2039, %v2642, %v2644
        %v2646 = vrot.slane %v2599, 1
        %v2647 = vsel %vm2039, %v2644, %v2646
        %v2648 = vrot.slane %v2600, 1
        %v2649 = vsel %vm2039, %v2646, %v2648
        %v2650 = vrot.slane %v2601, 1
        %v2651 = vsel %vm2039, %v2648, %v2650
        %v2668 = vadd.f32 %v2529, %v2621
        %v2669 = vadd.f32 %v2530, %v2623
        %v2670 = vadd.f32 %v2531, %v2625
        %v2671 = vadd.f32 %v2532, %v2627
        %v2672 = vadd.f32 %v2533, %v2629
        %v2673 = vadd.f32 %v2534, %v2631
        %v2674 = vadd.f32 %v2535, %v2633
        %v2675 = vadd.f32 %v2536, %v2635
        %v2676 = vadd.f32 %v2537, %v2637
        %v2677 = vadd.f32 %v2538, %v2639
        %v2678 = vadd.f32 %v2539, %v2641
        %v2679 = vadd.f32 %v2540, %v2643
        %v2680 = vadd.f32 %v2541, %v2645
        %v2681 = vadd.f32 %v2542, %v2647
        %v2682 = vadd.f32 %v2543, %v2649
        %v2683 = vadd.f32 %v2544, %v2651
        %v2684 = vlaneseq
        %v2685 = vshrl.u32 %v2684, 7
        %v2686 = vsub.s32 4, %v2685
        %v2687 = vrot.slane %v1849, %v2686
        %v2688 = vmul.f32 %v1604, %v2687
        %v2689 = vmul.f32 %v1605, %v2687
        %v2690 = vmul.f32 %v1606, %v2687
        %v2691 = vmul.f32 %v1607, %v2687
        %v2692 = vmul.f32 %v1608, %v2687
        %v2693 = vmul.f32 %v1609, %v2687
        %v2694 = vmul.f32 %v1610, %v2687
        %v2695 = vmul.f32 %v1611, %v2687
        %v2696 = vmul.f32 %v1612, %v2687
        %v2697 = vmul.f32 %v1613, %v2687
        %v2698 = vmul.f32 %v1614, %v2687
        %v2699 = vmul.f32 %v1615, %v2687
        %v2700 = vmul.f32 %v1616, %v2687
        %v2701 = vmul.f32 %v1617, %v2687
        %v2702 = vmul.f32 %v1618, %v2687
        %v2703 = vmul.f32 %v1619, %v2687
        %v2704 = vmul.f32 %v1620, %v2687
        %v2722 = vrot.slane %v2688, 1
        %v2723 = vrot.slane %v2689, 1
        %v2724 = vsel %vm2039, %v2722, %v2723
        %v2725 = vrot.slane %v2690, 1
        %v2726 = vsel %vm2039, %v2723, %v2725
        %v2727 = vrot.slane %v2691, 1
        %v2728 = vsel %vm2039, %v2725, %v2727
        %v2729 = vrot.slane %v2692, 1
        %v2730 = vsel %vm2039, %v2727, %v2729
        %v2731 = vrot.slane %v2693, 1
        %v2732 = vsel %vm2039, %v2729, %v2731
        %v2733 = vrot.slane %v2694, 1
        %v2734 = vsel %vm2039, %v2731, %v2733
        %v2735 = vrot.slane %v2695, 1
        %v2736 = vsel %vm2039, %v2733, %v2735
        %v2737 = vrot.slane %v2696, 1
        %v2738 = vsel %vm2039, %v2735, %v2737
        %v2739 = vrot.slane %v2697, 1
        %v2740 = vsel %vm2039, %v2737, %v2739
        %v2741 = vrot.slane %v2698, 1
        %v2742 = vsel %vm2039, %v2739, %v2741
        %v2743 = vrot.slane %v2699, 1
        %v2744 = vsel %vm2039, %v2741, %v2743
        %v2745 = vrot.slane %v2700, 1
        %v2746 = vsel %vm2039, %v2743, %v2745
        %v2747 = vrot.slane %v2701, 1
        %v2748 = vsel %vm2039, %v2745, %v2747
        %v2749 = vrot.slane %v2702, 1
        %v2750 = vsel %vm2039, %v2747, %v2749
        %v2751 = vrot.slane %v2703, 1
        %v2752 = vsel %vm2039, %v2749, %v2751
        %v2753 = vrot.slane %v2704, 1
        %v2754 = vsel %vm2039, %v2751, %v2753
        %v2771 = vadd.f32 %v2565, %v2724
        %v2772 = vadd.f32 %v2566, %v2726
        %v2773 = vadd.f32 %v2567, %v2728
        %v2774 = vadd.f32 %v2568, %v2730
        %v2775 = vadd.f32 %v2569, %v2732
        %v2776 = vadd.f32 %v2570, %v2734
        %v2777 = vadd.f32 %v2571, %v2736
        %v2778 = vadd.f32 %v2572, %v2738
        %v2779 = vadd.f32 %v2573, %v2740
        %v2780 = vadd.f32 %v2574, %v2742
        %v2781 = vadd.f32 %v2575, %v2744
        %v2782 = vadd.f32 %v2576, %v2746
        %v2783 = vadd.f32 %v2577, %v2748
        %v2784 = vadd.f32 %v2578, %v2750
        %v2785 = vadd.f32 %v2579, %v2752
        %v2786 = vadd.f32 %v2580, %v2754
        %v2789 = vrot.slane %v1598, 2
        %v2790 = vsel %vm2257, %v2289, %v2789
        %v2791 = vrot.slane %v1599, 2
        %v2792 = vsel %vm2257, %v2789, %v2791
        %v2795 = vsel %vm2224, %v2264, 0.0
        %v2796 = vsel %vm2225, %v2266, 0.0
        %v2797 = vsel %vm2226, %v2268, 0.0
        %v2798 = vsel %vm2227, %v2270, 0.0
        %v2799 = vsel %vm2228, %v2272, 0.0
        %v2800 = vsel %vm2229, %v2274, 0.0
        %v2801 = vsel %vm2230, %v2276, 0.0
        %v2802 = vsel %vm2231, %v2278, 0.0
        %v2803 = vsel %vm2232, %v2280, 0.0
        %v2804 = vsel %vm2233, %v2282, 0.0
        %v2805 = vsel %vm2234, %v2284, 0.0
        %v2806 = vsel %vm2235, %v2286, 0.0
        %v2807 = vsel %vm2236, %v2288, 0.0
        %v2808 = vsel %vm2237, %v2290, 0.0
        %v2809 = vsel %vm2238, %v2790, 0.0
        %v2810 = vsel %vm2239, %v2792, 0.0
        %v2813 = vrot.slane %v1619, 2
        %v2814 = vsel %vm2257, %v2371, %v2813
        %v2815 = vrot.slane %v1620, 2
        %v2816 = vsel %vm2257, %v2813, %v2815
        %v2819 = vsel %vm2224, %v2346, 0.0
        %v2820 = vsel %vm2225, %v2348, 0.0
        %v2821 = vsel %vm2226, %v2350, 0.0
        %v2822 = vsel %vm2227, %v2352, 0.0
        %v2823 = vsel %vm2228, %v2354, 0.0
        %v2824 = vsel %vm2229, %v2356, 0.0
        %v2825 = vsel %vm2230, %v2358, 0.0
        %v2826 = vsel %vm2231, %v2360, 0.0
        %v2827 = vsel %vm2232, %v2362, 0.0
        %v2828 = vsel %vm2233, %v2364, 0.0
        %v2829 = vsel %vm2234, %v2366, 0.0
        %v2830 = vsel %vm2235, %v2368, 0.0
        %v2831 = vsel %vm2236, %v2370, 0.0
        %v2832 = vsel %vm2237, %v2372, 0.0
        %v2833 = vsel %vm2238, %v2814, 0.0
        %v2834 = vsel %vm2239, %v2816, 0.0
        %v2835 = vlaneseq
        %v2836 = vshrl.u32 %v2835, 7
        %v2837 = vsub.s32 5, %v2836
        %v2838 = vrot.slane %v1847, %v2837
        %v2839 = vmul.f32 %v2795, %v2838
        %v2840 = vmul.f32 %v2796, %v2838
        %v2841 = vmul.f32 %v2797, %v2838
        %v2842 = vmul.f32 %v2798, %v2838
        %v2843 = vmul.f32 %v2799, %v2838
        %v2844 = vmul.f32 %v2800, %v2838
        %v2845 = vmul.f32 %v2801, %v2838
        %v2846 = vmul.f32 %v2802, %v2838
        %v2847 = vmul.f32 %v2803, %v2838
        %v2848 = vmul.f32 %v2804, %v2838
        %v2849 = vmul.f32 %v2805, %v2838
        %v2850 = vmul.f32 %v2806, %v2838
        %v2851 = vmul.f32 %v2807, %v2838
        %v2852 = vmul.f32 %v2808, %v2838
        %v2853 = vmul.f32 %v2809, %v2838
        %v2854 = vmul.f32 %v2810, %v2838
        %v2855 = vadd.f32 %v2668, %v2839
        %v2856 = vadd.f32 %v2669, %v2840
        %v2857 = vadd.f32 %v2670, %v2841
        %v2858 = vadd.f32 %v2671, %v2842
        %v2859 = vadd.f32 %v2672, %v2843
        %v2860 = vadd.f32 %v2673, %v2844
        %v2861 = vadd.f32 %v2674, %v2845
        %v2862 = vadd.f32 %v2675, %v2846
        %v2863 = vadd.f32 %v2676, %v2847
        %v2864 = vadd.f32 %v2677, %v2848
        %v2865 = vadd.f32 %v2678, %v2849
        %v2866 = vadd.f32 %v2679, %v2850
        %v2867 = vadd.f32 %v2680, %v2851
        %v2868 = vadd.f32 %v2681, %v2852
        %v2869 = vadd.f32 %v2682, %v2853
        %v2870 = vadd.f32 %v2683, %v2854
        %v2871 = vlaneseq
        %v2872 = vshrl.u32 %v2871, 7
        %v2873 = vsub.s32 5, %v2872
        %v2874 = vrot.slane %v1849, %v2873
        %v2875 = vmul.f32 %v2819, %v2874
        %v2876 = vmul.f32 %v2820, %v2874
        %v2877 = vmul.f32 %v2821, %v2874
        %v2878 = vmul.f32 %v2822, %v2874
        %v2879 = vmul.f32 %v2823, %v2874
        %v2880 = vmul.f32 %v2824, %v2874
        %v2881 = vmul.f32 %v2825, %v2874
        %v2882 = vmul.f32 %v2826, %v2874
        %v2883 = vmul.f32 %v2827, %v2874
        %v2884 = vmul.f32 %v2828, %v2874
        %v2885 = vmul.f32 %v2829, %v2874
        %v2886 = vmul.f32 %v2830, %v2874
        %v2887 = vmul.f32 %v2831, %v2874
        %v2888 = vmul.f32 %v2832, %v2874
        %v2889 = vmul.f32 %v2833, %v2874
        %v2890 = vmul.f32 %v2834, %v2874
        %v2891 = vadd.f32 %v2771, %v2875
        %v2892 = vadd.f32 %v2772, %v2876
        %v2893 = vadd.f32 %v2773, %v2877
        %v2894 = vadd.f32 %v2774, %v2878
        %v2895 = vadd.f32 %v2775, %v2879
        %v2896 = vadd.f32 %v2776, %v2880
        %v2897 = vadd.f32 %v2777, %v2881
        %v2898 = vadd.f32 %v2778, %v2882
        %v2899 = vadd.f32 %v2779, %v2883
        %v2900 = vadd.f32 %v2780, %v2884
        %v2901 = vadd.f32 %v2781, %v2885
        %v2902 = vadd.f32 %v2782, %v2886
        %v2903 = vadd.f32 %v2783, %v2887
        %v2904 = vadd.f32 %v2784, %v2888
        %v2905 = vadd.f32 %v2785, %v2889
        %v2906 = vadd.f32 %v2786, %v2890
        %v2907 = vsel %vm1881, %v1585, 0.0
        %v2908 = vsel %vm1882, %v1586, 0.0
        %v2909 = vsel %vm1883, %v1587, 0.0
        %v2910 = vsel %vm1884, %v1588, 0.0
        %v2911 = vsel %vm1885, %v1589, 0.0
        %v2912 = vsel %vm1886, %v1590, 0.0
        %v2913 = vsel %vm1887, %v1591, 0.0
        %v2914 = vsel %vm1888, %v1592, 0.0
        %v2915 = vsel %vm1889, %v1593, 0.0
        %v2916 = vsel %vm1890, %v1594, 0.0
        %v2917 = vsel %vm1891, %v1595, 0.0
        %v2918 = vsel %vm1892, %v1596, 0.0
        %v2919 = vsel %vm1893, %v1597, 0.0
        %v2920 = vsel %vm1894, %v1598, 0.0
        %v2921 = vsel %vm1895, %v1599, 0.0
        %v2922 = vsel %vm1896, %v1600, 0.0
        %v2923 = vsel %vm1881, %v1606, 0.0
        %v2924 = vsel %vm1882, %v1607, 0.0
        %v2925 = vsel %vm1883, %v1608, 0.0
        %v2926 = vsel %vm1884, %v1609, 0.0
        %v2927 = vsel %vm1885, %v1610, 0.0
        %v2928 = vsel %vm1886, %v1611, 0.0
        %v2929 = vsel %vm1887, %v1612, 0.0
        %v2930 = vsel %vm1888, %v1613, 0.0
        %v2931 = vsel %vm1889, %v1614, 0.0
        %v2932 = vsel %vm1890, %v1615, 0.0
        %v2933 = vsel %vm1891, %v1616, 0.0
        %v2934 = vsel %vm1892, %v1617, 0.0
        %v2935 = vsel %vm1893, %v1618, 0.0
        %v2936 = vsel %vm1894, %v1619, 0.0
        %v2937 = vsel %vm1895, %v1620, 0.0
        %v2938 = vsel %vm1896, %v1621, 0.0
        %v2939 = vlaneseq
        %v2940 = vshrl.u32 %v2939, 7
        %v2941 = vsub.s32 6, %v2940
        %v2942 = vrot.slane %v1847, %v2941
        %v2943 = vmul.f32 %v2907, %v2942
        %v2944 = vmul.f32 %v2908, %v2942
        %v2945 = vmul.f32 %v2909, %v2942
        %v2946 = vmul.f32 %v2910, %v2942
        %v2947 = vmul.f32 %v2911, %v2942
        %v2948 = vmul.f32 %v2912, %v2942
        %v2949 = vmul.f32 %v2913, %v2942
        %v2950 = vmul.f32 %v2914, %v2942
        %v2951 = vmul.f32 %v2915, %v2942
        %v2952 = vmul.f32 %v2916, %v2942
        %v2953 = vmul.f32 %v2917, %v2942
        %v2954 = vmul.f32 %v2918, %v2942
        %v2955 = vmul.f32 %v2919, %v2942
        %v2956 = vmul.f32 %v2920, %v2942
        %v2957 = vmul.f32 %v2921, %v2942
        %v2958 = vmul.f32 %v2922, %v2942
        %v2959 = vadd.f32 %v2855, %v2943
        %v2960 = vadd.f32 %v2856, %v2944
        %v2961 = vadd.f32 %v2857, %v2945
        %v2962 = vadd.f32 %v2858, %v2946
        %v2963 = vadd.f32 %v2859, %v2947
        %v2964 = vadd.f32 %v2860, %v2948
        %v2965 = vadd.f32 %v2861, %v2949
        %v2966 = vadd.f32 %v2862, %v2950
        %v2967 = vadd.f32 %v2863, %v2951
        %v2968 = vadd.f32 %v2864, %v2952
        %v2969 = vadd.f32 %v2865, %v2953
        %v2970 = vadd.f32 %v2866, %v2954
        %v2971 = vadd.f32 %v2867, %v2955
        %v2972 = vadd.f32 %v2868, %v2956
        %v2973 = vadd.f32 %v2869, %v2957
        %v2974 = vadd.f32 %v2870, %v2958
        %v2975 = vlaneseq
        %v2976 = vshrl.u32 %v2975, 7
        %v2977 = vsub.s32 6, %v2976
        %v2978 = vrot.slane %v1849, %v2977
        %v2979 = vmul.f32 %v2923, %v2978
        %v2980 = vmul.f32 %v2924, %v2978
        %v2981 = vmul.f32 %v2925, %v2978
        %v2982 = vmul.f32 %v2926, %v2978
        %v2983 = vmul.f32 %v2927, %v2978
        %v2984 = vmul.f32 %v2928, %v2978
        %v2985 = vmul.f32 %v2929, %v2978
        %v2986 = vmul.f32 %v2930, %v2978
        %v2987 = vmul.f32 %v2931, %v2978
        %v2988 = vmul.f32 %v2932, %v2978
        %v2989 = vmul.f32 %v2933, %v2978
        %v2990 = vmul.f32 %v2934, %v2978
        %v2991 = vmul.f32 %v2935, %v2978
        %v2992 = vmul.f32 %v2936, %v2978
        %v2993 = vmul.f32 %v2937, %v2978
        %v2994 = vmul.f32 %v2938, %v2978
        %v2995 = vadd.f32 %v2891, %v2979
        %v2996 = vadd.f32 %v2892, %v2980
        %v2997 = vadd.f32 %v2893, %v2981
        %v2998 = vadd.f32 %v2894, %v2982
        %v2999 = vadd.f32 %v2895, %v2983
        %v3000 = vadd.f32 %v2896, %v2984
        %v3001 = vadd.f32 %v2897, %v2985
        %v3002 = vadd.f32 %v2898, %v2986
        %v3003 = vadd.f32 %v2899, %v2987
        %v3004 = vadd.f32 %v2900, %v2988
        %v3005 = vadd.f32 %v2901, %v2989
        %v3006 = vadd.f32 %v2902, %v2990
        %v3007 = vadd.f32 %v2903, %v2991
        %v3008 = vadd.f32 %v2904, %v2992
        %v3009 = vadd.f32 %v2905, %v2993
        %v3010 = vadd.f32 %v2906, %v2994
        %v3011 = vlaneseq
        %v3012 = vshrl.u32 %v3011, 7
        %v3013 = vsub.s32 7, %v3012
        %v3014 = vrot.slane %v1847, %v3013
        %v3015 = vmul.f32 %v1585, %v3014
        %v3016 = vmul.f32 %v1586, %v3014
        %v3017 = vmul.f32 %v1587, %v3014
        %v3018 = vmul.f32 %v1588, %v3014
        %v3019 = vmul.f32 %v1589, %v3014
        %v3020 = vmul.f32 %v1590, %v3014
        %v3021 = vmul.f32 %v1591, %v3014
        %v3022 = vmul.f32 %v1592, %v3014
        %v3023 = vmul.f32 %v1593, %v3014
        %v3024 = vmul.f32 %v1594, %v3014
        %v3025 = vmul.f32 %v1595, %v3014
        %v3026 = vmul.f32 %v1596, %v3014
        %v3027 = vmul.f32 %v1597, %v3014
        %v3028 = vmul.f32 %v1598, %v3014
        %v3029 = vmul.f32 %v1599, %v3014
        %v3030 = vmul.f32 %v1600, %v3014
        %v3031 = vmul.f32 %v1601, %v3014
        %v3049 = vrot.slane %v3015, 1
        %v3050 = vrot.slane %v3016, 1
        %v3051 = vsel %vm2039, %v3049, %v3050
        %v3052 = vrot.slane %v3017, 1
        %v3053 = vsel %vm2039, %v3050, %v3052
        %v3054 = vrot.slane %v3018, 1
        %v3055 = vsel %vm2039, %v3052, %v3054
        %v3056 = vrot.slane %v3019, 1
        %v3057 = vsel %vm2039, %v3054, %v3056
        %v3058 = vrot.slane %v3020, 1
        %v3059 = vsel %vm2039, %v3056, %v3058
        %v3060 = vrot.slane %v3021, 1
        %v3061 = vsel %vm2039, %v3058, %v3060
        %v3062 = vrot.slane %v3022, 1
        %v3063 = vsel %vm2039, %v3060, %v3062
        %v3064 = vrot.slane %v3023, 1
        %v3065 = vsel %vm2039, %v3062, %v3064
        %v3066 = vrot.slane %v3024, 1
        %v3067 = vsel %vm2039, %v3064, %v3066
        %v3068 = vrot.slane %v3025, 1
        %v3069 = vsel %vm2039, %v3066, %v3068
        %v3070 = vrot.slane %v3026, 1
        %v3071 = vsel %vm2039, %v3068, %v3070
        %v3072 = vrot.slane %v3027, 1
        %v3073 = vsel %vm2039, %v3070, %v3072
        %v3074 = vrot.slane %v3028, 1
        %v3075 = vsel %vm2039, %v3072, %v3074
        %v3076 = vrot.slane %v3029, 1
        %v3077 = vsel %vm2039, %v3074, %v3076
        %v3078 = vrot.slane %v3030, 1
        %v3079 = vsel %vm2039, %v3076, %v3078
        %v3080 = vrot.slane %v3031, 1
        %v3081 = vsel %vm2039, %v3078, %v3080
        %v3098 = vadd.f32 %v2959, %v3051
        %v3099 = vadd.f32 %v2960, %v3053
        %v3100 = vadd.f32 %v2961, %v3055
        %v3101 = vadd.f32 %v2962, %v3057
        %v3102 = vadd.f32 %v2963, %v3059
        %v3103 = vadd.f32 %v2964, %v3061
        %v3104 = vadd.f32 %v2965, %v3063
        %v3105 = vadd.f32 %v2966, %v3065
        %v3106 = vadd.f32 %v2967, %v3067
        %v3107 = vadd.f32 %v2968, %v3069
        %v3108 = vadd.f32 %v2969, %v3071
        %v3109 = vadd.f32 %v2970, %v3073
        %v3110 = vadd.f32 %v2971, %v3075
        %v3111 = vadd.f32 %v2972, %v3077
        %v3112 = vadd.f32 %v2973, %v3079
        %v3113 = vadd.f32 %v2974, %v3081
        %v3114 = vlaneseq
        %v3115 = vshrl.u32 %v3114, 7
        %v3116 = vsub.s32 7, %v3115
        %v3117 = vrot.slane %v1849, %v3116
        %v3118 = vmul.f32 %v1606, %v3117
        %v3119 = vmul.f32 %v1607, %v3117
        %v3120 = vmul.f32 %v1608, %v3117
        %v3121 = vmul.f32 %v1609, %v3117
        %v3122 = vmul.f32 %v1610, %v3117
        %v3123 = vmul.f32 %v1611, %v3117
        %v3124 = vmul.f32 %v1612, %v3117
        %v3125 = vmul.f32 %v1613, %v3117
        %v3126 = vmul.f32 %v1614, %v3117
        %v3127 = vmul.f32 %v1615, %v3117
        %v3128 = vmul.f32 %v1616, %v3117
        %v3129 = vmul.f32 %v1617, %v3117
        %v3130 = vmul.f32 %v1618, %v3117
        %v3131 = vmul.f32 %v1619, %v3117
        %v3132 = vmul.f32 %v1620, %v3117
        %v3133 = vmul.f32 %v1621, %v3117
        %v3134 = vmul.f32 %v1622, %v3117
        %v3152 = vrot.slane %v3118, 1
        %v3153 = vrot.slane %v3119, 1
        %v3154 = vsel %vm2039, %v3152, %v3153
        %v3155 = vrot.slane %v3120, 1
        %v3156 = vsel %vm2039, %v3153, %v3155
        %v3157 = vrot.slane %v3121, 1
        %v3158 = vsel %vm2039, %v3155, %v3157
        %v3159 = vrot.slane %v3122, 1
        %v3160 = vsel %vm2039, %v3157, %v3159
        %v3161 = vrot.slane %v3123, 1
        %v3162 = vsel %vm2039, %v3159, %v3161
        %v3163 = vrot.slane %v3124, 1
        %v3164 = vsel %vm2039, %v3161, %v3163
        %v3165 = vrot.slane %v3125, 1
        %v3166 = vsel %vm2039, %v3163, %v3165
        %v3167 = vrot.slane %v3126, 1
        %v3168 = vsel %vm2039, %v3165, %v3167
        %v3169 = vrot.slane %v3127, 1
        %v3170 = vsel %vm2039, %v3167, %v3169
        %v3171 = vrot.slane %v3128, 1
        %v3172 = vsel %vm2039, %v3169, %v3171
        %v3173 = vrot.slane %v3129, 1
        %v3174 = vsel %vm2039, %v3171, %v3173
        %v3175 = vrot.slane %v3130, 1
        %v3176 = vsel %vm2039, %v3173, %v3175
        %v3177 = vrot.slane %v3131, 1
        %v3178 = vsel %vm2039, %v3175, %v3177
        %v3179 = vrot.slane %v3132, 1
        %v3180 = vsel %vm2039, %v3177, %v3179
        %v3181 = vrot.slane %v3133, 1
        %v3182 = vsel %vm2039, %v3179, %v3181
        %v3183 = vrot.slane %v3134, 1
        %v3184 = vsel %vm2039, %v3181, %v3183
        %v3201 = vadd.f32 %v2995, %v3154
        %v3202 = vadd.f32 %v2996, %v3156
        %v3203 = vadd.f32 %v2997, %v3158
        %v3204 = vadd.f32 %v2998, %v3160
        %v3205 = vadd.f32 %v2999, %v3162
        %v3206 = vadd.f32 %v3000, %v3164
        %v3207 = vadd.f32 %v3001, %v3166
        %v3208 = vadd.f32 %v3002, %v3168
        %v3209 = vadd.f32 %v3003, %v3170
        %v3210 = vadd.f32 %v3004, %v3172
        %v3211 = vadd.f32 %v3005, %v3174
        %v3212 = vadd.f32 %v3006, %v3176
        %v3213 = vadd.f32 %v3007, %v3178
        %v3214 = vadd.f32 %v3008, %v3180
        %v3215 = vadd.f32 %v3009, %v3182
        %v3216 = vadd.f32 %v3010, %v3184
        %v3219 = vrot.slane %v1600, 2
        %v3220 = vsel %vm2257, %v2791, %v3219
        %v3221 = vrot.slane %v1601, 2
        %v3222 = vsel %vm2257, %v3219, %v3221
        %v3225 = vsel %vm2224, %v2268, 0.0
        %v3226 = vsel %vm2225, %v2270, 0.0
        %v3227 = vsel %vm2226, %v2272, 0.0
        %v3228 = vsel %vm2227, %v2274, 0.0
        %v3229 = vsel %vm2228, %v2276, 0.0
        %v3230 = vsel %vm2229, %v2278, 0.0
        %v3231 = vsel %vm2230, %v2280, 0.0
        %v3232 = vsel %vm2231, %v2282, 0.0
        %v3233 = vsel %vm2232, %v2284, 0.0
        %v3234 = vsel %vm2233, %v2286, 0.0
        %v3235 = vsel %vm2234, %v2288, 0.0
        %v3236 = vsel %vm2235, %v2290, 0.0
        %v3237 = vsel %vm2236, %v2790, 0.0
        %v3238 = vsel %vm2237, %v2792, 0.0
        %v3239 = vsel %vm2238, %v3220, 0.0
        %v3240 = vsel %vm2239, %v3222, 0.0
        %v3243 = vrot.slane %v1621, 2
        %v3244 = vsel %vm2257, %v2815, %v3243
        %v3245 = vrot.slane %v1622, 2
        %v3246 = vsel %vm2257, %v3243, %v3245
        %v3249 = vsel %vm2224, %v2350, 0.0
        %v3250 = vsel %vm2225, %v2352, 0.0
        %v3251 = vsel %vm2226, %v2354, 0.0
        %v3252 = vsel %vm2227, %v2356, 0.0
        %v3253 = vsel %vm2228, %v2358, 0.0
        %v3254 = vsel %vm2229, %v2360, 0.0
        %v3255 = vsel %vm2230, %v2362, 0.0
        %v3256 = vsel %vm2231, %v2364, 0.0
        %v3257 = vsel %vm2232, %v2366, 0.0
        %v3258 = vsel %vm2233, %v2368, 0.0
        %v3259 = vsel %vm2234, %v2370, 0.0
        %v3260 = vsel %vm2235, %v2372, 0.0
        %v3261 = vsel %vm2236, %v2814, 0.0
        %v3262 = vsel %vm2237, %v2816, 0.0
        %v3263 = vsel %vm2238, %v3244, 0.0
        %v3264 = vsel %vm2239, %v3246, 0.0
        %v3265 = vlaneseq
        %v3266 = vshrl.u32 %v3265, 7
        %v3267 = vsub.s32 0, %v3266
        %v3268 = vrot.slane %v1848, %v3267
        %v3269 = vmul.f32 %v3225, %v3268
        %v3270 = vmul.f32 %v3226, %v3268
        %v3271 = vmul.f32 %v3227, %v3268
        %v3272 = vmul.f32 %v3228, %v3268
        %v3273 = vmul.f32 %v3229, %v3268
        %v3274 = vmul.f32 %v3230, %v3268
        %v3275 = vmul.f32 %v3231, %v3268
        %v3276 = vmul.f32 %v3232, %v3268
        %v3277 = vmul.f32 %v3233, %v3268
        %v3278 = vmul.f32 %v3234, %v3268
        %v3279 = vmul.f32 %v3235, %v3268
        %v3280 = vmul.f32 %v3236, %v3268
        %v3281 = vmul.f32 %v3237, %v3268
        %v3282 = vmul.f32 %v3238, %v3268
        %v3283 = vmul.f32 %v3239, %v3268
        %v3284 = vmul.f32 %v3240, %v3268
        %v3285 = vadd.f32 %v3098, %v3269
        %v3286 = vadd.f32 %v3099, %v3270
        %v3287 = vadd.f32 %v3100, %v3271
        %v3288 = vadd.f32 %v3101, %v3272
        %v3289 = vadd.f32 %v3102, %v3273
        %v3290 = vadd.f32 %v3103, %v3274
        %v3291 = vadd.f32 %v3104, %v3275
        %v3292 = vadd.f32 %v3105, %v3276
        %v3293 = vadd.f32 %v3106, %v3277
        %v3294 = vadd.f32 %v3107, %v3278
        %v3295 = vadd.f32 %v3108, %v3279
        %v3296 = vadd.f32 %v3109, %v3280
        %v3297 = vadd.f32 %v3110, %v3281
        %v3298 = vadd.f32 %v3111, %v3282
        %v3299 = vadd.f32 %v3112, %v3283
        %v3300 = vadd.f32 %v3113, %v3284
        %v3301 = vlaneseq
        %v3302 = vshrl.u32 %v3301, 7
        %v3303 = vsub.s32 0, %v3302
        %v3304 = vrot.slane %v1850, %v3303
        %v3305 = vmul.f32 %v3249, %v3304
        %v3306 = vmul.f32 %v3250, %v3304
        %v3307 = vmul.f32 %v3251, %v3304
        %v3308 = vmul.f32 %v3252, %v3304
        %v3309 = vmul.f32 %v3253, %v3304
        %v3310 = vmul.f32 %v3254, %v3304
        %v3311 = vmul.f32 %v3255, %v3304
        %v3312 = vmul.f32 %v3256, %v3304
        %v3313 = vmul.f32 %v3257, %v3304
        %v3314 = vmul.f32 %v3258, %v3304
        %v3315 = vmul.f32 %v3259, %v3304
        %v3316 = vmul.f32 %v3260, %v3304
        %v3317 = vmul.f32 %v3261, %v3304
        %v3318 = vmul.f32 %v3262, %v3304
        %v3319 = vmul.f32 %v3263, %v3304
        %v3320 = vmul.f32 %v3264, %v3304
        %v3321 = vadd.f32 %v3201, %v3305
        %v3322 = vadd.f32 %v3202, %v3306
        %v3323 = vadd.f32 %v3203, %v3307
        %v3324 = vadd.f32 %v3204, %v3308
        %v3325 = vadd.f32 %v3205, %v3309
        %v3326 = vadd.f32 %v3206, %v3310
        %v3327 = vadd.f32 %v3207, %v3311
        %v3328 = vadd.f32 %v3208, %v3312
        %v3329 = vadd.f32 %v3209, %v3313
        %v3330 = vadd.f32 %v3210, %v3314
        %v3331 = vadd.f32 %v3211, %v3315
        %v3332 = vadd.f32 %v3212, %v3316
        %v3333 = vadd.f32 %v3213, %v3317
        %v3334 = vadd.f32 %v3214, %v3318
        %v3335 = vadd.f32 %v3215, %v3319
        %v3336 = vadd.f32 %v3216, %v3320
        %v3337 = vxor.u32 %v3321, 2147483648
        %v3338 = vxor.u32 %v3322, 2147483648
        %v3339 = vxor.u32 %v3323, 2147483648
        %v3340 = vxor.u32 %v3324, 2147483648
        %v3341 = vxor.u32 %v3325, 2147483648
        %v3342 = vxor.u32 %v3326, 2147483648
        %v3343 = vxor.u32 %v3327, 2147483648
        %v3344 = vxor.u32 %v3328, 2147483648
        %v3345 = vxor.u32 %v3329, 2147483648
        %v3346 = vxor.u32 %v3330, 2147483648
        %v3347 = vxor.u32 %v3331, 2147483648
        %v3348 = vxor.u32 %v3332, 2147483648
        %v3349 = vxor.u32 %v3333, 2147483648
        %v3350 = vxor.u32 %v3334, 2147483648
        %v3351 = vxor.u32 %v3335, 2147483648
        %v3352 = vxor.u32 %v3336, 2147483648
        %v3353 = vmul.f32 %v3337, 1.442695
        %v3354 = vpow.pop %v3353
        %v3355 = vmul.f32 %v3338, 1.442695
        %v3356 = vpow.pop %v3355
        %v3357 = vmul.f32 %v3339, 1.442695
        %v3358 = vpow.pop %v3357
        %v3359 = vmul.f32 %v3340, 1.442695
        %v3360 = vpow.pop %v3359
        %v3361 = vmul.f32 %v3341, 1.442695
        %v3362 = vpow.pop %v3361
        %v3363 = vmul.f32 %v3342, 1.442695
        %v3364 = vpow.pop %v3363
        %v3365 = vmul.f32 %v3343, 1.442695
        %v3366 = vpow.pop %v3365
        %v3367 = vmul.f32 %v3344, 1.442695
        %v3368 = vpow.pop %v3367
        %v3369 = vmul.f32 %v3345, 1.442695
        %v3370 = vpow.pop %v3369
        %v3371 = vmul.f32 %v3346, 1.442695
        %v3372 = vpow.pop %v3371
        %v3373 = vmul.f32 %v3347, 1.442695
        %v3374 = vpow.pop %v3373
        %v3375 = vmul.f32 %v3348, 1.442695
        %v3376 = vpow.pop %v3375
        %v3377 = vmul.f32 %v3349, 1.442695
        %v3378 = vpow.pop %v3377
        %v3379 = vmul.f32 %v3350, 1.442695
        %v3380 = vpow.pop %v3379
        %v3381 = vmul.f32 %v3351, 1.442695
        %v3382 = vpow.pop %v3381
        %v3383 = vmul.f32 %v3352, 1.442695
        %v3384 = vpow.pop %v3383
        %v3385 = vadd.f32 %v3354, 1.0
        %v3386 = vadd.f32 %v3356, 1.0
        %v3387 = vadd.f32 %v3358, 1.0
        %v3388 = vadd.f32 %v3360, 1.0
        %v3389 = vadd.f32 %v3362, 1.0
        %v3390 = vadd.f32 %v3364, 1.0
        %v3391 = vadd.f32 %v3366, 1.0
        %v3392 = vadd.f32 %v3368, 1.0
        %v3393 = vadd.f32 %v3370, 1.0
        %v3394 = vadd.f32 %v3372, 1.0
        %v3395 = vadd.f32 %v3374, 1.0
        %v3396 = vadd.f32 %v3376, 1.0
        %v3397 = vadd.f32 %v3378, 1.0
        %v3398 = vadd.f32 %v3380, 1.0
        %v3399 = vadd.f32 %v3382, 1.0
        %v3400 = vadd.f32 %v3384, 1.0
        %v3401 = vrcp.pop %v3385
        %v3402 = vmul.f32 1.0, %v3401
        %v3403 = vrcp.pop %v3386
        %v3404 = vmul.f32 1.0, %v3403
        %v3405 = vrcp.pop %v3387
        %v3406 = vmul.f32 1.0, %v3405
        %v3407 = vrcp.pop %v3388
        %v3408 = vmul.f32 1.0, %v3407
        %v3409 = vrcp.pop %v3389
        %v3410 = vmul.f32 1.0, %v3409
        %v3411 = vrcp.pop %v3390
        %v3412 = vmul.f32 1.0, %v3411
        %v3413 = vrcp.pop %v3391
        %v3414 = vmul.f32 1.0, %v3413
        %v3415 = vrcp.pop %v3392
        %v3416 = vmul.f32 1.0, %v3415
        %v3417 = vrcp.pop %v3393
        %v3418 = vmul.f32 1.0, %v3417
        %v3419 = vrcp.pop %v3394
        %v3420 = vmul.f32 1.0, %v3419
        %v3421 = vrcp.pop %v3395
        %v3422 = vmul.f32 1.0, %v3421
        %v3423 = vrcp.pop %v3396
        %v3424 = vmul.f32 1.0, %v3423
        %v3425 = vrcp.pop %v3397
        %v3426 = vmul.f32 1.0, %v3425
        %v3427 = vrcp.pop %v3398
        %v3428 = vmul.f32 1.0, %v3427
        %v3429 = vrcp.pop %v3399
        %v3430 = vmul.f32 1.0, %v3429
        %v3431 = vrcp.pop %v3400
        %v3432 = vmul.f32 1.0, %v3431
        %v3433 = vmul.f32 %v3321, %v3402
        %v3434 = vmul.f32 %v3322, %v3404
        %v3435 = vmul.f32 %v3323, %v3406
        %v3436 = vmul.f32 %v3324, %v3408
        %v3437 = vmul.f32 %v3325, %v3410
        %v3438 = vmul.f32 %v3326, %v3412
        %v3439 = vmul.f32 %v3327, %v3414
        %v3440 = vmul.f32 %v3328, %v3416
        %v3441 = vmul.f32 %v3329, %v3418
        %v3442 = vmul.f32 %v3330, %v3420
        %v3443 = vmul.f32 %v3331, %v3422
        %v3444 = vmul.f32 %v3332, %v3424
        %v3445 = vmul.f32 %v3333, %v3426
        %v3446 = vmul.f32 %v3334, %v3428
        %v3447 = vmul.f32 %v3335, %v3430
        %v3448 = vmul.f32 %v3336, %v3432
        %v3449 = vmul.f32 %v3285, %v3433
        %v3450 = vmul.f32 %v3286, %v3434
        %v3451 = vmul.f32 %v3287, %v3435
        %v3452 = vmul.f32 %v3288, %v3436
        %v3453 = vmul.f32 %v3289, %v3437
        %v3454 = vmul.f32 %v3290, %v3438
        %v3455 = vmul.f32 %v3291, %v3439
        %v3456 = vmul.f32 %v3292, %v3440
        %v3457 = vmul.f32 %v3293, %v3441
        %v3458 = vmul.f32 %v3294, %v3442
        %v3459 = vmul.f32 %v3295, %v3443
        %v3460 = vmul.f32 %v3296, %v3444
        %v3461 = vmul.f32 %v3297, %v3445
        %v3462 = vmul.f32 %v3298, %v3446
        %v3463 = vmul.f32 %v3299, %v3447
        %v3464 = vmul.f32 %v3300, %v3448
        %v3465 = vld [vmem:[%s9] sm:$0xff]
        %v3466 = vld [vmem:[%s9 + $0x8] sm:$0xff]
        %v3467 = vld [vmem:[%s9 + $0x10] sm:$0xff]
        %v3468 = vld [vmem:[%s9 + $0x18] sm:$0xff]
        %vm3469 = vcmask 261120
        %v3471 = vsel %vm3469, %v3449, 0
        %v3474 = vsel %vm3469, %v3450, 0
        %v3477 = vsel %vm3469, %v3451, 0
        %v3480 = vsel %vm3469, %v3452, 0
        %v3483 = vsel %vm3469, %v3453, 0
        %v3486 = vsel %vm3469, %v3454, 0
        %v3489 = vsel %vm3469, %v3455, 0
        %v3492 = vsel %vm3469, %v3456, 0
        %v3495 = vsel %vm3469, %v3457, 0
        %v3498 = vsel %vm3469, %v3458, 0
        %v3501 = vsel %vm3469, %v3459, 0
        %v3504 = vsel %vm3469, %v3460, 0
        %v3507 = vsel %vm3469, %v3461, 0
        %v3510 = vsel %vm3469, %v3462, 0
        %v3513 = vsel %vm3469, %v3463, 0
        %v3516 = vsel %vm3469, %v3464, 0
        %3518 = vmatprep.subr.mxu0 0.0
        %3519 = vmatpush1.msra.mxu0 %v3465
        %3520 = vmatprep.subr.mxu0 0.0
        %3521 = vmatpush1.msra.mxu0 %v3466
        %3522 = vmatprep.subr.mxu0 0.0
        %3523 = vmatpush1.msra.mxu0 %v3467
        %3524 = vmatprep.subr.mxu0 0.0
        %3525 = vmatpush1.msra.mxu0 %v3468
        %3526 = vmatprep.subr.mxu0 0.0
        %3527 = vmatpush1.msra.mxu0 0.0
        %3528 = vmatprep.subr.mxu0 0.0
        %3529 = vmatpush1.msra.mxu0 0.0
        %3530 = vmatprep.subr.mxu0 0.0
        %3531 = vmatpush1.msra.mxu0 0.0
        %3532 = vmatprep.subr.mxu0 0.0
        %3533 = vmatpush1.msra.mxu0 0.0
        %3534 = vmatprep.subr.mxu0 0.0
        %3535 = vmatpush1.msra.mxu0 0.0
        %3536 = vmatprep.subr.mxu0 0.0
        %3537 = vmatpush1.msra.mxu0 0.0
        %3538 = vmatprep.subr.mxu0 0.0
        %3539 = vmatpush1.msra.mxu0 0.0
        %3540 = vmatprep.subr.mxu0 0.0
        %3541 = vmatpush1.msra.mxu0 0.0
        %3542 = vmatprep.subr.mxu0 0.0
        %3543 = vmatpush1.msra.mxu0 0.0
        %3544 = vmatprep.subr.mxu0 0.0
        %3545 = vmatpush1.msra.mxu0 0.0
        %3546 = vmatprep.subr.mxu0 0.0
        %3547 = vmatpush1.msra.mxu0 0.0
        %3548 = vmatprep.subr.mxu0 0.0
        %3549 = vmatpush1.msra.mxu0 0.0
        %3550 = vmatprep.subr.mxu0 0.0
        %3551 = vmatpush1.msra.mxu0 0.0
        %3552 = vmatprep.subr.mxu0 0.0
        %3553 = vmatpush1.msra.mxu0 0.0
        %3554 = vmatprep.subr.mxu0 0.0
        %3555 = vmatpush1.msra.mxu0 0.0
        %3556 = vmatprep.subr.mxu0 0.0
        %3557 = vmatpush1.msra.mxu0 0.0
        %3558 = vmatprep.subr.mxu0 0.0
        %3559 = vmatpush1.msra.mxu0 0.0
        %3560 = vmatprep.subr.mxu0 0.0
        %3561 = vmatpush1.msra.mxu0 0.0
        %3562 = vmatprep.subr.mxu0 0.0
        %3563 = vmatpush1.msra.mxu0 0.0
        %3564 = vmatprep.subr.mxu0 0.0
        %3565 = vmatpush1.msra.mxu0 0.0
        %3566 = vmatprep.subr.mxu0 0.0
        %3567 = vmatpush1.msra.mxu0 0.0
        %3568 = vmatprep.subr.mxu0 0.0
        %3569 = vmatpush1.msra.mxu0 0.0
        %3570 = vmatprep.subr.mxu0 0.0
        %3571 = vmatpush1.msra.mxu0 0.0
        %3572 = vmatprep.subr.mxu0 0.0
        %3573 = vmatpush1.msra.mxu0 0.0
        %3574 = vmatprep.subr.mxu0 0.0
        %3575 = vmatpush1.msra.mxu0 0.0
        %3576 = vmatprep.subr.mxu0 0.0
        %3577 = vmatpush1.msra.mxu0 0.0
        %3578 = vmatprep.subr.mxu0 0.0
        %3579 = vmatpush1.msra.mxu0 0.0
        %3580 = vmatprep.subr.mxu0 0.0
        %3581 = vmatpush1.msra.mxu0 0.0
        %3582 = vmatprep.mubr.f32.mxu0 0.0
        %3583 = vmatmul.mubr.f32.gmra.mrb[0].mxu0 %v3471
        %v3584 = vpop.f32.mrb[0].mxu0
        %v3585 = vadd.f32 0.0, %v3584
        %v3586 = vpop.f32.mrb[0].mxu0
        %3587 = vmatprep.mubr.f32.mxu0 0.0
        %3588 = vmatmul.mubr.f32.gmra.mrb[0].mxu0 %v3474
        %v3589 = vpop.f32.mrb[0].mxu0
        %v3590 = vadd.f32 0.0, %v3589
        %v3591 = vpop.f32.mrb[0].mxu0
        %3592 = vmatprep.mubr.f32.mxu0 0.0
        %3593 = vmatmul.mubr.f32.gmra.mrb[0].mxu0 %v3477
        %v3594 = vpop.f32.mrb[0].mxu0
        %v3595 = vadd.f32 0.0, %v3594
        %v3596 = vpop.f32.mrb[0].mxu0
        %3597 = vmatprep.mubr.f32.mxu0 0.0
        %3598 = vmatmul.mubr.f32.gmra.mrb[0].mxu0 %v3480
        %v3599 = vpop.f32.mrb[0].mxu0
        %v3600 = vadd.f32 0.0, %v3599
        %v3601 = vpop.f32.mrb[0].mxu0
        %3602 = vmatprep.mubr.f32.mxu0 0.0
        %3603 = vmatmul.mubr.f32.gmra.mrb[0].mxu0 %v3483
        %v3604 = vpop.f32.mrb[0].mxu0
        %v3605 = vadd.f32 0.0, %v3604
        %v3606 = vpop.f32.mrb[0].mxu0
        %3607 = vmatprep.mubr.f32.mxu0 0.0
        %3608 = vmatmul.mubr.f32.gmra.mrb[0].mxu0 %v3486
        %v3609 = vpop.f32.mrb[0].mxu0
        %v3610 = vadd.f32 0.0, %v3609
        %v3611 = vpop.f32.mrb[0].mxu0
        %3612 = vmatprep.mubr.f32.mxu0 0.0
        %3613 = vmatmul.mubr.f32.gmra.mrb[0].mxu0 %v3489
        %v3614 = vpop.f32.mrb[0].mxu0
        %v3615 = vadd.f32 0.0, %v3614
        %v3616 = vpop.f32.mrb[0].mxu0
        %3617 = vmatprep.mubr.f32.mxu0 0.0
        %3618 = vmatmul.mubr.f32.gmra.mrb[0].mxu0 %v3492
        %v3619 = vpop.f32.mrb[0].mxu0
        %v3620 = vadd.f32 0.0, %v3619
        %v3621 = vpop.f32.mrb[0].mxu0
        %3622 = vmatprep.mubr.f32.mxu0 0.0
        %3623 = vmatmul.mubr.f32.gmra.mrb[0].mxu0 %v3495
        %v3624 = vpop.f32.mrb[0].mxu0
        %v3625 = vadd.f32 0.0, %v3624
        %v3626 = vpop.f32.mrb[0].mxu0
        %3627 = vmatprep.mubr.f32.mxu0 0.0
        %3628 = vmatmul.mubr.f32.gmra.mrb[0].mxu0 %v3498
        %v3629 = vpop.f32.mrb[0].mxu0
        %v3630 = vadd.f32 0.0, %v3629
        %v3631 = vpop.f32.mrb[0].mxu0
        %3632 = vmatprep.mubr.f32.mxu0 0.0
        %3633 = vmatmul.mubr.f32.gmra.mrb[0].mxu0 %v3501
        %v3634 = vpop.f32.mrb[0].mxu0
        %v3635 = vadd.f32 0.0, %v3634
        %v3636 = vpop.f32.mrb[0].mxu0
        %3637 = vmatprep.mubr.f32.mxu0 0.0
        %3638 = vmatmul.mubr.f32.gmra.mrb[0].mxu0 %v3504
        %v3639 = vpop.f32.mrb[0].mxu0
        %v3640 = vadd.f32 0.0, %v3639
        %v3641 = vpop.f32.mrb[0].mxu0
        %3642 = vmatprep.mubr.f32.mxu0 0.0
        %3643 = vmatmul.mubr.f32.gmra.mrb[0].mxu0 %v3507
        %v3644 = vpop.f32.mrb[0].mxu0
        %v3645 = vadd.f32 0.0, %v3644
        %v3646 = vpop.f32.mrb[0].mxu0
        %3647 = vmatprep.mubr.f32.mxu0 0.0
        %3648 = vmatmul.mubr.f32.gmra.mrb[0].mxu0 %v3510
        %v3649 = vpop.f32.mrb[0].mxu0
        %v3650 = vadd.f32 0.0, %v3649
        %v3651 = vpop.f32.mrb[0].mxu0
        %3652 = vmatprep.mubr.f32.mxu0 0.0
        %3653 = vmatmul.mubr.f32.gmra.mrb[0].mxu0 %v3513
        %v3654 = vpop.f32.mrb[0].mxu0
        %v3655 = vadd.f32 0.0, %v3654
        %v3656 = vpop.f32.mrb[0].mxu0
        %3657 = vmatprep.mubr.f32.mxu0 0.0
        %3658 = vmatmul.mubr.f32.gmra.mrb[0].mxu0 %v3516
        %v3659 = vpop.f32.mrb[0].mxu0
        %v3660 = vadd.f32 0.0, %v3659
        %v3661 = vpop.f32.mrb[0].mxu0
        %3662 = vdwg.mxu0
        %3663 = vst [vmem:[%s366] sm:$0xff] %v3585
        %3664 = vst [vmem:[%s366 + $0x8] sm:$0xff] %v3590
        %3665 = vst [vmem:[%s366 + $0x10] sm:$0xff] %v3595
        %3666 = vst [vmem:[%s366 + $0x18] sm:$0xff] %v3600
        %3667 = vst [vmem:[%s366 + $0x20] sm:$0xff] %v3605
        %3668 = vst [vmem:[%s366 + $0x28] sm:$0xff] %v3610
        %3669 = vst [vmem:[%s366 + $0x30] sm:$0xff] %v3615
        %3670 = vst [vmem:[%s366 + $0x38] sm:$0xff] %v3620
        %3671 = vst [vmem:[%s366 + $0x40] sm:$0xff] %v3625
        %3672 = vst [vmem:[%s366 + $0x48] sm:$0xff] %v3630
        %3673 = vst [vmem:[%s366 + $0x50] sm:$0xff] %v3635
        %3674 = vst [vmem:[%s366 + $0x58] sm:$0xff] %v3640
        %3675 = vst [vmem:[%s366 + $0x60] sm:$0xff] %v3645
        %3676 = vst [vmem:[%s366 + $0x68] sm:$0xff] %v3650
        %3677 = vst [vmem:[%s366 + $0x70] sm:$0xff] %v3655
        %3678 = vst [vmem:[%s366 + $0x78] sm:$0xff] %v3660
        %s3679 = sand.u32 %s261, 1
        %s3680 = scalar_lea.sflag [#allocation3], %s3679
        %s3681 = sand.u32 %s261, 1
        %s3682 = smul.addr %s3681, 128
        %s3683 = scalar_lea.vmem [#allocation2], %s3682
        // Predicated region
        $region61: #{tpu_custom_call.1} parent=59 // pred_check
          %p3684 = pneg %p271
        $region62: #{tpu_custom_call.1} parent=59 // pred_check_branch
          %3686 = sbr.rel (%p3684) target = $region64
        $region63: #{tpu_custom_call.1} parent=59 // pred_region
          %s3687 = smul.u32 16, %s29
          %s3689 = ssub.s32 2048, 2048
          %3690 = vsyncadd %s3680, %s3689
          %s3691 = smul.addr %s28, 32
          %s3692 = sadd.s32 %s3687, %s3691
          %s3693 = smul.addr %s3692, 128
          %s3694 = scalar_lea.hbm %s10, %s3693
          %s3695 = sshll.u32 %s3683, 4
          %s3696 = int_to_ptr.vmem [resolvable:$true] %s3695
          %3701 = dma.vmem_to_hbm [thread:$0]  %s3696, 2048, %s3694, %s3680, 128, 128, 8
        $region64: #{tpu_custom_call.1} parent=59 // pred_fallthru
          _
      $region60: #{tpu_custom_call.1} parent=5 // pred_fallthru
        _
      %p3702 = scmp.le.s32.totalorder 2, %s19
      // Predicated region
      $region65: #{tpu_custom_call.1} parent=5 // pred_check
        %p3703 = pneg %p3702
      $region66: #{tpu_custom_call.1} parent=5 // pred_check_branch
        %3705 = sbr.rel (%p3703) target = $region68
      $region67: #{tpu_custom_call.1} parent=5 // pred_region
        %s3706 = ssub.s32 %s19, 2
        // Predicated region
        $region69: #{tpu_custom_call.1} parent=67 // pred_check
          %p3707 = pneg %p277
        $region70: #{tpu_custom_call.1} parent=67 // pred_check_branch
          %3709 = sbr.rel (%p3707) target = $region72
        $region71: #{tpu_custom_call.1} parent=67 // pred_region
          %s3710 = sand.u32 %s262, 1
          %s3711 = scalar_lea.sflag [#allocation3], %s3710
          %s3712 = sand.u32 %s262, 1
          %s3713 = smul.addr %s3712, 128
          %s3714 = scalar_lea.vmem [#allocation2], %s3713
          %3715 = dma.done %s3711, 2048
        $region72: #{tpu_custom_call.1} parent=67 // pred_fallthru
          _
      $region68: #{tpu_custom_call.1} parent=5 // pred_fallthru
        _
    $region6: #{tpu_custom_call.1} parent=1 // loop_footer
      %s23 = sadd.s32 1, %s19
    $region7: #{tpu_custom_call.1} parent=1 // loop_footer_branch
      %18 = sbr.rel target = $region3
    $region8: #{tpu_custom_call.1} parent=1 // loop_exit
      _
    %3716 = vsyncpa [#allocation3], 1
    %s3717 = scalar_lea.sflag [#allocation3], 1
    %3718 = vsyncpa %s3717, 1

</llo_original>
